<compile_context>
chip_gen: v5e
topology: v5e:2x2
jax: 0.10.0
libtpu: 0.0.40
codegen_flags: <defaults>
</compile_context>

<pallas_src>
import math
from functools import partial

import jax
import jax.numpy as jnp
from jax.experimental import pallas as pl
from jax.experimental.pallas import tpu as pltpu


# rows of the packed (16, D) f32 vector slab
_BQ_S, _BK_S, _BV_S, _BO_S = 0, 1, 2, 3
_BQ_C, _BK_C, _BV_C, _BO_C = 4, 5, 6, 7
_B2 = 8
_G1, _BE1 = 9, 10
_G2, _BE2 = 11, 12
_G3, _BE3 = 13, 14          # row 15 = padding


# ----------------------------- Pallas kernel -------------------------------

def _decoder_layer_kernel(
    x_ref,          # (Bt*S, D)      f32
    enc_ref,        # (Bt*Se, D)     f32
    tb_ref,         # (Bt, S, S)     bf16  additive mask bias (0 / -1e9)
    sb_ref,         # (Bt, S, Se)    bf16  additive mask bias
    wqkv_s_ref,     # (3, H, D, dk)  bf16  self-attn  q,k,v  (in, out_head)
    wo_s_ref,       # (H, dk, D)     bf16  self-attn  output proj
    wqkv_c_ref,     # (3, H, D, dk)  bf16  cross-attn q,k,v
    wo_c_ref,       # (H, dk, D)     bf16  cross-attn output proj
    w1_ref,         # (D, F)         bf16
    w2_ref,         # (F, D)         bf16
    b1_ref,         # (1, F)         f32
    vec_ref,        # (16, D)        f32   packed biases + LayerNorm params
    o_ref,          # (Bt*S, D)      f32
    *, num_heads: int, eps: float = 1e-5,
):
    f32, bf16 = jnp.float32, jnp.bfloat16
    Bt, S, _ = tb_ref.shape
    Se = sb_ref.shape[2]
    D = x_ref.shape[1]
    H = num_heads
    dk = D // H

    vec = vec_ref[...]                                    # (16, D) f32

    def row(i):
        return vec[i:i + 1]                               # (1, D)

    def layer_norm(v, g, b):
        # two-pass statistics (matches nn.LayerNorm, avoids cancellation)
        mu = jnp.mean(v, axis=-1, keepdims=True)
        c = v - mu
        var = jnp.mean(c * c, axis=-1, keepdims=True)
        return c * jax.lax.rsqrt(var + eps) * g + b

    def mha(xq_bf, xkv_bf, sq, skv, wqkv_ref, wo_ref, bq, bk, bv, bo, bias):
        # xq_bf: (Bt*sq, D) bf16, xkv_bf: (Bt*skv, D) bf16
        # bias : (Bt, sq, skv) f32 additive, computed once (hoisted from loop)
        acc = jnp.zeros((Bt * sq, D), f32)
        for h in range(H):                                # static unroll
            lo = h * dk
            wq_h = wqkv_ref[0, h]                         # (D, dk) bf16 ref slice
            wk_h = wqkv_ref[1, h]
            wv_h = wqkv_ref[2, h]
            wo_h = wo_ref[h]                              # (dk, D) bf16 ref slice
            # 1/sqrt(dk) already folded into wq/bq by the wrapper
            qh = (jnp.dot(xq_bf, wq_h, preferred_element_type=f32)
                  + bq[:, lo:lo + dk]).reshape(Bt, sq, dk).astype(bf16)
            kh = (jnp.dot(xkv_bf, wk_h, preferred_element_type=f32)
                  + bk[:, lo:lo + dk]).reshape(Bt, skv, dk).astype(bf16)
            vh = (jnp.dot(xkv_bf, wv_h, preferred_element_type=f32)
                  + bv[:, lo:lo + dk]).reshape(Bt, skv, dk).astype(bf16)
            # contract dk without transposing K (native MXU orientation)
            s_ = jnp.einsum("bqd,bkd->bqk", qh, kh,
                            preferred_element_type=f32) + bias
            m = jnp.max(s_, axis=-1, keepdims=True)
            p = jnp.exp(s_ - m)
            denom = jnp.sum(p, axis=-1, keepdims=True)
            attn = (p * pl.reciprocal(denom, approx=True)).astype(bf16)
            ctx = jnp.einsum("bqk,bkd->bqd", attn, vh,
                             preferred_element_type=f32)  # (Bt, sq, dk)
            # fold this head straight into the output projection (no concat)
            acc = acc + jnp.dot(ctx.reshape(Bt * sq, dk).astype(bf16), wo_h,
                                preferred_element_type=f32)
        return acc + bo                                   # (Bt*sq, D)

    x2 = x_ref[...]                                       # (Bt*S, D) f32
    x2_bf = x2.astype(bf16)                               # cast once per stage
    enc2_bf = enc_ref[...].astype(bf16)
    tbias = tb_ref[...].astype(f32)
    sbias = sb_ref[...].astype(f32)

    # ---- self-attention (tgt_mask) + residual + norm1 ----
    sa = mha(x2_bf, x2_bf, S, S, wqkv_s_ref, wo_s_ref,
             row(_BQ_S), row(_BK_S), row(_BV_S), row(_BO_S), tbias)
    h1 = layer_norm(x2 + sa, row(_G1), row(_BE1))
    h1_bf = h1.astype(bf16)

    # ---- cross-attention (K/V from encoder output, src_mask) + norm2 ----
    ca = mha(h1_bf, enc2_bf, S, Se, wqkv_c_ref, wo_c_ref,
             row(_BQ_C), row(_BK_C), row(_BV_C), row(_BO_C), sbias)
    h2 = layer_norm(h1 + ca, row(_G2), row(_BE2))
    h2_bf = h2.astype(bf16)

    # ---- feed-forward (dropout == identity) + residual + norm3 ----
    ff = jnp.maximum(jnp.dot(h2_bf, w1_ref[...], preferred_element_type=f32)
                     + b1_ref[...], 0.0)                  # (Bt*S, F)
    ff = jnp.dot(ff.astype(bf16), w2_ref[...],
                 preferred_element_type=f32) + row(_B2)   # (Bt*S, D)
    o_ref[...] = layer_norm(h2 + ff, row(_G3), row(_BE3))


# ------------------------------- wrapper ------------------------------------

def decoder_layer(x, enc_out, params, num_heads,
                  tgt_mask=None, src_mask=None, batch_block=None):
    """x: (B, S, D) f32. enc_out: (B, Se, D) f32. masks: (B, S, S*) int or None."""
    B, S, D = x.shape
    Be, Se, De = enc_out.shape
    assert Be == B and De == D
    F = params["w1"].shape[0]
    H = num_heads
    dk = D // H
    inv_scale = 1.0 / math.sqrt(dk)

    # masks -> bf16 additive bias once in the wrapper (no in-kernel cmp/select,
    # half the HBM traffic of int32 masks)
    if tgt_mask is None:
        tbias = jnp.zeros((B, S, S), jnp.bfloat16)
    else:
        tbias = jnp.where(tgt_mask == 0, -1e9, 0.0).astype(jnp.bfloat16)
    if src_mask is None:
        sbias = jnp.zeros((B, S, Se), jnp.bfloat16)
    else:
        sbias = jnp.where(src_mask == 0, -1e9, 0.0).astype(jnp.bfloat16)

    # >= 2 grid steps by default (v7x has 2 TCs; also enables pipelining)
    Bt = batch_block or (B // 2 if B % 2 == 0 else B)
    if B % Bt != 0 or (Bt * S) % 8 != 0 or (Bt * Se) % 8 != 0:
        Bt = B                      # fall back to a single whole-batch tile
    grid = (B // Bt,)

    # --- pack weights: (in, out) layout, bf16, per-head leading dims ---------
    def qkv_pack(wq, wk, wv, scale_q):
        def per_head(w, s):                         # torch (out, in) -> (H, D, dk)
            wt = (w.astype(jnp.float32) * s).T      # (in=D, out=D)
            return wt.reshape(D, H, dk).transpose(1, 0, 2)
        return jnp.stack([per_head(wq, scale_q), per_head(wk, 1.0),
                          per_head(wv, 1.0)]).astype(jnp.bfloat16)  # (3,H,D,dk)

    def o_pack(wo):                                 # torch (out, in) -> (H, dk, D)
        return wo.astype(jnp.float32).T.reshape(H, dk, D).astype(jnp.bfloat16)

    w_qkv_s = qkv_pack(params["wq_s"], params["wk_s"], params["wv_s"], inv_scale)
    w_o_s = o_pack(params["wo_s"])
    w_qkv_c = qkv_pack(params["wq_c"], params["wk_c"], params["wv_c"], inv_scale)
    w_o_c = o_pack(params["wo_c"])
    w1 = jnp.asarray(params["w1"].T, jnp.bfloat16)                    # (D, F)
    w2 = jnp.asarray(params["w2"].T, jnp.bfloat16)                    # (F, D)
    b1 = params["b1"].reshape(1, F).astype(jnp.float32)

    # packed biases / LayerNorm params; 1/sqrt(dk) folded into the q biases
    vec_rows = [params["bq_s"] * inv_scale, params["bk_s"], params["bv_s"],
                params["bo_s"],
                params["bq_c"] * inv_scale, params["bk_c"], params["bv_c"],
                params["bo_c"],
                params["b2"], params["g1"], params["be1"],
                params["g2"], params["be2"], params["g3"], params["be3"],
                jnp.zeros((D,), jnp.float32)]                         # pad to 16
    vec = jnp.stack([r.reshape(D) for r in vec_rows]).astype(jnp.float32)

    # --- row-flat (rows, D) activation layout (dense output slab) -----------
    x_flat = x.reshape(B * S, D)
    enc_flat = enc_out.reshape(B * Se, D)

    def resident_spec(arr):         # constant index map -> VMEM-resident weight
        nd = arr.ndim
        return pl.BlockSpec(tuple(arr.shape), lambda b, _nd=nd: (0,) * _nd)

    in_specs = [
        pl.BlockSpec((Bt * S, D), lambda b: (b, 0)),          # x rows
        pl.BlockSpec((Bt * Se, D), lambda b: (b, 0)),         # enc rows
        pl.BlockSpec((Bt, S, S), lambda b: (b, 0, 0)),        # tgt bias
        pl.BlockSpec((Bt, S, Se), lambda b: (b, 0, 0)),       # src bias
        resident_spec(w_qkv_s), resident_spec(w_o_s),
        resident_spec(w_qkv_c), resident_spec(w_o_c),
        resident_spec(w1), resident_spec(w2),
        resident_spec(b1), resident_spec(vec),
    ]
    operands = (x_flat, enc_flat, tbias, sbias,
                w_qkv_s, w_o_s, w_qkv_c, w_o_c, w1, w2, b1, vec)

    # VMEM budget: 2x (per-tile batched blocks + output block) + 1x resident
    # weights + headroom, capped at 48 MiB (safe on v7x; raise on v5e/v6e).
    def bb(shape, dt):
        return int(math.prod(shape)) * jnp.dtype(dt).itemsize
    tile_io = (bb((Bt * S, D), jnp.float32) + bb((Bt * Se, D), jnp.float32)
               + bb((Bt, S, S), jnp.bfloat16) + bb((Bt, S, Se), jnp.bfloat16)
               + bb((Bt * S, D), jnp.float32))
    resident = sum(int(a.size) * a.dtype.itemsize
                   for a in (w_qkv_s, w_o_s, w_qkv_c, w_o_c, w1, w2, b1, vec))
    vmem_limit = int(min(max(2 * tile_io + resident + (8 << 20), 16 << 20),
                         48 << 20))

    kernel = partial(_decoder_layer_kernel, num_heads=num_heads)

    out = pl.pallas_call(
        kernel,
        out_shape=jax.ShapeDtypeStruct((B * S, D), jnp.float32),
        grid_spec=pltpu.PrefetchScalarGridSpec(
            num_scalar_prefetch=0,
            grid=grid,
            in_specs=in_specs,
            out_specs=pl.BlockSpec((Bt * S, D), lambda b: (b, 0)),
        ),
        compiler_params=pltpu.CompilerParams(
            dimension_semantics=("parallel",),
            vmem_limit_bytes=vmem_limit),
    )(*operands)
    return out.reshape(B, S, D)


# ------------------------- deterministic params ------------------------------

def init_params(key, d_model, d_ff):
    ks = jax.random.split(key, 26)
    s = 0.02

    def lin(k, o, i):
        return s * jax.random.normal(k, (o, i), jnp.float32)

    def vecn(k, n, sc=0.02):
        return sc * jax.random.normal(k, (n,), jnp.float32)

    p = {
        # self-attention (torch layout: W is (out, in))
        "wq_s": lin(ks[0], d_model, d_model), "bq_s": vecn(ks[10], d_model),
        "wk_s": lin(ks[1], d_model, d_model), "bk_s": vecn(ks[11], d_model),
        "wv_s": lin(ks[2], d_model, d_model), "bv_s": vecn(ks[12], d_model),
        "wo_s": lin(ks[3], d_model, d_model), "bo_s": vecn(ks[13], d_model),
        # cross-attention
        "wq_c": lin(ks[4], d_model, d_model), "bq_c": vecn(ks[14], d_model),
        "wk_c": lin(ks[5], d_model, d_model), "bk_c": vecn(ks[15], d_model),
        "wv_c": lin(ks[6], d_model, d_model), "bv_c": vecn(ks[16], d_model),
        "wo_c": lin(ks[7], d_model, d_model), "bo_c": vecn(ks[17], d_model),
        # feed-forward
        "w1": lin(ks[8], d_ff, d_model), "b1": vecn(ks[18], d_ff),
        "w2": lin(ks[9], d_model, d_ff), "b2": vecn(ks[19], d_model),
        # layer norms
        "g1": 1.0 + vecn(ks[20], d_model, 0.1), "be1": vecn(ks[21], d_model, 0.1),
        "g2": 1.0 + vecn(ks[22], d_model, 0.1), "be2": vecn(ks[23], d_model, 0.1),
        "g3": 1.0 + vecn(ks[24], d_model, 0.1), "be3": vecn(ks[25], d_model, 0.1),
    }
    return p


# ----------------------------- pure-JAX reference ----------------------------

def _mha_ref(xq, xkv, p, pre, num_heads, mask):
    B, Sq, D = xq.shape
    Skv = xkv.shape[1]
    dk = D // num_heads

    def lin(v, w, b):
        return v @ w.T + b

    q = lin(xq, p[f"wq_{pre}"], p[f"bq_{pre}"]).reshape(B, Sq, num_heads, dk).transpose(0, 2, 1, 3)
    k = lin(xkv, p[f"wk_{pre}"], p[f"bk_{pre}"]).reshape(B, Skv, num_heads, dk).transpose(0, 2, 1, 3)
    v = lin(xkv, p[f"wv_{pre}"], p[f"bv_{pre}"]).reshape(B, Skv, num_heads, dk).transpose(0, 2, 1, 3)
    scores = jnp.einsum("bhqd,bhkd->bhqk", q, k) / math.sqrt(dk)
    scores = jnp.where(mask[:, None, :, :] == 0, -1e9, scores)
    attn = jax.nn.softmax(scores, axis=-1)
    out = jnp.einsum("bhqk,bhkd->bhqd", attn, v).transpose(0, 2, 1, 3).reshape(B, Sq, D)
    return lin(out, p[f"wo_{pre}"], p[f"bo_{pre}"])


def decoder_layer_ref(x, enc, p, num_heads, tgt_mask, src_mask, eps=1e-5):
    def ln(v, g, b):
        mu = v.mean(-1, keepdims=True)
        var = ((v - mu) ** 2).mean(-1, keepdims=True)
        return (v - mu) / jnp.sqrt(var + eps) * g + b

    sa = _mha_ref(x, x, p, "s", num_heads, tgt_mask)
    x1 = ln(x + sa, p["g1"], p["be1"])
    ca = _mha_ref(x1, enc, p, "c", num_heads, src_mask)
    x2 = ln(x1 + ca, p["g2"], p["be2"])
    h = jnp.maximum(x2 @ p["w1"].T + p["b1"], 0.0)
    ff = h @ p["w2"].T + p["b2"]
    return ln(x2 + ff, p["g3"], p["be3"])


# ---------------------------------- main -------------------------------------

if __name__ == "__main__":
    B, S, Se, D, H, FF = 2, 8, 16, 32, 4, 64

    key = jax.random.PRNGKey(0)
    kx, ke, kp = jax.random.split(key, 3)
    x = jax.random.normal(kx, (B, S, D), jnp.float32)
    enc = jax.random.normal(ke, (B, Se, D), jnp.float32)
    params = init_params(kp, D, FF)

    # causal target mask; all-ones source mask (== mask=None semantics)
    tgt_mask = jnp.broadcast_to(jnp.tril(jnp.ones((S, S), jnp.int32)), (B, S, S))
    src_mask = jnp.ones((B, S, Se), jnp.int32)

    y = decoder_layer(x, enc, params, num_heads=H,
                      tgt_mask=tgt_mask, src_mask=src_mask)
    y = jax.block_until_ready(y)

    y_ref = decoder_layer_ref(x, enc, params, H, tgt_mask, src_mask)
    max_err = float(jnp.max(jnp.abs(y - y_ref)))
    assert jnp.allclose(y, y_ref, atol=5e-2, rtol=5e-2), \
        f"mismatch vs JAX reference (max abs err {max_err})"

    print("KERNEL_OK")
</pallas_src>

<mosaic_0001>
module attributes {stable_mosaic.version = 11 : i64} {
  func.func @_decoder_layer_kernel(%arg0: i32, %arg1: memref<8x32xf32, #tpu.memory_space<vmem>>, %arg2: memref<16x32xf32, #tpu.memory_space<vmem>>, %arg3: memref<1x8x8xbf16, #tpu.memory_space<vmem>>, %arg4: memref<1x8x16xbf16, #tpu.memory_space<vmem>>, %arg5: memref<3x4x32x8xbf16, #tpu.memory_space<vmem>>, %arg6: memref<4x8x32xbf16, #tpu.memory_space<vmem>>, %arg7: memref<3x4x32x8xbf16, #tpu.memory_space<vmem>>, %arg8: memref<4x8x32xbf16, #tpu.memory_space<vmem>>, %arg9: memref<32x64xbf16, #tpu.memory_space<vmem>>, %arg10: memref<64x32xbf16, #tpu.memory_space<vmem>>, %arg11: memref<1x64xf32, #tpu.memory_space<vmem>>, %arg12: memref<16x32xf32, #tpu.memory_space<vmem>>, %arg13: memref<8x32xf32, #tpu.memory_space<vmem>>) attributes {dimension_semantics = [#tpu.dimension_semantics<parallel>], iteration_bounds = array<i64: 2>, scalar_prefetch = 0 : i64, scratch_operands = 0 : i64, tpu.core_type = #tpu.core_type<tc>, window_params = [{transform_indices = @transform_0, window_bounds = array<i64: 8, 32>}, {transform_indices = @transform_1, window_bounds = array<i64: 16, 32>}, {transform_indices = @transform_2, window_bounds = array<i64: 1, 8, 8>}, {transform_indices = @transform_3, window_bounds = array<i64: 1, 8, 16>}, {pipeline_mode = #tpu.pipeline_mode<synchronous>, transform_indices = @transform_4, window_bounds = array<i64: 3, 4, 32, 8>}, {pipeline_mode = #tpu.pipeline_mode<synchronous>, transform_indices = @transform_5, window_bounds = array<i64: 4, 8, 32>}, {pipeline_mode = #tpu.pipeline_mode<synchronous>, transform_indices = @transform_6, window_bounds = array<i64: 3, 4, 32, 8>}, {pipeline_mode = #tpu.pipeline_mode<synchronous>, transform_indices = @transform_7, window_bounds = array<i64: 4, 8, 32>}, {pipeline_mode = #tpu.pipeline_mode<synchronous>, transform_indices = @transform_8, window_bounds = array<i64: 32, 64>}, {pipeline_mode = #tpu.pipeline_mode<synchronous>, transform_indices = @transform_9, window_bounds = array<i64: 64, 32>}, {pipeline_mode = #tpu.pipeline_mode<synchronous>, transform_indices = @transform_10, window_bounds = array<i64: 1, 64>}, {pipeline_mode = #tpu.pipeline_mode<synchronous>, transform_indices = @transform_11, window_bounds = array<i64: 16, 32>}, {transform_indices = @transform_12, window_bounds = array<i64: 8, 32>}]} {
    %c0 = arith.constant 0 : index
    %c0_0 = arith.constant 0 : index
    %0 = vector.load %arg12[%c0, %c0_0] : memref<16x32xf32, #tpu.memory_space<vmem>>, vector<16x32xf32>
    %c0_1 = arith.constant 0 : index
    %c0_2 = arith.constant 0 : index
    %1 = vector.load %arg1[%c0_1, %c0_2] : memref<8x32xf32, #tpu.memory_space<vmem>>, vector<8x32xf32>
    %2 = arith.truncf %1 : vector<8x32xf32> to vector<8x32xbf16>
    %c0_3 = arith.constant 0 : index
    %c0_4 = arith.constant 0 : index
    %3 = vector.load %arg2[%c0_3, %c0_4] : memref<16x32xf32, #tpu.memory_space<vmem>>, vector<16x32xf32>
    %4 = arith.truncf %3 : vector<16x32xf32> to vector<16x32xbf16>
    %c0_5 = arith.constant 0 : index
    %c0_6 = arith.constant 0 : index
    %c0_7 = arith.constant 0 : index
    %5 = vector.load %arg3[%c0_5, %c0_6, %c0_7] : memref<1x8x8xbf16, #tpu.memory_space<vmem>>, vector<1x8x8xbf16>
    %6 = arith.extf %5 : vector<1x8x8xbf16> to vector<1x8x8xf32>
    %c0_8 = arith.constant 0 : index
    %c0_9 = arith.constant 0 : index
    %c0_10 = arith.constant 0 : index
    %7 = vector.load %arg4[%c0_8, %c0_9, %c0_10] : memref<1x8x16xbf16, #tpu.memory_space<vmem>>, vector<1x8x16xbf16>
    %8 = arith.extf %7 : vector<1x8x16xbf16> to vector<1x8x16xf32>
    %9 = vector.extract_strided_slice %0 {offsets = [0, 0], sizes = [1, 32], strides = [1, 1]} : vector<16x32xf32> to vector<1x32xf32>
    %10 = vector.extract_strided_slice %0 {offsets = [1, 0], sizes = [1, 32], strides = [1, 1]} : vector<16x32xf32> to vector<1x32xf32>
    %11 = vector.extract_strided_slice %0 {offsets = [2, 0], sizes = [1, 32], strides = [1, 1]} : vector<16x32xf32> to vector<1x32xf32>
    %12 = vector.extract_strided_slice %0 {offsets = [3, 0], sizes = [1, 32], strides = [1, 1]} : vector<16x32xf32> to vector<1x32xf32>
    %cst = arith.constant 0.000000e+00 : f32
    %13 = vector.broadcast %cst : f32 to vector<8x32xf32>
    %c0_11 = arith.constant 0 : index
    %c0_12 = arith.constant 0 : index
    %c0_13 = arith.constant 0 : index
    %c0_14 = arith.constant 0 : index
    %14 = vector.load %arg5[%c0_11, %c0_12, %c0_13, %c0_14] : memref<3x4x32x8xbf16, #tpu.memory_space<vmem>>, vector<1x1x32x8xbf16>
    %15 = vector.shape_cast %14 : vector<1x1x32x8xbf16> to vector<32x8xbf16>
    %c1 = arith.constant 1 : index
    %c0_15 = arith.constant 0 : index
    %c0_16 = arith.constant 0 : index
    %c0_17 = arith.constant 0 : index
    %16 = vector.load %arg5[%c1, %c0_15, %c0_16, %c0_17] : memref<3x4x32x8xbf16, #tpu.memory_space<vmem>>, vector<1x1x32x8xbf16>
    %17 = vector.shape_cast %16 : vector<1x1x32x8xbf16> to vector<32x8xbf16>
    %c2 = arith.constant 2 : index
    %c0_18 = arith.constant 0 : index
    %c0_19 = arith.constant 0 : index
    %c0_20 = arith.constant 0 : index
    %18 = vector.load %arg5[%c2, %c0_18, %c0_19, %c0_20] : memref<3x4x32x8xbf16, #tpu.memory_space<vmem>>, vector<1x1x32x8xbf16>
    %19 = vector.shape_cast %18 : vector<1x1x32x8xbf16> to vector<32x8xbf16>
    %c0_21 = arith.constant 0 : index
    %c0_22 = arith.constant 0 : index
    %c0_23 = arith.constant 0 : index
    %20 = vector.load %arg6[%c0_21, %c0_22, %c0_23] : memref<4x8x32xbf16, #tpu.memory_space<vmem>>, vector<1x8x32xbf16>
    %21 = vector.shape_cast %20 : vector<1x8x32xbf16> to vector<8x32xbf16>
    %cst_24 = arith.constant dense<0.000000e+00> : vector<8x8xf32>
    %22 = tpu.matmul %2, %15, %cst_24 {dimension_numbers = #tpu.dot_dimension_numbers<[1], [0], [0], [1], [0, 0, 1, 1], [], []>} : vector<8x32xbf16>, vector<32x8xbf16>, vector<8x8xf32> -> vector<8x8xf32>
    %23 = vector.extract_strided_slice %9 {offsets = [0, 0], sizes = [1, 8], strides = [1, 1]} : vector<1x32xf32> to vector<1x8xf32>
    %24 = vector.broadcast %23 : vector<1x8xf32> to vector<8x8xf32>
    %25 = arith.addf %22, %24 : vector<8x8xf32>
    %26 = vector.shape_cast %25 : vector<8x8xf32> to vector<1x8x8xf32>
    %27 = arith.truncf %26 : vector<1x8x8xf32> to vector<1x8x8xbf16>
    %cst_25 = arith.constant dense<0.000000e+00> : vector<8x8xf32>
    %28 = tpu.matmul %2, %17, %cst_25 {dimension_numbers = #tpu.dot_dimension_numbers<[1], [0], [0], [1], [0, 0, 1, 1], [], []>} : vector<8x32xbf16>, vector<32x8xbf16>, vector<8x8xf32> -> vector<8x8xf32>
    %29 = vector.extract_strided_slice %10 {offsets = [0, 0], sizes = [1, 8], strides = [1, 1]} : vector<1x32xf32> to vector<1x8xf32>
    %30 = vector.broadcast %29 : vector<1x8xf32> to vector<8x8xf32>
    %31 = arith.addf %28, %30 : vector<8x8xf32>
    %32 = vector.shape_cast %31 : vector<8x8xf32> to vector<1x8x8xf32>
    %33 = arith.truncf %32 : vector<1x8x8xf32> to vector<1x8x8xbf16>
    %cst_26 = arith.constant dense<0.000000e+00> : vector<8x8xf32>
    %34 = tpu.matmul %2, %19, %cst_26 {dimension_numbers = #tpu.dot_dimension_numbers<[1], [0], [0], [1], [0, 0, 1, 1], [], []>} : vector<8x32xbf16>, vector<32x8xbf16>, vector<8x8xf32> -> vector<8x8xf32>
    %35 = vector.extract_strided_slice %11 {offsets = [0, 0], sizes = [1, 8], strides = [1, 1]} : vector<1x32xf32> to vector<1x8xf32>
    %36 = vector.broadcast %35 : vector<1x8xf32> to vector<8x8xf32>
    %37 = arith.addf %34, %36 : vector<8x8xf32>
    %38 = vector.shape_cast %37 : vector<8x8xf32> to vector<1x8x8xf32>
    %39 = arith.truncf %38 : vector<1x8x8xf32> to vector<1x8x8xbf16>
    "tpu.trace_start"() <{level = 10 : i32, message = "bqd,bkd->bqk"}> : () -> ()
    %cst_27 = arith.constant dense<0.000000e+00> : vector<1x8x8xf32>
    %40 = tpu.matmul %27, %33, %cst_27 {dimension_numbers = #tpu.dot_dimension_numbers<[2], [2], [1], [1], [0, 0, 0, 1, 1, 1], [0], [0]>} : vector<1x8x8xbf16>, vector<1x8x8xbf16>, vector<1x8x8xf32> -> vector<1x8x8xf32>
    "tpu.trace_stop"() : () -> ()
    %41 = arith.addf %40, %6 : vector<1x8x8xf32>
    %cst_28 = arith.constant dense<0xFF800000> : vector<1x8xf32>
    %42 = vector.multi_reduction <maximumf>, %41, %cst_28 [2] : vector<1x8x8xf32> to vector<1x8xf32>
    %43 = vector.shape_cast %42 : vector<1x8xf32> to vector<1x8x1xf32>
    %44 = vector.broadcast %43 : vector<1x8x1xf32> to vector<1x8x8xf32>
    %45 = arith.subf %41, %44 : vector<1x8x8xf32>
    %46 = math.exp %45 : vector<1x8x8xf32>
    %cst_29 = arith.constant dense<0.000000e+00> : vector<1x8xf32>
    %47 = vector.multi_reduction <add>, %46, %cst_29 [2] : vector<1x8x8xf32> to vector<1x8xf32>
    %48 = vector.shape_cast %47 : vector<1x8xf32> to vector<1x8x1xf32>
    %49 = tpu.reciprocal %48 {approx = true} : vector<1x8x1xf32> -> vector<1x8x1xf32>
    %50 = vector.broadcast %49 : vector<1x8x1xf32> to vector<1x8x8xf32>
    %51 = arith.mulf %46, %50 : vector<1x8x8xf32>
    %52 = arith.truncf %51 : vector<1x8x8xf32> to vector<1x8x8xbf16>
    "tpu.trace_start"() <{level = 10 : i32, message = "bqk,bkd->bqd"}> : () -> ()
    %cst_30 = arith.constant dense<0.000000e+00> : vector<1x8x8xf32>
    %53 = tpu.matmul %52, %39, %cst_30 {dimension_numbers = #tpu.dot_dimension_numbers<[2], [1], [1], [2], [0, 0, 0, 1, 1, 2], [0], [0]>} : vector<1x8x8xbf16>, vector<1x8x8xbf16>, vector<1x8x8xf32> -> vector<1x8x8xf32>
    "tpu.trace_stop"() : () -> ()
    %54 = vector.shape_cast %53 : vector<1x8x8xf32> to vector<8x8xf32>
    %55 = arith.truncf %54 : vector<8x8xf32> to vector<8x8xbf16>
    %cst_31 = arith.constant dense<0.000000e+00> : vector<8x32xf32>
    %56 = tpu.matmul %55, %21, %cst_31 {dimension_numbers = #tpu.dot_dimension_numbers<[1], [0], [0], [1], [0, 0, 1, 1], [], []>} : vector<8x8xbf16>, vector<8x32xbf16>, vector<8x32xf32> -> vector<8x32xf32>
    %57 = arith.addf %13, %56 : vector<8x32xf32>
    %c0_32 = arith.constant 0 : index
    %c1_33 = arith.constant 1 : index
    %c0_34 = arith.constant 0 : index
    %c0_35 = arith.constant 0 : index
    %58 = vector.load %arg5[%c0_32, %c1_33, %c0_34, %c0_35] : memref<3x4x32x8xbf16, #tpu.memory_space<vmem>>, vector<1x1x32x8xbf16>
    %59 = vector.shape_cast %58 : vector<1x1x32x8xbf16> to vector<32x8xbf16>
    %c1_36 = arith.constant 1 : index
    %c1_37 = arith.constant 1 : index
    %c0_38 = arith.constant 0 : index
    %c0_39 = arith.constant 0 : index
    %60 = vector.load %arg5[%c1_36, %c1_37, %c0_38, %c0_39] : memref<3x4x32x8xbf16, #tpu.memory_space<vmem>>, vector<1x1x32x8xbf16>
    %61 = vector.shape_cast %60 : vector<1x1x32x8xbf16> to vector<32x8xbf16>
    %c2_40 = arith.constant 2 : index
    %c1_41 = arith.constant 1 : index
    %c0_42 = arith.constant 0 : index
    %c0_43 = arith.constant 0 : index
    %62 = vector.load %arg5[%c2_40, %c1_41, %c0_42, %c0_43] : memref<3x4x32x8xbf16, #tpu.memory_space<vmem>>, vector<1x1x32x8xbf16>
    %63 = vector.shape_cast %62 : vector<1x1x32x8xbf16> to vector<32x8xbf16>
    %c1_44 = arith.constant 1 : index
    %c0_45 = arith.constant 0 : index
    %c0_46 = arith.constant 0 : index
    %64 = vector.load %arg6[%c1_44, %c0_45, %c0_46] : memref<4x8x32xbf16, #tpu.memory_space<vmem>>, vector<1x8x32xbf16>
    %65 = vector.shape_cast %64 : vector<1x8x32xbf16> to vector<8x32xbf16>
    %cst_47 = arith.constant dense<0.000000e+00> : vector<8x8xf32>
    %66 = tpu.matmul %2, %59, %cst_47 {dimension_numbers = #tpu.dot_dimension_numbers<[1], [0], [0], [1], [0, 0, 1, 1], [], []>} : vector<8x32xbf16>, vector<32x8xbf16>, vector<8x8xf32> -> vector<8x8xf32>
    %67 = vector.extract_strided_slice %9 {offsets = [0, 8], sizes = [1, 8], strides = [1, 1]} : vector<1x32xf32> to vector<1x8xf32>
    %68 = vector.broadcast %67 : vector<1x8xf32> to vector<8x8xf32>
    %69 = arith.addf %66, %68 : vector<8x8xf32>
    %70 = vector.shape_cast %69 : vector<8x8xf32> to vector<1x8x8xf32>
    %71 = arith.truncf %70 : vector<1x8x8xf32> to vector<1x8x8xbf16>
    %cst_48 = arith.constant dense<0.000000e+00> : vector<8x8xf32>
    %72 = tpu.matmul %2, %61, %cst_48 {dimension_numbers = #tpu.dot_dimension_numbers<[1], [0], [0], [1], [0, 0, 1, 1], [], []>} : vector<8x32xbf16>, vector<32x8xbf16>, vector<8x8xf32> -> vector<8x8xf32>
    %73 = vector.extract_strided_slice %10 {offsets = [0, 8], sizes = [1, 8], strides = [1, 1]} : vector<1x32xf32> to vector<1x8xf32>
    %74 = vector.broadcast %73 : vector<1x8xf32> to vector<8x8xf32>
    %75 = arith.addf %72, %74 : vector<8x8xf32>
    %76 = vector.shape_cast %75 : vector<8x8xf32> to vector<1x8x8xf32>
    %77 = arith.truncf %76 : vector<1x8x8xf32> to vector<1x8x8xbf16>
    %cst_49 = arith.constant dense<0.000000e+00> : vector<8x8xf32>
    %78 = tpu.matmul %2, %63, %cst_49 {dimension_numbers = #tpu.dot_dimension_numbers<[1], [0], [0], [1], [0, 0, 1, 1], [], []>} : vector<8x32xbf16>, vector<32x8xbf16>, vector<8x8xf32> -> vector<8x8xf32>
    %79 = vector.extract_strided_slice %11 {offsets = [0, 8], sizes = [1, 8], strides = [1, 1]} : vector<1x32xf32> to vector<1x8xf32>
    %80 = vector.broadcast %79 : vector<1x8xf32> to vector<8x8xf32>
    %81 = arith.addf %78, %80 : vector<8x8xf32>
    %82 = vector.shape_cast %81 : vector<8x8xf32> to vector<1x8x8xf32>
    %83 = arith.truncf %82 : vector<1x8x8xf32> to vector<1x8x8xbf16>
    "tpu.trace_start"() <{level = 10 : i32, message = "bqd,bkd->bqk"}> : () -> ()
    %cst_50 = arith.constant dense<0.000000e+00> : vector<1x8x8xf32>
    %84 = tpu.matmul %71, %77, %cst_50 {dimension_numbers = #tpu.dot_dimension_numbers<[2], [2], [1], [1], [0, 0, 0, 1, 1, 1], [0], [0]>} : vector<1x8x8xbf16>, vector<1x8x8xbf16>, vector<1x8x8xf32> -> vector<1x8x8xf32>
    "tpu.trace_stop"() : () -> ()
    %85 = arith.addf %84, %6 : vector<1x8x8xf32>
    %cst_51 = arith.constant dense<0xFF800000> : vector<1x8xf32>
    %86 = vector.multi_reduction <maximumf>, %85, %cst_51 [2] : vector<1x8x8xf32> to vector<1x8xf32>
    %87 = vector.shape_cast %86 : vector<1x8xf32> to vector<1x8x1xf32>
    %88 = vector.broadcast %87 : vector<1x8x1xf32> to vector<1x8x8xf32>
    %89 = arith.subf %85, %88 : vector<1x8x8xf32>
    %90 = math.exp %89 : vector<1x8x8xf32>
    %cst_52 = arith.constant dense<0.000000e+00> : vector<1x8xf32>
    %91 = vector.multi_reduction <add>, %90, %cst_52 [2] : vector<1x8x8xf32> to vector<1x8xf32>
    %92 = vector.shape_cast %91 : vector<1x8xf32> to vector<1x8x1xf32>
    %93 = tpu.reciprocal %92 {approx = true} : vector<1x8x1xf32> -> vector<1x8x1xf32>
    %94 = vector.broadcast %93 : vector<1x8x1xf32> to vector<1x8x8xf32>
    %95 = arith.mulf %90, %94 : vector<1x8x8xf32>
    %96 = arith.truncf %95 : vector<1x8x8xf32> to vector<1x8x8xbf16>
    "tpu.trace_start"() <{level = 10 : i32, message = "bqk,bkd->bqd"}> : () -> ()
    %cst_53 = arith.constant dense<0.000000e+00> : vector<1x8x8xf32>
    %97 = tpu.matmul %96, %83, %cst_53 {dimension_numbers = #tpu.dot_dimension_numbers<[2], [1], [1], [2], [0, 0, 0, 1, 1, 2], [0], [0]>} : vector<1x8x8xbf16>, vector<1x8x8xbf16>, vector<1x8x8xf32> -> vector<1x8x8xf32>
    "tpu.trace_stop"() : () -> ()
    %98 = vector.shape_cast %97 : vector<1x8x8xf32> to vector<8x8xf32>
    %99 = arith.truncf %98 : vector<8x8xf32> to vector<8x8xbf16>
    %cst_54 = arith.constant dense<0.000000e+00> : vector<8x32xf32>
    %100 = tpu.matmul %99, %65, %cst_54 {dimension_numbers = #tpu.dot_dimension_numbers<[1], [0], [0], [1], [0, 0, 1, 1], [], []>} : vector<8x8xbf16>, vector<8x32xbf16>, vector<8x32xf32> -> vector<8x32xf32>
    %101 = arith.addf %57, %100 : vector<8x32xf32>
    %c0_55 = arith.constant 0 : index
    %c2_56 = arith.constant 2 : index
    %c0_57 = arith.constant 0 : index
    %c0_58 = arith.constant 0 : index
    %102 = vector.load %arg5[%c0_55, %c2_56, %c0_57, %c0_58] : memref<3x4x32x8xbf16, #tpu.memory_space<vmem>>, vector<1x1x32x8xbf16>
    %103 = vector.shape_cast %102 : vector<1x1x32x8xbf16> to vector<32x8xbf16>
    %c1_59 = arith.constant 1 : index
    %c2_60 = arith.constant 2 : index
    %c0_61 = arith.constant 0 : index
    %c0_62 = arith.constant 0 : index
    %104 = vector.load %arg5[%c1_59, %c2_60, %c0_61, %c0_62] : memref<3x4x32x8xbf16, #tpu.memory_space<vmem>>, vector<1x1x32x8xbf16>
    %105 = vector.shape_cast %104 : vector<1x1x32x8xbf16> to vector<32x8xbf16>
    %c2_63 = arith.constant 2 : index
    %c2_64 = arith.constant 2 : index
    %c0_65 = arith.constant 0 : index
    %c0_66 = arith.constant 0 : index
    %106 = vector.load %arg5[%c2_63, %c2_64, %c0_65, %c0_66] : memref<3x4x32x8xbf16, #tpu.memory_space<vmem>>, vector<1x1x32x8xbf16>
    %107 = vector.shape_cast %106 : vector<1x1x32x8xbf16> to vector<32x8xbf16>
    %c2_67 = arith.constant 2 : index
    %c0_68 = arith.constant 0 : index
    %c0_69 = arith.constant 0 : index
    %108 = vector.load %arg6[%c2_67, %c0_68, %c0_69] : memref<4x8x32xbf16, #tpu.memory_space<vmem>>, vector<1x8x32xbf16>
    %109 = vector.shape_cast %108 : vector<1x8x32xbf16> to vector<8x32xbf16>
    %cst_70 = arith.constant dense<0.000000e+00> : vector<8x8xf32>
    %110 = tpu.matmul %2, %103, %cst_70 {dimension_numbers = #tpu.dot_dimension_numbers<[1], [0], [0], [1], [0, 0, 1, 1], [], []>} : vector<8x32xbf16>, vector<32x8xbf16>, vector<8x8xf32> -> vector<8x8xf32>
    %111 = vector.extract_strided_slice %9 {offsets = [0, 16], sizes = [1, 8], strides = [1, 1]} : vector<1x32xf32> to vector<1x8xf32>
    %112 = vector.broadcast %111 : vector<1x8xf32> to vector<8x8xf32>
    %113 = arith.addf %110, %112 : vector<8x8xf32>
    %114 = vector.shape_cast %113 : vector<8x8xf32> to vector<1x8x8xf32>
    %115 = arith.truncf %114 : vector<1x8x8xf32> to vector<1x8x8xbf16>
    %cst_71 = arith.constant dense<0.000000e+00> : vector<8x8xf32>
    %116 = tpu.matmul %2, %105, %cst_71 {dimension_numbers = #tpu.dot_dimension_numbers<[1], [0], [0], [1], [0, 0, 1, 1], [], []>} : vector<8x32xbf16>, vector<32x8xbf16>, vector<8x8xf32> -> vector<8x8xf32>
    %117 = vector.extract_strided_slice %10 {offsets = [0, 16], sizes = [1, 8], strides = [1, 1]} : vector<1x32xf32> to vector<1x8xf32>
    %118 = vector.broadcast %117 : vector<1x8xf32> to vector<8x8xf32>
    %119 = arith.addf %116, %118 : vector<8x8xf32>
    %120 = vector.shape_cast %119 : vector<8x8xf32> to vector<1x8x8xf32>
    %121 = arith.truncf %120 : vector<1x8x8xf32> to vector<1x8x8xbf16>
    %cst_72 = arith.constant dense<0.000000e+00> : vector<8x8xf32>
    %122 = tpu.matmul %2, %107, %cst_72 {dimension_numbers = #tpu.dot_dimension_numbers<[1], [0], [0], [1], [0, 0, 1, 1], [], []>} : vector<8x32xbf16>, vector<32x8xbf16>, vector<8x8xf32> -> vector<8x8xf32>
    %123 = vector.extract_strided_slice %11 {offsets = [0, 16], sizes = [1, 8], strides = [1, 1]} : vector<1x32xf32> to vector<1x8xf32>
    %124 = vector.broadcast %123 : vector<1x8xf32> to vector<8x8xf32>
    %125 = arith.addf %122, %124 : vector<8x8xf32>
    %126 = vector.shape_cast %125 : vector<8x8xf32> to vector<1x8x8xf32>
    %127 = arith.truncf %126 : vector<1x8x8xf32> to vector<1x8x8xbf16>
    "tpu.trace_start"() <{level = 10 : i32, message = "bqd,bkd->bqk"}> : () -> ()
    %cst_73 = arith.constant dense<0.000000e+00> : vector<1x8x8xf32>
    %128 = tpu.matmul %115, %121, %cst_73 {dimension_numbers = #tpu.dot_dimension_numbers<[2], [2], [1], [1], [0, 0, 0, 1, 1, 1], [0], [0]>} : vector<1x8x8xbf16>, vector<1x8x8xbf16>, vector<1x8x8xf32> -> vector<1x8x8xf32>
    "tpu.trace_stop"() : () -> ()
    %129 = arith.addf %128, %6 : vector<1x8x8xf32>
    %cst_74 = arith.constant dense<0xFF800000> : vector<1x8xf32>
    %130 = vector.multi_reduction <maximumf>, %129, %cst_74 [2] : vector<1x8x8xf32> to vector<1x8xf32>
    %131 = vector.shape_cast %130 : vector<1x8xf32> to vector<1x8x1xf32>
    %132 = vector.broadcast %131 : vector<1x8x1xf32> to vector<1x8x8xf32>
    %133 = arith.subf %129, %132 : vector<1x8x8xf32>
    %134 = math.exp %133 : vector<1x8x8xf32>
    %cst_75 = arith.constant dense<0.000000e+00> : vector<1x8xf32>
    %135 = vector.multi_reduction <add>, %134, %cst_75 [2] : vector<1x8x8xf32> to vector<1x8xf32>
    %136 = vector.shape_cast %135 : vector<1x8xf32> to vector<1x8x1xf32>
    %137 = tpu.reciprocal %136 {approx = true} : vector<1x8x1xf32> -> vector<1x8x1xf32>
    %138 = vector.broadcast %137 : vector<1x8x1xf32> to vector<1x8x8xf32>
    %139 = arith.mulf %134, %138 : vector<1x8x8xf32>
    %140 = arith.truncf %139 : vector<1x8x8xf32> to vector<1x8x8xbf16>
    "tpu.trace_start"() <{level = 10 : i32, message = "bqk,bkd->bqd"}> : () -> ()
    %cst_76 = arith.constant dense<0.000000e+00> : vector<1x8x8xf32>
    %141 = tpu.matmul %140, %127, %cst_76 {dimension_numbers = #tpu.dot_dimension_numbers<[2], [1], [1], [2], [0, 0, 0, 1, 1, 2], [0], [0]>} : vector<1x8x8xbf16>, vector<1x8x8xbf16>, vector<1x8x8xf32> -> vector<1x8x8xf32>
    "tpu.trace_stop"() : () -> ()
    %142 = vector.shape_cast %141 : vector<1x8x8xf32> to vector<8x8xf32>
    %143 = arith.truncf %142 : vector<8x8xf32> to vector<8x8xbf16>
    %cst_77 = arith.constant dense<0.000000e+00> : vector<8x32xf32>
    %144 = tpu.matmul %143, %109, %cst_77 {dimension_numbers = #tpu.dot_dimension_numbers<[1], [0], [0], [1], [0, 0, 1, 1], [], []>} : vector<8x8xbf16>, vector<8x32xbf16>, vector<8x32xf32> -> vector<8x32xf32>
    %145 = arith.addf %101, %144 : vector<8x32xf32>
    %c0_78 = arith.constant 0 : index
    %c3 = arith.constant 3 : index
    %c0_79 = arith.constant 0 : index
    %c0_80 = arith.constant 0 : index
    %146 = vector.load %arg5[%c0_78, %c3, %c0_79, %c0_80] : memref<3x4x32x8xbf16, #tpu.memory_space<vmem>>, vector<1x1x32x8xbf16>
    %147 = vector.shape_cast %146 : vector<1x1x32x8xbf16> to vector<32x8xbf16>
    %c1_81 = arith.constant 1 : index
    %c3_82 = arith.constant 3 : index
    %c0_83 = arith.constant 0 : index
    %c0_84 = arith.constant 0 : index
    %148 = vector.load %arg5[%c1_81, %c3_82, %c0_83, %c0_84] : memref<3x4x32x8xbf16, #tpu.memory_space<vmem>>, vector<1x1x32x8xbf16>
    %149 = vector.shape_cast %148 : vector<1x1x32x8xbf16> to vector<32x8xbf16>
    %c2_85 = arith.constant 2 : index
    %c3_86 = arith.constant 3 : index
    %c0_87 = arith.constant 0 : index
    %c0_88 = arith.constant 0 : index
    %150 = vector.load %arg5[%c2_85, %c3_86, %c0_87, %c0_88] : memref<3x4x32x8xbf16, #tpu.memory_space<vmem>>, vector<1x1x32x8xbf16>
    %151 = vector.shape_cast %150 : vector<1x1x32x8xbf16> to vector<32x8xbf16>
    %c3_89 = arith.constant 3 : index
    %c0_90 = arith.constant 0 : index
    %c0_91 = arith.constant 0 : index
    %152 = vector.load %arg6[%c3_89, %c0_90, %c0_91] : memref<4x8x32xbf16, #tpu.memory_space<vmem>>, vector<1x8x32xbf16>
    %153 = vector.shape_cast %152 : vector<1x8x32xbf16> to vector<8x32xbf16>
    %cst_92 = arith.constant dense<0.000000e+00> : vector<8x8xf32>
    %154 = tpu.matmul %2, %147, %cst_92 {dimension_numbers = #tpu.dot_dimension_numbers<[1], [0], [0], [1], [0, 0, 1, 1], [], []>} : vector<8x32xbf16>, vector<32x8xbf16>, vector<8x8xf32> -> vector<8x8xf32>
    %155 = vector.extract_strided_slice %9 {offsets = [0, 24], sizes = [1, 8], strides = [1, 1]} : vector<1x32xf32> to vector<1x8xf32>
    %156 = vector.broadcast %155 : vector<1x8xf32> to vector<8x8xf32>
    %157 = arith.addf %154, %156 : vector<8x8xf32>
    %158 = vector.shape_cast %157 : vector<8x8xf32> to vector<1x8x8xf32>
    %159 = arith.truncf %158 : vector<1x8x8xf32> to vector<1x8x8xbf16>
    %cst_93 = arith.constant dense<0.000000e+00> : vector<8x8xf32>
    %160 = tpu.matmul %2, %149, %cst_93 {dimension_numbers = #tpu.dot_dimension_numbers<[1], [0], [0], [1], [0, 0, 1, 1], [], []>} : vector<8x32xbf16>, vector<32x8xbf16>, vector<8x8xf32> -> vector<8x8xf32>
    %161 = vector.extract_strided_slice %10 {offsets = [0, 24], sizes = [1, 8], strides = [1, 1]} : vector<1x32xf32> to vector<1x8xf32>
    %162 = vector.broadcast %161 : vector<1x8xf32> to vector<8x8xf32>
    %163 = arith.addf %160, %162 : vector<8x8xf32>
    %164 = vector.shape_cast %163 : vector<8x8xf32> to vector<1x8x8xf32>
    %165 = arith.truncf %164 : vector<1x8x8xf32> to vector<1x8x8xbf16>
    %cst_94 = arith.constant dense<0.000000e+00> : vector<8x8xf32>
    %166 = tpu.matmul %2, %151, %cst_94 {dimension_numbers = #tpu.dot_dimension_numbers<[1], [0], [0], [1], [0, 0, 1, 1], [], []>} : vector<8x32xbf16>, vector<32x8xbf16>, vector<8x8xf32> -> vector<8x8xf32>
    %167 = vector.extract_strided_slice %11 {offsets = [0, 24], sizes = [1, 8], strides = [1, 1]} : vector<1x32xf32> to vector<1x8xf32>
    %168 = vector.broadcast %167 : vector<1x8xf32> to vector<8x8xf32>
    %169 = arith.addf %166, %168 : vector<8x8xf32>
    %170 = vector.shape_cast %169 : vector<8x8xf32> to vector<1x8x8xf32>
    %171 = arith.truncf %170 : vector<1x8x8xf32> to vector<1x8x8xbf16>
    "tpu.trace_start"() <{level = 10 : i32, message = "bqd,bkd->bqk"}> : () -> ()
    %cst_95 = arith.constant dense<0.000000e+00> : vector<1x8x8xf32>
    %172 = tpu.matmul %159, %165, %cst_95 {dimension_numbers = #tpu.dot_dimension_numbers<[2], [2], [1], [1], [0, 0, 0, 1, 1, 1], [0], [0]>} : vector<1x8x8xbf16>, vector<1x8x8xbf16>, vector<1x8x8xf32> -> vector<1x8x8xf32>
    "tpu.trace_stop"() : () -> ()
    %173 = arith.addf %172, %6 : vector<1x8x8xf32>
    %cst_96 = arith.constant dense<0xFF800000> : vector<1x8xf32>
    %174 = vector.multi_reduction <maximumf>, %173, %cst_96 [2] : vector<1x8x8xf32> to vector<1x8xf32>
    %175 = vector.shape_cast %174 : vector<1x8xf32> to vector<1x8x1xf32>
    %176 = vector.broadcast %175 : vector<1x8x1xf32> to vector<1x8x8xf32>
    %177 = arith.subf %173, %176 : vector<1x8x8xf32>
    %178 = math.exp %177 : vector<1x8x8xf32>
    %cst_97 = arith.constant dense<0.000000e+00> : vector<1x8xf32>
    %179 = vector.multi_reduction <add>, %178, %cst_97 [2] : vector<1x8x8xf32> to vector<1x8xf32>
    %180 = vector.shape_cast %179 : vector<1x8xf32> to vector<1x8x1xf32>
    %181 = tpu.reciprocal %180 {approx = true} : vector<1x8x1xf32> -> vector<1x8x1xf32>
    %182 = vector.broadcast %181 : vector<1x8x1xf32> to vector<1x8x8xf32>
    %183 = arith.mulf %178, %182 : vector<1x8x8xf32>
    %184 = arith.truncf %183 : vector<1x8x8xf32> to vector<1x8x8xbf16>
    "tpu.trace_start"() <{level = 10 : i32, message = "bqk,bkd->bqd"}> : () -> ()
    %cst_98 = arith.constant dense<0.000000e+00> : vector<1x8x8xf32>
    %185 = tpu.matmul %184, %171, %cst_98 {dimension_numbers = #tpu.dot_dimension_numbers<[2], [1], [1], [2], [0, 0, 0, 1, 1, 2], [0], [0]>} : vector<1x8x8xbf16>, vector<1x8x8xbf16>, vector<1x8x8xf32> -> vector<1x8x8xf32>
    "tpu.trace_stop"() : () -> ()
    %186 = vector.shape_cast %185 : vector<1x8x8xf32> to vector<8x8xf32>
    %187 = arith.truncf %186 : vector<8x8xf32> to vector<8x8xbf16>
    %cst_99 = arith.constant dense<0.000000e+00> : vector<8x32xf32>
    %188 = tpu.matmul %187, %153, %cst_99 {dimension_numbers = #tpu.dot_dimension_numbers<[1], [0], [0], [1], [0, 0, 1, 1], [], []>} : vector<8x8xbf16>, vector<8x32xbf16>, vector<8x32xf32> -> vector<8x32xf32>
    %189 = arith.addf %145, %188 : vector<8x32xf32>
    %190 = vector.broadcast %12 : vector<1x32xf32> to vector<8x32xf32>
    %191 = arith.addf %189, %190 : vector<8x32xf32>
    %192 = arith.addf %1, %191 : vector<8x32xf32>
    %193 = vector.extract_strided_slice %0 {offsets = [9, 0], sizes = [1, 32], strides = [1, 1]} : vector<16x32xf32> to vector<1x32xf32>
    %194 = vector.extract_strided_slice %0 {offsets = [10, 0], sizes = [1, 32], strides = [1, 1]} : vector<16x32xf32> to vector<1x32xf32>
    %cst_100 = arith.constant dense<0.000000e+00> : vector<8xf32>
    %195 = vector.multi_reduction <add>, %192, %cst_100 [1] : vector<8x32xf32> to vector<8xf32>
    %196 = vector.shape_cast %195 : vector<8xf32> to vector<8x1xf32>
    %cst_101 = arith.constant 3.200000e+01 : f32
    %197 = vector.broadcast %cst_101 : f32 to vector<8x1xf32>
    %198 = arith.divf %196, %197 : vector<8x1xf32>
    %199 = vector.broadcast %198 : vector<8x1xf32> to vector<8x32xf32>
    %200 = arith.subf %192, %199 : vector<8x32xf32>
    %201 = arith.mulf %200, %200 : vector<8x32xf32>
    %cst_102 = arith.constant dense<0.000000e+00> : vector<8xf32>
    %202 = vector.multi_reduction <add>, %201, %cst_102 [1] : vector<8x32xf32> to vector<8xf32>
    %203 = vector.shape_cast %202 : vector<8xf32> to vector<8x1xf32>
    %cst_103 = arith.constant 3.200000e+01 : f32
    %204 = vector.broadcast %cst_103 : f32 to vector<8x1xf32>
    %205 = arith.divf %203, %204 : vector<8x1xf32>
    %cst_104 = arith.constant 9.99999974E-6 : f32
    %206 = vector.broadcast %cst_104 : f32 to vector<8x1xf32>
    %207 = arith.addf %205, %206 : vector<8x1xf32>
    %208 = math.rsqrt %207 : vector<8x1xf32>
    %209 = vector.broadcast %208 : vector<8x1xf32> to vector<8x32xf32>
    %210 = arith.mulf %200, %209 : vector<8x32xf32>
    %211 = vector.broadcast %193 : vector<1x32xf32> to vector<8x32xf32>
    %212 = arith.mulf %210, %211 : vector<8x32xf32>
    %213 = vector.broadcast %194 : vector<1x32xf32> to vector<8x32xf32>
    %214 = arith.addf %212, %213 : vector<8x32xf32>
    %215 = arith.truncf %214 : vector<8x32xf32> to vector<8x32xbf16>
    %216 = vector.extract_strided_slice %0 {offsets = [4, 0], sizes = [1, 32], strides = [1, 1]} : vector<16x32xf32> to vector<1x32xf32>
    %217 = vector.extract_strided_slice %0 {offsets = [5, 0], sizes = [1, 32], strides = [1, 1]} : vector<16x32xf32> to vector<1x32xf32>
    %218 = vector.extract_strided_slice %0 {offsets = [6, 0], sizes = [1, 32], strides = [1, 1]} : vector<16x32xf32> to vector<1x32xf32>
    %219 = vector.extract_strided_slice %0 {offsets = [7, 0], sizes = [1, 32], strides = [1, 1]} : vector<16x32xf32> to vector<1x32xf32>
    %cst_105 = arith.constant 0.000000e+00 : f32
    %220 = vector.broadcast %cst_105 : f32 to vector<8x32xf32>
    %c0_106 = arith.constant 0 : index
    %c0_107 = arith.constant 0 : index
    %c0_108 = arith.constant 0 : index
    %c0_109 = arith.constant 0 : index
    %221 = vector.load %arg7[%c0_106, %c0_107, %c0_108, %c0_109] : memref<3x4x32x8xbf16, #tpu.memory_space<vmem>>, vector<1x1x32x8xbf16>
    %222 = vector.shape_cast %221 : vector<1x1x32x8xbf16> to vector<32x8xbf16>
    %c1_110 = arith.constant 1 : index
    %c0_111 = arith.constant 0 : index
    %c0_112 = arith.constant 0 : index
    %c0_113 = arith.constant 0 : index
    %223 = vector.load %arg7[%c1_110, %c0_111, %c0_112, %c0_113] : memref<3x4x32x8xbf16, #tpu.memory_space<vmem>>, vector<1x1x32x8xbf16>
    %224 = vector.shape_cast %223 : vector<1x1x32x8xbf16> to vector<32x8xbf16>
    %c2_114 = arith.constant 2 : index
    %c0_115 = arith.constant 0 : index
    %c0_116 = arith.constant 0 : index
    %c0_117 = arith.constant 0 : index
    %225 = vector.load %arg7[%c2_114, %c0_115, %c0_116, %c0_117] : memref<3x4x32x8xbf16, #tpu.memory_space<vmem>>, vector<1x1x32x8xbf16>
    %226 = vector.shape_cast %225 : vector<1x1x32x8xbf16> to vector<32x8xbf16>
    %c0_118 = arith.constant 0 : index
    %c0_119 = arith.constant 0 : index
    %c0_120 = arith.constant 0 : index
    %227 = vector.load %arg8[%c0_118, %c0_119, %c0_120] : memref<4x8x32xbf16, #tpu.memory_space<vmem>>, vector<1x8x32xbf16>
    %228 = vector.shape_cast %227 : vector<1x8x32xbf16> to vector<8x32xbf16>
    %cst_121 = arith.constant dense<0.000000e+00> : vector<8x8xf32>
    %229 = tpu.matmul %215, %222, %cst_121 {dimension_numbers = #tpu.dot_dimension_numbers<[1], [0], [0], [1], [0, 0, 1, 1], [], []>} : vector<8x32xbf16>, vector<32x8xbf16>, vector<8x8xf32> -> vector<8x8xf32>
    %230 = vector.extract_strided_slice %216 {offsets = [0, 0], sizes = [1, 8], strides = [1, 1]} : vector<1x32xf32> to vector<1x8xf32>
    %231 = vector.broadcast %230 : vector<1x8xf32> to vector<8x8xf32>
    %232 = arith.addf %229, %231 : vector<8x8xf32>
    %233 = vector.shape_cast %232 : vector<8x8xf32> to vector<1x8x8xf32>
    %234 = arith.truncf %233 : vector<1x8x8xf32> to vector<1x8x8xbf16>
    %cst_122 = arith.constant dense<0.000000e+00> : vector<16x8xf32>
    %235 = tpu.matmul %4, %224, %cst_122 {dimension_numbers = #tpu.dot_dimension_numbers<[1], [0], [0], [1], [0, 0, 1, 1], [], []>} : vector<16x32xbf16>, vector<32x8xbf16>, vector<16x8xf32> -> vector<16x8xf32>
    %236 = vector.extract_strided_slice %217 {offsets = [0, 0], sizes = [1, 8], strides = [1, 1]} : vector<1x32xf32> to vector<1x8xf32>
    %237 = vector.broadcast %236 : vector<1x8xf32> to vector<16x8xf32>
    %238 = arith.addf %235, %237 : vector<16x8xf32>
    %239 = vector.shape_cast %238 : vector<16x8xf32> to vector<1x16x8xf32>
    %240 = arith.truncf %239 : vector<1x16x8xf32> to vector<1x16x8xbf16>
    %cst_123 = arith.constant dense<0.000000e+00> : vector<16x8xf32>
    %241 = tpu.matmul %4, %226, %cst_123 {dimension_numbers = #tpu.dot_dimension_numbers<[1], [0], [0], [1], [0, 0, 1, 1], [], []>} : vector<16x32xbf16>, vector<32x8xbf16>, vector<16x8xf32> -> vector<16x8xf32>
    %242 = vector.extract_strided_slice %218 {offsets = [0, 0], sizes = [1, 8], strides = [1, 1]} : vector<1x32xf32> to vector<1x8xf32>
    %243 = vector.broadcast %242 : vector<1x8xf32> to vector<16x8xf32>
    %244 = arith.addf %241, %243 : vector<16x8xf32>
    %245 = vector.shape_cast %244 : vector<16x8xf32> to vector<1x16x8xf32>
    %246 = arith.truncf %245 : vector<1x16x8xf32> to vector<1x16x8xbf16>
    "tpu.trace_start"() <{level = 10 : i32, message = "bqd,bkd->bqk"}> : () -> ()
    %cst_124 = arith.constant dense<0.000000e+00> : vector<1x8x16xf32>
    %247 = tpu.matmul %234, %240, %cst_124 {dimension_numbers = #tpu.dot_dimension_numbers<[2], [2], [1], [1], [0, 0, 0, 1, 1, 1], [0], [0]>} : vector<1x8x8xbf16>, vector<1x16x8xbf16>, vector<1x8x16xf32> -> vector<1x8x16xf32>
    "tpu.trace_stop"() : () -> ()
    %248 = arith.addf %247, %8 : vector<1x8x16xf32>
    %cst_125 = arith.constant dense<0xFF800000> : vector<1x8xf32>
    %249 = vector.multi_reduction <maximumf>, %248, %cst_125 [2] : vector<1x8x16xf32> to vector<1x8xf32>
    %250 = vector.shape_cast %249 : vector<1x8xf32> to vector<1x8x1xf32>
    %251 = vector.broadcast %250 : vector<1x8x1xf32> to vector<1x8x16xf32>
    %252 = arith.subf %248, %251 : vector<1x8x16xf32>
    %253 = math.exp %252 : vector<1x8x16xf32>
    %cst_126 = arith.constant dense<0.000000e+00> : vector<1x8xf32>
    %254 = vector.multi_reduction <add>, %253, %cst_126 [2] : vector<1x8x16xf32> to vector<1x8xf32>
    %255 = vector.shape_cast %254 : vector<1x8xf32> to vector<1x8x1xf32>
    %256 = tpu.reciprocal %255 {approx = true} : vector<1x8x1xf32> -> vector<1x8x1xf32>
    %257 = vector.broadcast %256 : vector<1x8x1xf32> to vector<1x8x16xf32>
    %258 = arith.mulf %253, %257 : vector<1x8x16xf32>
    %259 = arith.truncf %258 : vector<1x8x16xf32> to vector<1x8x16xbf16>
    "tpu.trace_start"() <{level = 10 : i32, message = "bqk,bkd->bqd"}> : () -> ()
    %cst_127 = arith.constant dense<0.000000e+00> : vector<1x8x8xf32>
    %260 = tpu.matmul %259, %246, %cst_127 {dimension_numbers = #tpu.dot_dimension_numbers<[2], [1], [1], [2], [0, 0, 0, 1, 1, 2], [0], [0]>} : vector<1x8x16xbf16>, vector<1x16x8xbf16>, vector<1x8x8xf32> -> vector<1x8x8xf32>
    "tpu.trace_stop"() : () -> ()
    %261 = vector.shape_cast %260 : vector<1x8x8xf32> to vector<8x8xf32>
    %262 = arith.truncf %261 : vector<8x8xf32> to vector<8x8xbf16>
    %cst_128 = arith.constant dense<0.000000e+00> : vector<8x32xf32>
    %263 = tpu.matmul %262, %228, %cst_128 {dimension_numbers = #tpu.dot_dimension_numbers<[1], [0], [0], [1], [0, 0, 1, 1], [], []>} : vector<8x8xbf16>, vector<8x32xbf16>, vector<8x32xf32> -> vector<8x32xf32>
    %264 = arith.addf %220, %263 : vector<8x32xf32>
    %c0_129 = arith.constant 0 : index
    %c1_130 = arith.constant 1 : index
    %c0_131 = arith.constant 0 : index
    %c0_132 = arith.constant 0 : index
    %265 = vector.load %arg7[%c0_129, %c1_130, %c0_131, %c0_132] : memref<3x4x32x8xbf16, #tpu.memory_space<vmem>>, vector<1x1x32x8xbf16>
    %266 = vector.shape_cast %265 : vector<1x1x32x8xbf16> to vector<32x8xbf16>
    %c1_133 = arith.constant 1 : index
    %c1_134 = arith.constant 1 : index
    %c0_135 = arith.constant 0 : index
    %c0_136 = arith.constant 0 : index
    %267 = vector.load %arg7[%c1_133, %c1_134, %c0_135, %c0_136] : memref<3x4x32x8xbf16, #tpu.memory_space<vmem>>, vector<1x1x32x8xbf16>
    %268 = vector.shape_cast %267 : vector<1x1x32x8xbf16> to vector<32x8xbf16>
    %c2_137 = arith.constant 2 : index
    %c1_138 = arith.constant 1 : index
    %c0_139 = arith.constant 0 : index
    %c0_140 = arith.constant 0 : index
    %269 = vector.load %arg7[%c2_137, %c1_138, %c0_139, %c0_140] : memref<3x4x32x8xbf16, #tpu.memory_space<vmem>>, vector<1x1x32x8xbf16>
    %270 = vector.shape_cast %269 : vector<1x1x32x8xbf16> to vector<32x8xbf16>
    %c1_141 = arith.constant 1 : index
    %c0_142 = arith.constant 0 : index
    %c0_143 = arith.constant 0 : index
    %271 = vector.load %arg8[%c1_141, %c0_142, %c0_143] : memref<4x8x32xbf16, #tpu.memory_space<vmem>>, vector<1x8x32xbf16>
    %272 = vector.shape_cast %271 : vector<1x8x32xbf16> to vector<8x32xbf16>
    %cst_144 = arith.constant dense<0.000000e+00> : vector<8x8xf32>
    %273 = tpu.matmul %215, %266, %cst_144 {dimension_numbers = #tpu.dot_dimension_numbers<[1], [0], [0], [1], [0, 0, 1, 1], [], []>} : vector<8x32xbf16>, vector<32x8xbf16>, vector<8x8xf32> -> vector<8x8xf32>
    %274 = vector.extract_strided_slice %216 {offsets = [0, 8], sizes = [1, 8], strides = [1, 1]} : vector<1x32xf32> to vector<1x8xf32>
    %275 = vector.broadcast %274 : vector<1x8xf32> to vector<8x8xf32>
    %276 = arith.addf %273, %275 : vector<8x8xf32>
    %277 = vector.shape_cast %276 : vector<8x8xf32> to vector<1x8x8xf32>
    %278 = arith.truncf %277 : vector<1x8x8xf32> to vector<1x8x8xbf16>
    %cst_145 = arith.constant dense<0.000000e+00> : vector<16x8xf32>
    %279 = tpu.matmul %4, %268, %cst_145 {dimension_numbers = #tpu.dot_dimension_numbers<[1], [0], [0], [1], [0, 0, 1, 1], [], []>} : vector<16x32xbf16>, vector<32x8xbf16>, vector<16x8xf32> -> vector<16x8xf32>
    %280 = vector.extract_strided_slice %217 {offsets = [0, 8], sizes = [1, 8], strides = [1, 1]} : vector<1x32xf32> to vector<1x8xf32>
    %281 = vector.broadcast %280 : vector<1x8xf32> to vector<16x8xf32>
    %282 = arith.addf %279, %281 : vector<16x8xf32>
    %283 = vector.shape_cast %282 : vector<16x8xf32> to vector<1x16x8xf32>
    %284 = arith.truncf %283 : vector<1x16x8xf32> to vector<1x16x8xbf16>
    %cst_146 = arith.constant dense<0.000000e+00> : vector<16x8xf32>
    %285 = tpu.matmul %4, %270, %cst_146 {dimension_numbers = #tpu.dot_dimension_numbers<[1], [0], [0], [1], [0, 0, 1, 1], [], []>} : vector<16x32xbf16>, vector<32x8xbf16>, vector<16x8xf32> -> vector<16x8xf32>
    %286 = vector.extract_strided_slice %218 {offsets = [0, 8], sizes = [1, 8], strides = [1, 1]} : vector<1x32xf32> to vector<1x8xf32>
    %287 = vector.broadcast %286 : vector<1x8xf32> to vector<16x8xf32>
    %288 = arith.addf %285, %287 : vector<16x8xf32>
    %289 = vector.shape_cast %288 : vector<16x8xf32> to vector<1x16x8xf32>
    %290 = arith.truncf %289 : vector<1x16x8xf32> to vector<1x16x8xbf16>
    "tpu.trace_start"() <{level = 10 : i32, message = "bqd,bkd->bqk"}> : () -> ()
    %cst_147 = arith.constant dense<0.000000e+00> : vector<1x8x16xf32>
    %291 = tpu.matmul %278, %284, %cst_147 {dimension_numbers = #tpu.dot_dimension_numbers<[2], [2], [1], [1], [0, 0, 0, 1, 1, 1], [0], [0]>} : vector<1x8x8xbf16>, vector<1x16x8xbf16>, vector<1x8x16xf32> -> vector<1x8x16xf32>
    "tpu.trace_stop"() : () -> ()
    %292 = arith.addf %291, %8 : vector<1x8x16xf32>
    %cst_148 = arith.constant dense<0xFF800000> : vector<1x8xf32>
    %293 = vector.multi_reduction <maximumf>, %292, %cst_148 [2] : vector<1x8x16xf32> to vector<1x8xf32>
    %294 = vector.shape_cast %293 : vector<1x8xf32> to vector<1x8x1xf32>
    %295 = vector.broadcast %294 : vector<1x8x1xf32> to vector<1x8x16xf32>
    %296 = arith.subf %292, %295 : vector<1x8x16xf32>
    %297 = math.exp %296 : vector<1x8x16xf32>
    %cst_149 = arith.constant dense<0.000000e+00> : vector<1x8xf32>
    %298 = vector.multi_reduction <add>, %297, %cst_149 [2] : vector<1x8x16xf32> to vector<1x8xf32>
    %299 = vector.shape_cast %298 : vector<1x8xf32> to vector<1x8x1xf32>
    %300 = tpu.reciprocal %299 {approx = true} : vector<1x8x1xf32> -> vector<1x8x1xf32>
    %301 = vector.broadcast %300 : vector<1x8x1xf32> to vector<1x8x16xf32>
    %302 = arith.mulf %297, %301 : vector<1x8x16xf32>
    %303 = arith.truncf %302 : vector<1x8x16xf32> to vector<1x8x16xbf16>
    "tpu.trace_start"() <{level = 10 : i32, message = "bqk,bkd->bqd"}> : () -> ()
    %cst_150 = arith.constant dense<0.000000e+00> : vector<1x8x8xf32>
    %304 = tpu.matmul %303, %290, %cst_150 {dimension_numbers = #tpu.dot_dimension_numbers<[2], [1], [1], [2], [0, 0, 0, 1, 1, 2], [0], [0]>} : vector<1x8x16xbf16>, vector<1x16x8xbf16>, vector<1x8x8xf32> -> vector<1x8x8xf32>
    "tpu.trace_stop"() : () -> ()
    %305 = vector.shape_cast %304 : vector<1x8x8xf32> to vector<8x8xf32>
    %306 = arith.truncf %305 : vector<8x8xf32> to vector<8x8xbf16>
    %cst_151 = arith.constant dense<0.000000e+00> : vector<8x32xf32>
    %307 = tpu.matmul %306, %272, %cst_151 {dimension_numbers = #tpu.dot_dimension_numbers<[1], [0], [0], [1], [0, 0, 1, 1], [], []>} : vector<8x8xbf16>, vector<8x32xbf16>, vector<8x32xf32> -> vector<8x32xf32>
    %308 = arith.addf %264, %307 : vector<8x32xf32>
    %c0_152 = arith.constant 0 : index
    %c2_153 = arith.constant 2 : index
    %c0_154 = arith.constant 0 : index
    %c0_155 = arith.constant 0 : index
    %309 = vector.load %arg7[%c0_152, %c2_153, %c0_154, %c0_155] : memref<3x4x32x8xbf16, #tpu.memory_space<vmem>>, vector<1x1x32x8xbf16>
    %310 = vector.shape_cast %309 : vector<1x1x32x8xbf16> to vector<32x8xbf16>
    %c1_156 = arith.constant 1 : index
    %c2_157 = arith.constant 2 : index
    %c0_158 = arith.constant 0 : index
    %c0_159 = arith.constant 0 : index
    %311 = vector.load %arg7[%c1_156, %c2_157, %c0_158, %c0_159] : memref<3x4x32x8xbf16, #tpu.memory_space<vmem>>, vector<1x1x32x8xbf16>
    %312 = vector.shape_cast %311 : vector<1x1x32x8xbf16> to vector<32x8xbf16>
    %c2_160 = arith.constant 2 : index
    %c2_161 = arith.constant 2 : index
    %c0_162 = arith.constant 0 : index
    %c0_163 = arith.constant 0 : index
    %313 = vector.load %arg7[%c2_160, %c2_161, %c0_162, %c0_163] : memref<3x4x32x8xbf16, #tpu.memory_space<vmem>>, vector<1x1x32x8xbf16>
    %314 = vector.shape_cast %313 : vector<1x1x32x8xbf16> to vector<32x8xbf16>
    %c2_164 = arith.constant 2 : index
    %c0_165 = arith.constant 0 : index
    %c0_166 = arith.constant 0 : index
    %315 = vector.load %arg8[%c2_164, %c0_165, %c0_166] : memref<4x8x32xbf16, #tpu.memory_space<vmem>>, vector<1x8x32xbf16>
    %316 = vector.shape_cast %315 : vector<1x8x32xbf16> to vector<8x32xbf16>
    %cst_167 = arith.constant dense<0.000000e+00> : vector<8x8xf32>
    %317 = tpu.matmul %215, %310, %cst_167 {dimension_numbers = #tpu.dot_dimension_numbers<[1], [0], [0], [1], [0, 0, 1, 1], [], []>} : vector<8x32xbf16>, vector<32x8xbf16>, vector<8x8xf32> -> vector<8x8xf32>
    %318 = vector.extract_strided_slice %216 {offsets = [0, 16], sizes = [1, 8], strides = [1, 1]} : vector<1x32xf32> to vector<1x8xf32>
    %319 = vector.broadcast %318 : vector<1x8xf32> to vector<8x8xf32>
    %320 = arith.addf %317, %319 : vector<8x8xf32>
    %321 = vector.shape_cast %320 : vector<8x8xf32> to vector<1x8x8xf32>
    %322 = arith.truncf %321 : vector<1x8x8xf32> to vector<1x8x8xbf16>
    %cst_168 = arith.constant dense<0.000000e+00> : vector<16x8xf32>
    %323 = tpu.matmul %4, %312, %cst_168 {dimension_numbers = #tpu.dot_dimension_numbers<[1], [0], [0], [1], [0, 0, 1, 1], [], []>} : vector<16x32xbf16>, vector<32x8xbf16>, vector<16x8xf32> -> vector<16x8xf32>
    %324 = vector.extract_strided_slice %217 {offsets = [0, 16], sizes = [1, 8], strides = [1, 1]} : vector<1x32xf32> to vector<1x8xf32>
    %325 = vector.broadcast %324 : vector<1x8xf32> to vector<16x8xf32>
    %326 = arith.addf %323, %325 : vector<16x8xf32>
    %327 = vector.shape_cast %326 : vector<16x8xf32> to vector<1x16x8xf32>
    %328 = arith.truncf %327 : vector<1x16x8xf32> to vector<1x16x8xbf16>
    %cst_169 = arith.constant dense<0.000000e+00> : vector<16x8xf32>
    %329 = tpu.matmul %4, %314, %cst_169 {dimension_numbers = #tpu.dot_dimension_numbers<[1], [0], [0], [1], [0, 0, 1, 1], [], []>} : vector<16x32xbf16>, vector<32x8xbf16>, vector<16x8xf32> -> vector<16x8xf32>
    %330 = vector.extract_strided_slice %218 {offsets = [0, 16], sizes = [1, 8], strides = [1, 1]} : vector<1x32xf32> to vector<1x8xf32>
    %331 = vector.broadcast %330 : vector<1x8xf32> to vector<16x8xf32>
    %332 = arith.addf %329, %331 : vector<16x8xf32>
    %333 = vector.shape_cast %332 : vector<16x8xf32> to vector<1x16x8xf32>
    %334 = arith.truncf %333 : vector<1x16x8xf32> to vector<1x16x8xbf16>
    "tpu.trace_start"() <{level = 10 : i32, message = "bqd,bkd->bqk"}> : () -> ()
    %cst_170 = arith.constant dense<0.000000e+00> : vector<1x8x16xf32>
    %335 = tpu.matmul %322, %328, %cst_170 {dimension_numbers = #tpu.dot_dimension_numbers<[2], [2], [1], [1], [0, 0, 0, 1, 1, 1], [0], [0]>} : vector<1x8x8xbf16>, vector<1x16x8xbf16>, vector<1x8x16xf32> -> vector<1x8x16xf32>
    "tpu.trace_stop"() : () -> ()
    %336 = arith.addf %335, %8 : vector<1x8x16xf32>
    %cst_171 = arith.constant dense<0xFF800000> : vector<1x8xf32>
    %337 = vector.multi_reduction <maximumf>, %336, %cst_171 [2] : vector<1x8x16xf32> to vector<1x8xf32>
    %338 = vector.shape_cast %337 : vector<1x8xf32> to vector<1x8x1xf32>
    %339 = vector.broadcast %338 : vector<1x8x1xf32> to vector<1x8x16xf32>
    %340 = arith.subf %336, %339 : vector<1x8x16xf32>
    %341 = math.exp %340 : vector<1x8x16xf32>
    %cst_172 = arith.constant dense<0.000000e+00> : vector<1x8xf32>
    %342 = vector.multi_reduction <add>, %341, %cst_172 [2] : vector<1x8x16xf32> to vector<1x8xf32>
    %343 = vector.shape_cast %342 : vector<1x8xf32> to vector<1x8x1xf32>
    %344 = tpu.reciprocal %343 {approx = true} : vector<1x8x1xf32> -> vector<1x8x1xf32>
    %345 = vector.broadcast %344 : vector<1x8x1xf32> to vector<1x8x16xf32>
    %346 = arith.mulf %341, %345 : vector<1x8x16xf32>
    %347 = arith.truncf %346 : vector<1x8x16xf32> to vector<1x8x16xbf16>
    "tpu.trace_start"() <{level = 10 : i32, message = "bqk,bkd->bqd"}> : () -> ()
    %cst_173 = arith.constant dense<0.000000e+00> : vector<1x8x8xf32>
    %348 = tpu.matmul %347, %334, %cst_173 {dimension_numbers = #tpu.dot_dimension_numbers<[2], [1], [1], [2], [0, 0, 0, 1, 1, 2], [0], [0]>} : vector<1x8x16xbf16>, vector<1x16x8xbf16>, vector<1x8x8xf32> -> vector<1x8x8xf32>
    "tpu.trace_stop"() : () -> ()
    %349 = vector.shape_cast %348 : vector<1x8x8xf32> to vector<8x8xf32>
    %350 = arith.truncf %349 : vector<8x8xf32> to vector<8x8xbf16>
    %cst_174 = arith.constant dense<0.000000e+00> : vector<8x32xf32>
    %351 = tpu.matmul %350, %316, %cst_174 {dimension_numbers = #tpu.dot_dimension_numbers<[1], [0], [0], [1], [0, 0, 1, 1], [], []>} : vector<8x8xbf16>, vector<8x32xbf16>, vector<8x32xf32> -> vector<8x32xf32>
    %352 = arith.addf %308, %351 : vector<8x32xf32>
    %c0_175 = arith.constant 0 : index
    %c3_176 = arith.constant 3 : index
    %c0_177 = arith.constant 0 : index
    %c0_178 = arith.constant 0 : index
    %353 = vector.load %arg7[%c0_175, %c3_176, %c0_177, %c0_178] : memref<3x4x32x8xbf16, #tpu.memory_space<vmem>>, vector<1x1x32x8xbf16>
    %354 = vector.shape_cast %353 : vector<1x1x32x8xbf16> to vector<32x8xbf16>
    %c1_179 = arith.constant 1 : index
    %c3_180 = arith.constant 3 : index
    %c0_181 = arith.constant 0 : index
    %c0_182 = arith.constant 0 : index
    %355 = vector.load %arg7[%c1_179, %c3_180, %c0_181, %c0_182] : memref<3x4x32x8xbf16, #tpu.memory_space<vmem>>, vector<1x1x32x8xbf16>
    %356 = vector.shape_cast %355 : vector<1x1x32x8xbf16> to vector<32x8xbf16>
    %c2_183 = arith.constant 2 : index
    %c3_184 = arith.constant 3 : index
    %c0_185 = arith.constant 0 : index
    %c0_186 = arith.constant 0 : index
    %357 = vector.load %arg7[%c2_183, %c3_184, %c0_185, %c0_186] : memref<3x4x32x8xbf16, #tpu.memory_space<vmem>>, vector<1x1x32x8xbf16>
    %358 = vector.shape_cast %357 : vector<1x1x32x8xbf16> to vector<32x8xbf16>
    %c3_187 = arith.constant 3 : index
    %c0_188 = arith.constant 0 : index
    %c0_189 = arith.constant 0 : index
    %359 = vector.load %arg8[%c3_187, %c0_188, %c0_189] : memref<4x8x32xbf16, #tpu.memory_space<vmem>>, vector<1x8x32xbf16>
    %360 = vector.shape_cast %359 : vector<1x8x32xbf16> to vector<8x32xbf16>
    %cst_190 = arith.constant dense<0.000000e+00> : vector<8x8xf32>
    %361 = tpu.matmul %215, %354, %cst_190 {dimension_numbers = #tpu.dot_dimension_numbers<[1], [0], [0], [1], [0, 0, 1, 1], [], []>} : vector<8x32xbf16>, vector<32x8xbf16>, vector<8x8xf32> -> vector<8x8xf32>
    %362 = vector.extract_strided_slice %216 {offsets = [0, 24], sizes = [1, 8], strides = [1, 1]} : vector<1x32xf32> to vector<1x8xf32>
    %363 = vector.broadcast %362 : vector<1x8xf32> to vector<8x8xf32>
    %364 = arith.addf %361, %363 : vector<8x8xf32>
    %365 = vector.shape_cast %364 : vector<8x8xf32> to vector<1x8x8xf32>
    %366 = arith.truncf %365 : vector<1x8x8xf32> to vector<1x8x8xbf16>
    %cst_191 = arith.constant dense<0.000000e+00> : vector<16x8xf32>
    %367 = tpu.matmul %4, %356, %cst_191 {dimension_numbers = #tpu.dot_dimension_numbers<[1], [0], [0], [1], [0, 0, 1, 1], [], []>} : vector<16x32xbf16>, vector<32x8xbf16>, vector<16x8xf32> -> vector<16x8xf32>
    %368 = vector.extract_strided_slice %217 {offsets = [0, 24], sizes = [1, 8], strides = [1, 1]} : vector<1x32xf32> to vector<1x8xf32>
    %369 = vector.broadcast %368 : vector<1x8xf32> to vector<16x8xf32>
    %370 = arith.addf %367, %369 : vector<16x8xf32>
    %371 = vector.shape_cast %370 : vector<16x8xf32> to vector<1x16x8xf32>
    %372 = arith.truncf %371 : vector<1x16x8xf32> to vector<1x16x8xbf16>
    %cst_192 = arith.constant dense<0.000000e+00> : vector<16x8xf32>
    %373 = tpu.matmul %4, %358, %cst_192 {dimension_numbers = #tpu.dot_dimension_numbers<[1], [0], [0], [1], [0, 0, 1, 1], [], []>} : vector<16x32xbf16>, vector<32x8xbf16>, vector<16x8xf32> -> vector<16x8xf32>
    %374 = vector.extract_strided_slice %218 {offsets = [0, 24], sizes = [1, 8], strides = [1, 1]} : vector<1x32xf32> to vector<1x8xf32>
    %375 = vector.broadcast %374 : vector<1x8xf32> to vector<16x8xf32>
    %376 = arith.addf %373, %375 : vector<16x8xf32>
    %377 = vector.shape_cast %376 : vector<16x8xf32> to vector<1x16x8xf32>
    %378 = arith.truncf %377 : vector<1x16x8xf32> to vector<1x16x8xbf16>
    "tpu.trace_start"() <{level = 10 : i32, message = "bqd,bkd->bqk"}> : () -> ()
    %cst_193 = arith.constant dense<0.000000e+00> : vector<1x8x16xf32>
    %379 = tpu.matmul %366, %372, %cst_193 {dimension_numbers = #tpu.dot_dimension_numbers<[2], [2], [1], [1], [0, 0, 0, 1, 1, 1], [0], [0]>} : vector<1x8x8xbf16>, vector<1x16x8xbf16>, vector<1x8x16xf32> -> vector<1x8x16xf32>
    "tpu.trace_stop"() : () -> ()
    %380 = arith.addf %379, %8 : vector<1x8x16xf32>
    %cst_194 = arith.constant dense<0xFF800000> : vector<1x8xf32>
    %381 = vector.multi_reduction <maximumf>, %380, %cst_194 [2] : vector<1x8x16xf32> to vector<1x8xf32>
    %382 = vector.shape_cast %381 : vector<1x8xf32> to vector<1x8x1xf32>
    %383 = vector.broadcast %382 : vector<1x8x1xf32> to vector<1x8x16xf32>
    %384 = arith.subf %380, %383 : vector<1x8x16xf32>
    %385 = math.exp %384 : vector<1x8x16xf32>
    %cst_195 = arith.constant dense<0.000000e+00> : vector<1x8xf32>
    %386 = vector.multi_reduction <add>, %385, %cst_195 [2] : vector<1x8x16xf32> to vector<1x8xf32>
    %387 = vector.shape_cast %386 : vector<1x8xf32> to vector<1x8x1xf32>
    %388 = tpu.reciprocal %387 {approx = true} : vector<1x8x1xf32> -> vector<1x8x1xf32>
    %389 = vector.broadcast %388 : vector<1x8x1xf32> to vector<1x8x16xf32>
    %390 = arith.mulf %385, %389 : vector<1x8x16xf32>
    %391 = arith.truncf %390 : vector<1x8x16xf32> to vector<1x8x16xbf16>
    "tpu.trace_start"() <{level = 10 : i32, message = "bqk,bkd->bqd"}> : () -> ()
    %cst_196 = arith.constant dense<0.000000e+00> : vector<1x8x8xf32>
    %392 = tpu.matmul %391, %378, %cst_196 {dimension_numbers = #tpu.dot_dimension_numbers<[2], [1], [1], [2], [0, 0, 0, 1, 1, 2], [0], [0]>} : vector<1x8x16xbf16>, vector<1x16x8xbf16>, vector<1x8x8xf32> -> vector<1x8x8xf32>
    "tpu.trace_stop"() : () -> ()
    %393 = vector.shape_cast %392 : vector<1x8x8xf32> to vector<8x8xf32>
    %394 = arith.truncf %393 : vector<8x8xf32> to vector<8x8xbf16>
    %cst_197 = arith.constant dense<0.000000e+00> : vector<8x32xf32>
    %395 = tpu.matmul %394, %360, %cst_197 {dimension_numbers = #tpu.dot_dimension_numbers<[1], [0], [0], [1], [0, 0, 1, 1], [], []>} : vector<8x8xbf16>, vector<8x32xbf16>, vector<8x32xf32> -> vector<8x32xf32>
    %396 = arith.addf %352, %395 : vector<8x32xf32>
    %397 = vector.broadcast %219 : vector<1x32xf32> to vector<8x32xf32>
    %398 = arith.addf %396, %397 : vector<8x32xf32>
    %399 = arith.addf %214, %398 : vector<8x32xf32>
    %400 = vector.extract_strided_slice %0 {offsets = [11, 0], sizes = [1, 32], strides = [1, 1]} : vector<16x32xf32> to vector<1x32xf32>
    %401 = vector.extract_strided_slice %0 {offsets = [12, 0], sizes = [1, 32], strides = [1, 1]} : vector<16x32xf32> to vector<1x32xf32>
    %cst_198 = arith.constant dense<0.000000e+00> : vector<8xf32>
    %402 = vector.multi_reduction <add>, %399, %cst_198 [1] : vector<8x32xf32> to vector<8xf32>
    %403 = vector.shape_cast %402 : vector<8xf32> to vector<8x1xf32>
    %cst_199 = arith.constant 3.200000e+01 : f32
    %404 = vector.broadcast %cst_199 : f32 to vector<8x1xf32>
    %405 = arith.divf %403, %404 : vector<8x1xf32>
    %406 = vector.broadcast %405 : vector<8x1xf32> to vector<8x32xf32>
    %407 = arith.subf %399, %406 : vector<8x32xf32>
    %408 = arith.mulf %407, %407 : vector<8x32xf32>
    %cst_200 = arith.constant dense<0.000000e+00> : vector<8xf32>
    %409 = vector.multi_reduction <add>, %408, %cst_200 [1] : vector<8x32xf32> to vector<8xf32>
    %410 = vector.shape_cast %409 : vector<8xf32> to vector<8x1xf32>
    %cst_201 = arith.constant 3.200000e+01 : f32
    %411 = vector.broadcast %cst_201 : f32 to vector<8x1xf32>
    %412 = arith.divf %410, %411 : vector<8x1xf32>
    %cst_202 = arith.constant 9.99999974E-6 : f32
    %413 = vector.broadcast %cst_202 : f32 to vector<8x1xf32>
    %414 = arith.addf %412, %413 : vector<8x1xf32>
    %415 = math.rsqrt %414 : vector<8x1xf32>
    %416 = vector.broadcast %415 : vector<8x1xf32> to vector<8x32xf32>
    %417 = arith.mulf %407, %416 : vector<8x32xf32>
    %418 = vector.broadcast %400 : vector<1x32xf32> to vector<8x32xf32>
    %419 = arith.mulf %417, %418 : vector<8x32xf32>
    %420 = vector.broadcast %401 : vector<1x32xf32> to vector<8x32xf32>
    %421 = arith.addf %419, %420 : vector<8x32xf32>
    %422 = arith.truncf %421 : vector<8x32xf32> to vector<8x32xbf16>
    %c0_203 = arith.constant 0 : index
    %c0_204 = arith.constant 0 : index
    %423 = vector.load %arg9[%c0_203, %c0_204] : memref<32x64xbf16, #tpu.memory_space<vmem>>, vector<32x64xbf16>
    %cst_205 = arith.constant dense<0.000000e+00> : vector<8x64xf32>
    %424 = tpu.matmul %422, %423, %cst_205 {dimension_numbers = #tpu.dot_dimension_numbers<[1], [0], [0], [1], [0, 0, 1, 1], [], []>} : vector<8x32xbf16>, vector<32x64xbf16>, vector<8x64xf32> -> vector<8x64xf32>
    %c0_206 = arith.constant 0 : index
    %c0_207 = arith.constant 0 : index
    %425 = vector.load %arg11[%c0_206, %c0_207] : memref<1x64xf32, #tpu.memory_space<vmem>>, vector<1x64xf32>
    %426 = vector.broadcast %425 : vector<1x64xf32> to vector<8x64xf32>
    %427 = arith.addf %424, %426 : vector<8x64xf32>
    %cst_208 = arith.constant 0.000000e+00 : f32
    %428 = vector.broadcast %cst_208 : f32 to vector<8x64xf32>
    %429 = arith.maximumf %427, %428 : vector<8x64xf32>
    %430 = arith.truncf %429 : vector<8x64xf32> to vector<8x64xbf16>
    %c0_209 = arith.constant 0 : index
    %c0_210 = arith.constant 0 : index
    %431 = vector.load %arg10[%c0_209, %c0_210] : memref<64x32xbf16, #tpu.memory_space<vmem>>, vector<64x32xbf16>
    %cst_211 = arith.constant dense<0.000000e+00> : vector<8x32xf32>
    %432 = tpu.matmul %430, %431, %cst_211 {dimension_numbers = #tpu.dot_dimension_numbers<[1], [0], [0], [1], [0, 0, 1, 1], [], []>} : vector<8x64xbf16>, vector<64x32xbf16>, vector<8x32xf32> -> vector<8x32xf32>
    %433 = vector.extract_strided_slice %0 {offsets = [8, 0], sizes = [1, 32], strides = [1, 1]} : vector<16x32xf32> to vector<1x32xf32>
    %434 = vector.broadcast %433 : vector<1x32xf32> to vector<8x32xf32>
    %435 = arith.addf %432, %434 : vector<8x32xf32>
    %436 = arith.addf %421, %435 : vector<8x32xf32>
    %437 = vector.extract_strided_slice %0 {offsets = [13, 0], sizes = [1, 32], strides = [1, 1]} : vector<16x32xf32> to vector<1x32xf32>
    %438 = vector.extract_strided_slice %0 {offsets = [14, 0], sizes = [1, 32], strides = [1, 1]} : vector<16x32xf32> to vector<1x32xf32>
    %cst_212 = arith.constant dense<0.000000e+00> : vector<8xf32>
    %439 = vector.multi_reduction <add>, %436, %cst_212 [1] : vector<8x32xf32> to vector<8xf32>
    %440 = vector.shape_cast %439 : vector<8xf32> to vector<8x1xf32>
    %cst_213 = arith.constant 3.200000e+01 : f32
    %441 = vector.broadcast %cst_213 : f32 to vector<8x1xf32>
    %442 = arith.divf %440, %441 : vector<8x1xf32>
    %443 = vector.broadcast %442 : vector<8x1xf32> to vector<8x32xf32>
    %444 = arith.subf %436, %443 : vector<8x32xf32>
    %445 = arith.mulf %444, %444 : vector<8x32xf32>
    %cst_214 = arith.constant dense<0.000000e+00> : vector<8xf32>
    %446 = vector.multi_reduction <add>, %445, %cst_214 [1] : vector<8x32xf32> to vector<8xf32>
    %447 = vector.shape_cast %446 : vector<8xf32> to vector<8x1xf32>
    %cst_215 = arith.constant 3.200000e+01 : f32
    %448 = vector.broadcast %cst_215 : f32 to vector<8x1xf32>
    %449 = arith.divf %447, %448 : vector<8x1xf32>
    %cst_216 = arith.constant 9.99999974E-6 : f32
    %450 = vector.broadcast %cst_216 : f32 to vector<8x1xf32>
    %451 = arith.addf %449, %450 : vector<8x1xf32>
    %452 = math.rsqrt %451 : vector<8x1xf32>
    %453 = vector.broadcast %452 : vector<8x1xf32> to vector<8x32xf32>
    %454 = arith.mulf %444, %453 : vector<8x32xf32>
    %455 = vector.broadcast %437 : vector<1x32xf32> to vector<8x32xf32>
    %456 = arith.mulf %454, %455 : vector<8x32xf32>
    %457 = vector.broadcast %438 : vector<1x32xf32> to vector<8x32xf32>
    %458 = arith.addf %456, %457 : vector<8x32xf32>
    %c0_217 = arith.constant 0 : index
    %c0_218 = arith.constant 0 : index
    %459 = vector.load %arg13[%c0_217, %c0_218] : memref<8x32xf32, #tpu.memory_space<vmem>>, vector<8x32xf32>
    tpu.vector_store %arg13[%c0_217, %c0_218], %458 {strides = array<i32>} : memref<8x32xf32, #tpu.memory_space<vmem>>, vector<8x32xf32>,
    return
  }
  func.func @transform_0(%arg0: i32) -> (i32, i32) {
    %c0_i32 = arith.constant 0 : i32
    %c0_i32_0 = arith.constant 0 : i32
    return %arg0, %c0_i32 : i32, i32
  }
  func.func @transform_1(%arg0: i32) -> (i32, i32) {
    %c0_i32 = arith.constant 0 : i32
    %c0_i32_0 = arith.constant 0 : i32
    return %arg0, %c0_i32 : i32, i32
  }
  func.func @transform_2(%arg0: i32) -> (i32, i32, i32) {
    %c0_i32 = arith.constant 0 : i32
    %c0_i32_0 = arith.constant 0 : i32
    %c0_i32_1 = arith.constant 0 : i32
    return %arg0, %c0_i32, %c0_i32_0 : i32, i32, i32
  }
  func.func @transform_3(%arg0: i32) -> (i32, i32, i32) {
    %c0_i32 = arith.constant 0 : i32
    %c0_i32_0 = arith.constant 0 : i32
    %c0_i32_1 = arith.constant 0 : i32
    return %arg0, %c0_i32, %c0_i32_0 : i32, i32, i32
  }
  func.func @transform_4(%arg0: i32) -> (i32, i32, i32, i32) {
    %c0_i32 = arith.constant 0 : i32
    %c0_i32_0 = arith.constant 0 : i32
    %c0_i32_1 = arith.constant 0 : i32
    %c0_i32_2 = arith.constant 0 : i32
    %c0_i32_3 = arith.constant 0 : i32
    return %c0_i32, %c0_i32_0, %c0_i32_1, %c0_i32_2 : i32, i32, i32, i32
  }
  func.func @transform_5(%arg0: i32) -> (i32, i32, i32) {
    %c0_i32 = arith.constant 0 : i32
    %c0_i32_0 = arith.constant 0 : i32
    %c0_i32_1 = arith.constant 0 : i32
    %c0_i32_2 = arith.constant 0 : i32
    return %c0_i32, %c0_i32_0, %c0_i32_1 : i32, i32, i32
  }
  func.func @transform_6(%arg0: i32) -> (i32, i32, i32, i32) {
    %c0_i32 = arith.constant 0 : i32
    %c0_i32_0 = arith.constant 0 : i32
    %c0_i32_1 = arith.constant 0 : i32
    %c0_i32_2 = arith.constant 0 : i32
    %c0_i32_3 = arith.constant 0 : i32
    return %c0_i32, %c0_i32_0, %c0_i32_1, %c0_i32_2 : i32, i32, i32, i32
  }
  func.func @transform_7(%arg0: i32) -> (i32, i32, i32) {
    %c0_i32 = arith.constant 0 : i32
    %c0_i32_0 = arith.constant 0 : i32
    %c0_i32_1 = arith.constant 0 : i32
    %c0_i32_2 = arith.constant 0 : i32
    return %c0_i32, %c0_i32_0, %c0_i32_1 : i32, i32, i32
  }
  func.func @transform_8(%arg0: i32) -> (i32, i32) {
    %c0_i32 = arith.constant 0 : i32
    %c0_i32_0 = arith.constant 0 : i32
    %c0_i32_1 = arith.constant 0 : i32
    return %c0_i32, %c0_i32_0 : i32, i32
  }
  func.func @transform_9(%arg0: i32) -> (i32, i32) {
    %c0_i32 = arith.constant 0 : i32
    %c0_i32_0 = arith.constant 0 : i32
    %c0_i32_1 = arith.constant 0 : i32
    return %c0_i32, %c0_i32_0 : i32, i32
  }
  func.func @transform_10(%arg0: i32) -> (i32, i32) {
    %c0_i32 = arith.constant 0 : i32
    %c0_i32_0 = arith.constant 0 : i32
    %c0_i32_1 = arith.constant 0 : i32
    return %c0_i32, %c0_i32_0 : i32, i32
  }
  func.func @transform_11(%arg0: i32) -> (i32, i32) {
    %c0_i32 = arith.constant 0 : i32
    %c0_i32_0 = arith.constant 0 : i32
    %c0_i32_1 = arith.constant 0 : i32
    return %c0_i32, %c0_i32_0 : i32, i32
  }
  func.func @transform_12(%arg0: i32) -> (i32, i32) {
    %c0_i32 = arith.constant 0 : i32
    %c0_i32_0 = arith.constant 0 : i32
    return %arg0, %c0_i32 : i32, i32
  }
}

</mosaic_0001>

<llo_original>
// kernel: tpu_custom_call.1
$region0: #{tpu_custom_call.1}
  #allocation0 [shape = 'u32[]', space=smem, size = 0x4, offset = 0x4, fixed_abs, tag = 'smem constant byte address 0x4 - core index']
  #allocation1 [shape = 'u32[72,128]{1,0:T(1,128)}', space=vmem, size = 0x9000, scoped, tag = 'internal scratch']
  %s0 = inlined_call_operand.vmem [shape: f32[16,32], index: 0, kind: input, shape index: {}]
  %s1 = inlined_call_operand.vmem [shape: f32[32,32], index: 1, kind: input, shape index: {}]
  %s2 = inlined_call_operand.vmem [shape: bf16[2,8,8], index: 2, kind: input, shape index: {}]
  %s3 = inlined_call_operand.vmem [shape: bf16[2,8,16], index: 3, kind: input, shape index: {}]
  %s4 = inlined_call_operand.vmem [shape: bf16[3,4,32,8], index: 4, kind: input, shape index: {}]
  %s5 = inlined_call_operand.vmem [shape: bf16[4,8,32], index: 5, kind: input, shape index: {}]
  %s6 = inlined_call_operand.vmem [shape: bf16[3,4,32,8], index: 6, kind: input, shape index: {}]
  %s7 = inlined_call_operand.vmem [shape: bf16[4,8,32], index: 7, kind: input, shape index: {}]
  %s8 = inlined_call_operand.vmem [shape: bf16[32,64], index: 8, kind: input, shape index: {}]
  %s9 = inlined_call_operand.vmem [shape: bf16[64,32], index: 9, kind: input, shape index: {}]
  %s10 = inlined_call_operand.vmem [shape: f32[1,64], index: 10, kind: input, shape index: {}]
  %s11 = inlined_call_operand.vmem [shape: f32[16,32], index: 11, kind: input, shape index: {}]
  %s12 = inlined_call_operand.hbm [shape: f32[16,32], index: 12, kind: output, shape index: {}]
  %s13 = sld [smem:[#allocation0]]
  $region81: #{tpu_custom_call.1} parent=0
    _
  %s15 = ssub.s32 1, %s13
  %s16 = scalar_select 0, %s15, %s13
  $region1: #{tpu_custom_call.1} parent=0
    #allocation2 [shape = 'u8[8192]{0}', space=vmem, size = 0x2000, scoped, tag = 'output window, operand 0']
    #allocation3 [shape = 's32[2]{0}', space=sflag, size = 0x8, scoped, tag = 'scoped memory for tpu_custom_call.1']
    %17 = vsyncpa [#allocation3], 0
    %s18 = scalar_lea.sflag [#allocation3], 1
    %19 = vsyncpa %s18, 0
    loop: start=0, step=1, limit=4
    $region2: #{tpu_custom_call.1} parent=1 // loop_pre_header
      _
    $region3: #{tpu_custom_call.1} parent=1 // loop_header
      %s21 = sphi 0, %s25
      %p22 = scmp.ge.s32.totalorder %s21, 4
      %s31 = sphi 0, %s33
      %s34 = sphi 0, %s31
      %s35 = sphi 0, %s34
      %s51 = sphi 0, %s35
      %s57 = sphi 0, %s59
      %s60 = sphi 0, %s57
      %s61 = sphi 0, %s60
      %s77 = sphi 0, %s61
      %s83 = sphi 0, %s85
      %s86 = sphi 0, %s83
      %s87 = sphi 0, %s86
      %s103 = sphi 0, %s87
      %s109 = sphi 0, %s111
      %s112 = sphi 0, %s109
      %s113 = sphi 0, %s112
      %s129 = sphi 0, %s113
      %s133 = sphi 0, %s133
      %s135 = sphi 0, %s133
      %s136 = sphi 0, %s135
      %s150 = sphi 0, %s136
      %s154 = sphi 0, %s154
      %s156 = sphi 0, %s154
      %s157 = sphi 0, %s156
      %s171 = sphi 0, %s157
      %s175 = sphi 0, %s175
      %s177 = sphi 0, %s175
      %s178 = sphi 0, %s177
      %s192 = sphi 0, %s178
      %s196 = sphi 0, %s196
      %s198 = sphi 0, %s196
      %s199 = sphi 0, %s198
      %s213 = sphi 0, %s199
      %s217 = sphi 0, %s217
      %s219 = sphi 0, %s217
      %s220 = sphi 0, %s219
      %s234 = sphi 0, %s220
      %s238 = sphi 0, %s238
      %s240 = sphi 0, %s238
      %s241 = sphi 0, %s240
      %s255 = sphi 0, %s241
      %s259 = sphi 0, %s259
      %s261 = sphi 0, %s259
      %s262 = sphi 0, %s261
      %s276 = sphi 0, %s262
      %s280 = sphi 0, %s280
      %s282 = sphi 0, %s280
      %s283 = sphi 0, %s282
      %s297 = sphi 0, %s283
      %s303 = sphi 0, %s305
      %s306 = sphi 0, %s303
      %s307 = sphi 0, %s306
      %s323 = sphi 0, %s307
    $region4: #{tpu_custom_call.1} parent=1 // loop_header_branch
      %24 = sbr.rel (%p22) target = $region8
    $region5: #{tpu_custom_call.1} parent=1 // loop_body
      %s26 = ssub.s32 %s21, 1
      %s27 = ssub.s32 %s21, 2
      %s28 = sadd.s32 %s21, 1
      %s29 = ssub.s32 %s21, %s28
      %p30 = scmp.eq.s32.totalorder %s29, 0
      %s32 = sadd.s32 %s31, 1
      %s33 = scalar_select %p30, %s31, %s32
      %p36 = pneg %p30
      %p37 = scmp.eq.s32.totalorder %s21, 1
      %p38 = por %p36, %p37
      %p39 = scmp.ne.s32.totalorder %s31, %s34
      %p40 = scmp.eq.s32.totalorder %s21, 0
      %p41 = por %p39, %p40
      %p42 = scmp.ne.s32.totalorder %s31, %s34
      %p43 = scmp.eq.s32.totalorder %s26, 1
      %p44 = por %p42, %p43
      %p45 = scmp.ne.s32.totalorder %s34, %s35
      %p46 = scmp.eq.s32.totalorder %s26, 0
      %p47 = por %p45, %p46
      %p48 = scmp.ne.s32.totalorder %s34, %s35
      %p49 = scmp.eq.s32.totalorder %s27, 1
      %p50 = por %p48, %p49
      %p52 = scmp.ne.s32.totalorder %s35, %s51
      %p53 = scmp.eq.s32.totalorder %s27, 0
      %p54 = por %p52, %p53
      %s55 = ssub.s32 %s21, %s28
      %p56 = scmp.eq.s32.totalorder %s55, 0
      %s58 = sadd.s32 %s57, 1
      %s59 = scalar_select %p56, %s57, %s58
      %p62 = pneg %p56
      %p63 = scmp.eq.s32.totalorder %s21, 1
      %p64 = por %p62, %p63
      %p65 = scmp.ne.s32.totalorder %s57, %s60
      %p66 = scmp.eq.s32.totalorder %s21, 0
      %p67 = por %p65, %p66
      %p68 = scmp.ne.s32.totalorder %s57, %s60
      %p69 = scmp.eq.s32.totalorder %s26, 1
      %p70 = por %p68, %p69
      %p71 = scmp.ne.s32.totalorder %s60, %s61
      %p72 = scmp.eq.s32.totalorder %s26, 0
      %p73 = por %p71, %p72
      %p74 = scmp.ne.s32.totalorder %s60, %s61
      %p75 = scmp.eq.s32.totalorder %s27, 1
      %p76 = por %p74, %p75
      %p78 = scmp.ne.s32.totalorder %s61, %s77
      %p79 = scmp.eq.s32.totalorder %s27, 0
      %p80 = por %p78, %p79
      %s81 = ssub.s32 %s21, %s28
      %p82 = scmp.eq.s32.totalorder %s81, 0
      %s84 = sadd.s32 %s83, 1
      %s85 = scalar_select %p82, %s83, %s84
      %p88 = pneg %p82
      %p89 = scmp.eq.s32.totalorder %s21, 1
      %p90 = por %p88, %p89
      %p91 = scmp.ne.s32.totalorder %s83, %s86
      %p92 = scmp.eq.s32.totalorder %s21, 0
      %p93 = por %p91, %p92
      %p94 = scmp.ne.s32.totalorder %s83, %s86
      %p95 = scmp.eq.s32.totalorder %s26, 1
      %p96 = por %p94, %p95
      %p97 = scmp.ne.s32.totalorder %s86, %s87
      %p98 = scmp.eq.s32.totalorder %s26, 0
      %p99 = por %p97, %p98
      %p100 = scmp.ne.s32.totalorder %s86, %s87
      %p101 = scmp.eq.s32.totalorder %s27, 1
      %p102 = por %p100, %p101
      %p104 = scmp.ne.s32.totalorder %s87, %s103
      %p105 = scmp.eq.s32.totalorder %s27, 0
      %p106 = por %p104, %p105
      %s107 = ssub.s32 %s21, %s28
      %p108 = scmp.eq.s32.totalorder %s107, 0
      %s110 = sadd.s32 %s109, 1
      %s111 = scalar_select %p108, %s109, %s110
      %p114 = pneg %p108
      %p115 = scmp.eq.s32.totalorder %s21, 1
      %p116 = por %p114, %p115
      %p117 = scmp.ne.s32.totalorder %s109, %s112
      %p118 = scmp.eq.s32.totalorder %s21, 0
      %p119 = por %p117, %p118
      %p120 = scmp.ne.s32.totalorder %s109, %s112
      %p121 = scmp.eq.s32.totalorder %s26, 1
      %p122 = por %p120, %p121
      %p123 = scmp.ne.s32.totalorder %s112, %s113
      %p124 = scmp.eq.s32.totalorder %s26, 0
      %p125 = por %p123, %p124
      %p126 = scmp.ne.s32.totalorder %s112, %s113
      %p127 = scmp.eq.s32.totalorder %s27, 1
      %p128 = por %p126, %p127
      %p130 = scmp.ne.s32.totalorder %s113, %s129
      %p131 = scmp.eq.s32.totalorder %s27, 0
      %p132 = por %p130, %p131
      %s134 = sadd.s32 %s133, 1
      %p137 = scmp.eq.s32.totalorder %s21, 1
      %p138 = scmp.ne.s32.totalorder %s133, %s135
      %p139 = scmp.eq.s32.totalorder %s21, 0
      %p140 = por %p138, %p139
      %p141 = scmp.ne.s32.totalorder %s133, %s135
      %p142 = scmp.eq.s32.totalorder %s26, 1
      %p143 = por %p141, %p142
      %p144 = scmp.ne.s32.totalorder %s135, %s136
      %p145 = scmp.eq.s32.totalorder %s26, 0
      %p146 = por %p144, %p145
      %p147 = scmp.ne.s32.totalorder %s135, %s136
      %p148 = scmp.eq.s32.totalorder %s27, 1
      %p149 = por %p147, %p148
      %p151 = scmp.ne.s32.totalorder %s136, %s150
      %p152 = scmp.eq.s32.totalorder %s27, 0
      %p153 = por %p151, %p152
      %s155 = sadd.s32 %s154, 1
      %p158 = scmp.eq.s32.totalorder %s21, 1
      %p159 = scmp.ne.s32.totalorder %s154, %s156
      %p160 = scmp.eq.s32.totalorder %s21, 0
      %p161 = por %p159, %p160
      %p162 = scmp.ne.s32.totalorder %s154, %s156
      %p163 = scmp.eq.s32.totalorder %s26, 1
      %p164 = por %p162, %p163
      %p165 = scmp.ne.s32.totalorder %s156, %s157
      %p166 = scmp.eq.s32.totalorder %s26, 0
      %p167 = por %p165, %p166
      %p168 = scmp.ne.s32.totalorder %s156, %s157
      %p169 = scmp.eq.s32.totalorder %s27, 1
      %p170 = por %p168, %p169
      %p172 = scmp.ne.s32.totalorder %s157, %s171
      %p173 = scmp.eq.s32.totalorder %s27, 0
      %p174 = por %p172, %p173
      %s176 = sadd.s32 %s175, 1
      %p179 = scmp.eq.s32.totalorder %s21, 1
      %p180 = scmp.ne.s32.totalorder %s175, %s177
      %p181 = scmp.eq.s32.totalorder %s21, 0
      %p182 = por %p180, %p181
      %p183 = scmp.ne.s32.totalorder %s175, %s177
      %p184 = scmp.eq.s32.totalorder %s26, 1
      %p185 = por %p183, %p184
      %p186 = scmp.ne.s32.totalorder %s177, %s178
      %p187 = scmp.eq.s32.totalorder %s26, 0
      %p188 = por %p186, %p187
      %p189 = scmp.ne.s32.totalorder %s177, %s178
      %p190 = scmp.eq.s32.totalorder %s27, 1
      %p191 = por %p189, %p190
      %p193 = scmp.ne.s32.totalorder %s178, %s192
      %p194 = scmp.eq.s32.totalorder %s27, 0
      %p195 = por %p193, %p194
      %s197 = sadd.s32 %s196, 1
      %p200 = scmp.eq.s32.totalorder %s21, 1
      %p201 = scmp.ne.s32.totalorder %s196, %s198
      %p202 = scmp.eq.s32.totalorder %s21, 0
      %p203 = por %p201, %p202
      %p204 = scmp.ne.s32.totalorder %s196, %s198
      %p205 = scmp.eq.s32.totalorder %s26, 1
      %p206 = por %p204, %p205
      %p207 = scmp.ne.s32.totalorder %s198, %s199
      %p208 = scmp.eq.s32.totalorder %s26, 0
      %p209 = por %p207, %p208
      %p210 = scmp.ne.s32.totalorder %s198, %s199
      %p211 = scmp.eq.s32.totalorder %s27, 1
      %p212 = por %p210, %p211
      %p214 = scmp.ne.s32.totalorder %s199, %s213
      %p215 = scmp.eq.s32.totalorder %s27, 0
      %p216 = por %p214, %p215
      %s218 = sadd.s32 %s217, 1
      %p221 = scmp.eq.s32.totalorder %s21, 1
      %p222 = scmp.ne.s32.totalorder %s217, %s219
      %p223 = scmp.eq.s32.totalorder %s21, 0
      %p224 = por %p222, %p223
      %p225 = scmp.ne.s32.totalorder %s217, %s219
      %p226 = scmp.eq.s32.totalorder %s26, 1
      %p227 = por %p225, %p226
      %p228 = scmp.ne.s32.totalorder %s219, %s220
      %p229 = scmp.eq.s32.totalorder %s26, 0
      %p230 = por %p228, %p229
      %p231 = scmp.ne.s32.totalorder %s219, %s220
      %p232 = scmp.eq.s32.totalorder %s27, 1
      %p233 = por %p231, %p232
      %p235 = scmp.ne.s32.totalorder %s220, %s234
      %p236 = scmp.eq.s32.totalorder %s27, 0
      %p237 = por %p235, %p236
      %s239 = sadd.s32 %s238, 1
      %p242 = scmp.eq.s32.totalorder %s21, 1
      %p243 = scmp.ne.s32.totalorder %s238, %s240
      %p244 = scmp.eq.s32.totalorder %s21, 0
      %p245 = por %p243, %p244
      %p246 = scmp.ne.s32.totalorder %s238, %s240
      %p247 = scmp.eq.s32.totalorder %s26, 1
      %p248 = por %p246, %p247
      %p249 = scmp.ne.s32.totalorder %s240, %s241
      %p250 = scmp.eq.s32.totalorder %s26, 0
      %p251 = por %p249, %p250
      %p252 = scmp.ne.s32.totalorder %s240, %s241
      %p253 = scmp.eq.s32.totalorder %s27, 1
      %p254 = por %p252, %p253
      %p256 = scmp.ne.s32.totalorder %s241, %s255
      %p257 = scmp.eq.s32.totalorder %s27, 0
      %p258 = por %p256, %p257
      %s260 = sadd.s32 %s259, 1
      %p263 = scmp.eq.s32.totalorder %s21, 1
      %p264 = scmp.ne.s32.totalorder %s259, %s261
      %p265 = scmp.eq.s32.totalorder %s21, 0
      %p266 = por %p264, %p265
      %p267 = scmp.ne.s32.totalorder %s259, %s261
      %p268 = scmp.eq.s32.totalorder %s26, 1
      %p269 = por %p267, %p268
      %p270 = scmp.ne.s32.totalorder %s261, %s262
      %p271 = scmp.eq.s32.totalorder %s26, 0
      %p272 = por %p270, %p271
      %p273 = scmp.ne.s32.totalorder %s261, %s262
      %p274 = scmp.eq.s32.totalorder %s27, 1
      %p275 = por %p273, %p274
      %p277 = scmp.ne.s32.totalorder %s262, %s276
      %p278 = scmp.eq.s32.totalorder %s27, 0
      %p279 = por %p277, %p278
      %s281 = sadd.s32 %s280, 1
      %p284 = scmp.eq.s32.totalorder %s21, 1
      %p285 = scmp.ne.s32.totalorder %s280, %s282
      %p286 = scmp.eq.s32.totalorder %s21, 0
      %p287 = por %p285, %p286
      %p288 = scmp.ne.s32.totalorder %s280, %s282
      %p289 = scmp.eq.s32.totalorder %s26, 1
      %p290 = por %p288, %p289
      %p291 = scmp.ne.s32.totalorder %s282, %s283
      %p292 = scmp.eq.s32.totalorder %s26, 0
      %p293 = por %p291, %p292
      %p294 = scmp.ne.s32.totalorder %s282, %s283
      %p295 = scmp.eq.s32.totalorder %s27, 1
      %p296 = por %p294, %p295
      %p298 = scmp.ne.s32.totalorder %s283, %s297
      %p299 = scmp.eq.s32.totalorder %s27, 0
      %p300 = por %p298, %p299
      %s301 = ssub.s32 %s21, %s28
      %p302 = scmp.eq.s32.totalorder %s301, 0
      %s304 = sadd.s32 %s303, 1
      %s305 = scalar_select %p302, %s303, %s304
      %p308 = pneg %p302
      %p309 = scmp.eq.s32.totalorder %s21, 1
      %p310 = por %p308, %p309
      %p311 = scmp.ne.s32.totalorder %s303, %s306
      %p312 = scmp.eq.s32.totalorder %s21, 0
      %p313 = por %p311, %p312
      %p314 = scmp.ne.s32.totalorder %s303, %s306
      %p315 = scmp.eq.s32.totalorder %s26, 1
      %p316 = por %p314, %p315
      %p317 = scmp.ne.s32.totalorder %s306, %s307
      %p318 = scmp.eq.s32.totalorder %s26, 0
      %p319 = por %p317, %p318
      %p320 = scmp.ne.s32.totalorder %s306, %s307
      %p321 = scmp.eq.s32.totalorder %s27, 1
      %p322 = por %p320, %p321
      %p324 = scmp.ne.s32.totalorder %s307, %s323
      %p325 = scmp.eq.s32.totalorder %s27, 0
      %p326 = por %p324, %p325
      %p327 = scmp.le.s32.totalorder 1, %s21
      %p328 = scmp.lt.s32.totalorder %s21, 3
      %p329 = pnand %p327, %p328
      %p330 = pneg %p329
      // Predicated region
      $region9: #{tpu_custom_call.1} parent=5 // pred_check
        _
      $region10: #{tpu_custom_call.1} parent=5 // pred_check_branch
        %332 = sbr.rel (%p329) target = $region12
      $region11: #{tpu_custom_call.1} parent=5 // pred_region
        %s333 = ssub.s32 %s21, 1
        // Predicated region
        $region13: #{tpu_custom_call.1} parent=11 // pred_check
          %p334 = pneg %p146
        $region14: #{tpu_custom_call.1} parent=11 // pred_check_branch
          %336 = sbr.rel (%p334) target = $region16
        $region15: #{tpu_custom_call.1} parent=11 // pred_region
          _
        $region16: #{tpu_custom_call.1} parent=11 // pred_fallthru
          _
        // Predicated region
        $region17: #{tpu_custom_call.1} parent=11 // pred_check
          %p337 = pneg %p167
        $region18: #{tpu_custom_call.1} parent=11 // pred_check_branch
          %339 = sbr.rel (%p337) target = $region20
        $region19: #{tpu_custom_call.1} parent=11 // pred_region
          _
        $region20: #{tpu_custom_call.1} parent=11 // pred_fallthru
          _
        // Predicated region
        $region21: #{tpu_custom_call.1} parent=11 // pred_check
          %p340 = pneg %p188
        $region22: #{tpu_custom_call.1} parent=11 // pred_check_branch
          %342 = sbr.rel (%p340) target = $region24
        $region23: #{tpu_custom_call.1} parent=11 // pred_region
          _
        $region24: #{tpu_custom_call.1} parent=11 // pred_fallthru
          _
        // Predicated region
        $region25: #{tpu_custom_call.1} parent=11 // pred_check
          %p343 = pneg %p209
        $region26: #{tpu_custom_call.1} parent=11 // pred_check_branch
          %345 = sbr.rel (%p343) target = $region28
        $region27: #{tpu_custom_call.1} parent=11 // pred_region
          _
        $region28: #{tpu_custom_call.1} parent=11 // pred_fallthru
          _
        // Predicated region
        $region29: #{tpu_custom_call.1} parent=11 // pred_check
          %p346 = pneg %p230
        $region30: #{tpu_custom_call.1} parent=11 // pred_check_branch
          %348 = sbr.rel (%p346) target = $region32
        $region31: #{tpu_custom_call.1} parent=11 // pred_region
          _
        $region32: #{tpu_custom_call.1} parent=11 // pred_fallthru
          _
        // Predicated region
        $region33: #{tpu_custom_call.1} parent=11 // pred_check
          %p349 = pneg %p251
        $region34: #{tpu_custom_call.1} parent=11 // pred_check_branch
          %351 = sbr.rel (%p349) target = $region36
        $region35: #{tpu_custom_call.1} parent=11 // pred_region
          _
        $region36: #{tpu_custom_call.1} parent=11 // pred_fallthru
          _
        // Predicated region
        $region37: #{tpu_custom_call.1} parent=11 // pred_check
          %p352 = pneg %p272
        $region38: #{tpu_custom_call.1} parent=11 // pred_check_branch
          %354 = sbr.rel (%p352) target = $region40
        $region39: #{tpu_custom_call.1} parent=11 // pred_region
          _
        $region40: #{tpu_custom_call.1} parent=11 // pred_fallthru
          _
        // Predicated region
        $region41: #{tpu_custom_call.1} parent=11 // pred_check
          %p355 = pneg %p293
        $region42: #{tpu_custom_call.1} parent=11 // pred_check_branch
          %357 = sbr.rel (%p355) target = $region44
        $region43: #{tpu_custom_call.1} parent=11 // pred_region
          _
        $region44: #{tpu_custom_call.1} parent=11 // pred_fallthru
          _
      $region12: #{tpu_custom_call.1} parent=5 // pred_fallthru
        _
      %p358 = scmp.lt.s32.totalorder %s21, 2
      // Predicated region
      $region45: #{tpu_custom_call.1} parent=5 // pred_check
        %p359 = pneg %p358
      $region46: #{tpu_custom_call.1} parent=5 // pred_check_branch
        %361 = sbr.rel (%p359) target = $region48
      $region47: #{tpu_custom_call.1} parent=5 // pred_region
        // Predicated region
        $region49: #{tpu_custom_call.1} parent=47 // pred_check
          %p362 = pneg %p41
        $region50: #{tpu_custom_call.1} parent=47 // pred_check_branch
          %364 = sbr.rel (%p362) target = $region52
        $region51: #{tpu_custom_call.1} parent=47 // pred_region
          %p365 = scmp.lt.s32.totalorder %s21, 1
          %s366 = scalar_select %p365, %s21, 1
          %s367 = smul.addr %s366, 8
          %s368 = scalar_lea.vmem %s0, %s367
        $region52: #{tpu_custom_call.1} parent=47 // pred_fallthru
          _
        // Predicated region
        $region53: #{tpu_custom_call.1} parent=47 // pred_check
          %p369 = pneg %p67
        $region54: #{tpu_custom_call.1} parent=47 // pred_check_branch
          %371 = sbr.rel (%p369) target = $region56
        $region55: #{tpu_custom_call.1} parent=47 // pred_region
          %s372 = smul.u32 2, %s21
          %p373 = scmp.lt.s32.totalorder %s372, 3
          %s374 = scalar_select %p373, %s372, 3
          %s375 = smul.addr %s374, 8
          %s376 = scalar_lea.vmem %s1, %s375
          %s377 = smul.u32 2, %s21
        $region56: #{tpu_custom_call.1} parent=47 // pred_fallthru
          _
        // Predicated region
        $region57: #{tpu_custom_call.1} parent=47 // pred_check
          %p378 = pneg %p93
        $region58: #{tpu_custom_call.1} parent=47 // pred_check_branch
          %380 = sbr.rel (%p378) target = $region60
        $region59: #{tpu_custom_call.1} parent=47 // pred_region
          %p381 = scmp.lt.s32.totalorder %s21, 1
          %s382 = scalar_select %p381, %s21, 1
          %s383 = smul.addr %s382, 4
          %s384 = scalar_lea.vmem %s2, %s383
        $region60: #{tpu_custom_call.1} parent=47 // pred_fallthru
          _
        // Predicated region
        $region61: #{tpu_custom_call.1} parent=47 // pred_check
          %p385 = pneg %p119
        $region62: #{tpu_custom_call.1} parent=47 // pred_check_branch
          %387 = sbr.rel (%p385) target = $region64
        $region63: #{tpu_custom_call.1} parent=47 // pred_region
          %p388 = scmp.lt.s32.totalorder %s21, 1
          %s389 = scalar_select %p388, %s21, 1
          %s390 = smul.addr %s389, 4
          %s391 = scalar_lea.vmem %s3, %s390
        $region64: #{tpu_custom_call.1} parent=47 // pred_fallthru
          _
      $region48: #{tpu_custom_call.1} parent=5 // pred_fallthru
        _
      %p392 = scmp.le.s32.totalorder 1, %s21
      %p393 = scmp.lt.s32.totalorder %s21, 3
      %p394 = pnand %p392, %p393
      %p395 = pneg %p394
      // Predicated region
      $region65: #{tpu_custom_call.1} parent=5 // pred_check
        _
      $region66: #{tpu_custom_call.1} parent=5 // pred_check_branch
        %397 = sbr.rel (%p394) target = $region68
      $region67: #{tpu_custom_call.1} parent=5 // pred_region
        %s398 = ssub.s32 %s21, 1
        %p399 = scmp.lt.s32.totalorder %s26, 1
        %s400 = scalar_select %p399, %s26, 1
        %s401 = smul.addr %s400, 8
        %s402 = scalar_lea.vmem %s0, %s401
        %p403 = pneg %p47
        %p404 = pneg %p44
        %s405 = smul.u32 2, %s26
        %p406 = scmp.lt.s32.totalorder %s405, 3
        %s407 = scalar_select %p406, %s405, 3
        %s408 = smul.addr %s407, 8
        %s409 = scalar_lea.vmem %s1, %s408
        %p410 = pneg %p73
        %p411 = pneg %p70
        %p412 = scmp.lt.s32.totalorder %s26, 1
        %s413 = scalar_select %p412, %s26, 1
        %s414 = smul.addr %s413, 4
        %s415 = scalar_lea.vmem %s2, %s414
        %p416 = pneg %p99
        %p417 = pneg %p96
        %p418 = scmp.lt.s32.totalorder %s26, 1
        %s419 = scalar_select %p418, %s26, 1
        %s420 = smul.addr %s419, 4
        %s421 = scalar_lea.vmem %s3, %s420
        %p422 = pneg %p125
        %p423 = pneg %p122
        %p424 = pneg %p146
        %p425 = pneg %p143
        %p426 = pneg %p167
        %p427 = pneg %p164
        %p428 = pneg %p188
        %p429 = pneg %p185
        %p430 = pneg %p209
        %p431 = pneg %p206
        %p432 = pneg %p230
        %p433 = pneg %p227
        %p434 = pneg %p251
        %p435 = pneg %p248
        %p436 = pneg %p272
        %p437 = pneg %p269
        %p438 = pneg %p293
        %p439 = pneg %p290
        %p440 = pneg %p319
        %p441 = pneg %p316
        %s442 = sand.u32 %s306, 1
        %s443 = scalar_lea.sflag [#allocation3], %s442
        %s444 = sand.u32 %s306, 1
        %s445 = smul.addr %s444, 8
        %s446 = scalar_lea.vmem [#allocation2], %s445
        %p447 = scmp.lt.s32.totalorder %s26, 1
        %s448 = scalar_select %p447, %s26, 1
        %s449 = smul.addr %s448, 8
        %s450 = scalar_lea.vmem %s0, %s449
        %s451 = smul.u32 2, %s26
        %p452 = scmp.lt.s32.totalorder %s451, 3
        %s453 = scalar_select %p452, %s451, 3
        %s454 = smul.addr %s453, 8
        %s455 = scalar_lea.vmem %s1, %s454
        %s456 = smul.u32 2, %s26
        %p457 = scmp.lt.s32.totalorder %s26, 1
        %s458 = scalar_select %p457, %s26, 1
        %s459 = smul.addr %s458, 4
        %s460 = scalar_lea.vmem %s2, %s459
        %p461 = scmp.lt.s32.totalorder %s26, 1
        %s462 = scalar_select %p461, %s26, 1
        %s463 = smul.addr %s462, 4
        %s464 = scalar_lea.vmem %s3, %s463
        %v466 = vld [vmem:[%s11] sm:$0xff]
        %v467 = vld [vmem:[%s11 + $0x8] sm:$0xff]
        %v468 = vld [vmem:[%s450] sm:$0xff]
        %v469 = vpack.c.bf16 %v468, %v468
        %v470 = vld [vmem:[%s455] sm:$0xff]
        %v471 = vld [vmem:[%s455 + $0x8] sm:$0xff]
        %v472 = vpack.c.bf16 %v471, %v470
        %v473 = vld [vmem:[%s460] sm:$0xf]
        %v474 = vunpack.c.l.bf16 %v473
        %v475 = vld [vmem:[%s464] sm:$0xf]
        %v476 = vunpack.c.l.bf16 %v475
        %v477 = vld [vmem:[%s4] sm:$0xf]
        %v478 = vld [vmem:[%s4 + $0x4] sm:$0xf]
        %v479 = vld [vmem:[%s4 + $0x8] sm:$0xf]
        %v480 = vld [vmem:[%s4 + $0xc] sm:$0xf]
        %s481 = scalar_lea.vmem %s4, 64
        %v482 = vld [vmem:[%s481] sm:$0xf]
        %v483 = vld [vmem:[%s481 + $0x4] sm:$0xf]
        %v484 = vld [vmem:[%s481 + $0x8] sm:$0xf]
        %v485 = vld [vmem:[%s481 + $0xc] sm:$0xf]
        %s486 = scalar_lea.vmem %s4, 128
        %v487 = vld [vmem:[%s486] sm:$0xf]
        %v488 = vld [vmem:[%s486 + $0x4] sm:$0xf]
        %v489 = vld [vmem:[%s486 + $0x8] sm:$0xf]
        %v490 = vld [vmem:[%s486 + $0xc] sm:$0xf]
        %v491 = vld [vmem:[%s5] sm:$0xf]
        %v492 = vperm.slane %v466, 0
        %v497 = vunpack.c.l.b16 %v477
        %v498 = vunpack.c.l.b16 %v478
        %v499 = vunpack.c.l.b16 %v479
        %v500 = vunpack.c.l.b16 %v480
        %v501 = vpack.c.b16 %v498, %v497
        %v502 = vpack.c.b16 %v500, %v499
        %vm505 = vcmask 261120
        %v507 = vsel %vm505, %v469, 0
        %509 = vmatpush.bf16.msra.mxu0 0
        %510 = vmatpush.bf16.msra.mxu0 0
        %511 = vmatpush.bf16.msra.mxu0 0
        %512 = vmatpush.bf16.msra.mxu0 0
        %513 = vmatpush.bf16.msra.mxu0 0
        %514 = vmatpush.bf16.msra.mxu0 0
        %515 = vmatpush.bf16.msra.mxu0 %v502
        %516 = vmatpush.bf16.msra.mxu0 %v501
        %517 = vmatmul.bf16.gmra.mxu0 %v507
        %v518 = vpop.f32.mrf.mxu0
        %v519 = vadd.f32 %v492, %v518
        %v520 = vpop.f32.mrf.mxu0
        %521 = vdwg.mxu0
        %v522 = vpack.c.bf16 %v519, %v519
        %v523 = vperm.slane %v466, 1
        %v528 = vunpack.c.l.b16 %v482
        %v529 = vunpack.c.l.b16 %v483
        %v530 = vunpack.c.l.b16 %v484
        %v531 = vunpack.c.l.b16 %v485
        %v532 = vpack.c.b16 %v529, %v528
        %v533 = vpack.c.b16 %v531, %v530
        %536 = vmatpush.bf16.msra.mxu0 0
        %537 = vmatpush.bf16.msra.mxu0 0
        %538 = vmatpush.bf16.msra.mxu0 0
        %539 = vmatpush.bf16.msra.mxu0 0
        %540 = vmatpush.bf16.msra.mxu0 0
        %541 = vmatpush.bf16.msra.mxu0 0
        %542 = vmatpush.bf16.msra.mxu0 %v533
        %543 = vmatpush.bf16.msra.mxu0 %v532
        %544 = vmatmul.bf16.gmra.mxu0 %v507
        %v545 = vpop.f32.mrf.mxu0
        %v546 = vadd.f32 %v523, %v545
        %v547 = vpop.f32.mrf.mxu0
        %548 = vdwg.mxu0
        %v549 = vpack.c.bf16 %v546, %v546
        %v550 = vperm.slane %v466, 2
        %v555 = vunpack.c.l.b16 %v487
        %v556 = vunpack.c.l.b16 %v488
        %v557 = vunpack.c.l.b16 %v489
        %v558 = vunpack.c.l.b16 %v490
        %v559 = vpack.c.b16 %v556, %v555
        %v560 = vpack.c.b16 %v558, %v557
        %563 = vmatpush.bf16.msra.mxu0 0
        %564 = vmatpush.bf16.msra.mxu0 0
        %565 = vmatpush.bf16.msra.mxu0 0
        %566 = vmatpush.bf16.msra.mxu0 0
        %567 = vmatpush.bf16.msra.mxu0 0
        %568 = vmatpush.bf16.msra.mxu0 0
        %569 = vmatpush.bf16.msra.mxu0 %v560
        %570 = vmatpush.bf16.msra.mxu0 %v559
        %571 = vmatmul.bf16.gmra.mxu0 %v507
        %v572 = vpop.f32.mrf.mxu0
        %v573 = vadd.f32 %v550, %v572
        %v574 = vpop.f32.mrf.mxu0
        %575 = vdwg.mxu0
        %v576 = vpack.c.bf16 %v573, %v573
        %vm577 = vcmask 64512
        %v579 = vsel %vm577, %v522, 0
        %v582 = vsel %vm577, %v549, 0
        %584 = vmatpush.bf16.xpose.msra.mxu0 0
        %585 = vmatpush.bf16.xpose.msra.mxu0 0
        %586 = vmatpush.bf16.xpose.msra.mxu0 0
        %587 = vmatpush.bf16.xpose.msra.mxu0 0
        %588 = vmatpush.bf16.xpose.msra.mxu0 0
        %589 = vmatpush.bf16.xpose.msra.mxu0 0
        %590 = vmatpush.bf16.xpose.msra.mxu0 0
        %591 = vmatpush.bf16.xpose.msra.mxu0 %v582
        %592 = vmatmul.bf16.gmra.mxu0 %v579
        %v593 = vpop.f32.mrf.mxu0
        %v594 = vadd.f32 %v474, %v593
        %v595 = vpop.f32.mrf.mxu0
        %596 = vdwg.mxu0
        %v597 = vsel %vm577, %v594, -inf
        %598 = vmax.xlane.f32.xlu0 %v597
        %v599 = vpop.xlane.xlu0 %598
        %v600 = vsub.f32 %v594, %v599
        %v601 = vmul.f32 %v600, 1.442695
        %v602 = vpow.pop %v601
        %v603 = vsel %vm577, %v602, 0.0
        %604 = vadd.xlane.f32.xlu0 %v603
        %v605 = vpop.xlane.xlu0 %604
        %v606 = vrcp.pop %v605
        %v607 = vmul.f32 %v602, %v606
        %v608 = vpack.c.bf16 %v607, %v607
        %v610 = vsel %vm577, %v608, 0
        %vm612 = vcmask 1043456
        %v614 = vsel %vm612, %v576, 0
        %616 = vmatpush.bf16.msra.mxu0 0
        %617 = vmatpush.bf16.msra.mxu0 0
        %618 = vmatpush.bf16.msra.mxu0 0
        %619 = vmatpush.bf16.msra.mxu0 0
        %620 = vmatpush.bf16.msra.mxu0 0
        %621 = vmatpush.bf16.msra.mxu0 0
        %622 = vmatpush.bf16.msra.mxu0 0
        %623 = vmatpush.bf16.msra.mxu0 %v614
        %624 = vmatmul.bf16.gmra.mxu0 %v610
        %v625 = vpop.f32.mrf.mxu0
        %v626 = vadd.f32 0.0, %v625
        %v627 = vpop.f32.mrf.mxu0
        %628 = vdwg.mxu0
        %v629 = vpack.c.bf16 %v626, %v626
        %s630 = scalar_lea.vmem %s4, 16
        %v631 = vld [vmem:[%s630] sm:$0xf]
        %v632 = vld [vmem:[%s630 + $0x4] sm:$0xf]
        %v633 = vld [vmem:[%s630 + $0x8] sm:$0xf]
        %v634 = vld [vmem:[%s630 + $0xc] sm:$0xf]
        %s635 = scalar_lea.vmem %s4, 80
        %v636 = vld [vmem:[%s635] sm:$0xf]
        %v637 = vld [vmem:[%s635 + $0x4] sm:$0xf]
        %v638 = vld [vmem:[%s635 + $0x8] sm:$0xf]
        %v639 = vld [vmem:[%s635 + $0xc] sm:$0xf]
        %s640 = scalar_lea.vmem %s4, 144
        %v641 = vld [vmem:[%s640] sm:$0xf]
        %v642 = vld [vmem:[%s640 + $0x4] sm:$0xf]
        %v643 = vld [vmem:[%s640 + $0x8] sm:$0xf]
        %v644 = vld [vmem:[%s640 + $0xc] sm:$0xf]
        %s645 = scalar_lea.vmem %s5, 4
        %v646 = vld [vmem:[%s645] sm:$0xf]
        %v651 = vunpack.c.l.b16 %v631
        %v652 = vunpack.c.l.b16 %v632
        %v653 = vunpack.c.l.b16 %v633
        %v654 = vunpack.c.l.b16 %v634
        %v655 = vpack.c.b16 %v652, %v651
        %v656 = vpack.c.b16 %v654, %v653
        %660 = vrot.lane.b32.xlu0 %v492, 120
        %v661 = vpop.permute.xlu0 %660
        %663 = vmatpush.bf16.msra.mxu0 0
        %664 = vmatpush.bf16.msra.mxu0 0
        %665 = vmatpush.bf16.msra.mxu0 0
        %666 = vmatpush.bf16.msra.mxu0 0
        %667 = vmatpush.bf16.msra.mxu0 0
        %668 = vmatpush.bf16.msra.mxu0 0
        %669 = vmatpush.bf16.msra.mxu0 %v656
        %670 = vmatpush.bf16.msra.mxu0 %v655
        %671 = vmatmul.bf16.gmra.mxu0 %v507
        %v672 = vpop.f32.mrf.mxu0
        %v673 = vadd.f32 %v661, %v672
        %v674 = vpop.f32.mrf.mxu0
        %675 = vdwg.mxu0
        %v676 = vpack.c.bf16 %v673, %v673
        %v681 = vunpack.c.l.b16 %v636
        %v682 = vunpack.c.l.b16 %v637
        %v683 = vunpack.c.l.b16 %v638
        %v684 = vunpack.c.l.b16 %v639
        %v685 = vpack.c.b16 %v682, %v681
        %v686 = vpack.c.b16 %v684, %v683
        %690 = vrot.lane.b32.xlu0 %v523, 120
        %v691 = vpop.permute.xlu0 %690
        %693 = vmatpush.bf16.msra.mxu0 0
        %694 = vmatpush.bf16.msra.mxu0 0
        %695 = vmatpush.bf16.msra.mxu0 0
        %696 = vmatpush.bf16.msra.mxu0 0
        %697 = vmatpush.bf16.msra.mxu0 0
        %698 = vmatpush.bf16.msra.mxu0 0
        %699 = vmatpush.bf16.msra.mxu0 %v686
        %700 = vmatpush.bf16.msra.mxu0 %v685
        %701 = vmatmul.bf16.gmra.mxu0 %v507
        %v702 = vpop.f32.mrf.mxu0
        %v703 = vadd.f32 %v691, %v702
        %v704 = vpop.f32.mrf.mxu0
        %705 = vdwg.mxu0
        %v706 = vpack.c.bf16 %v703, %v703
        %v711 = vunpack.c.l.b16 %v641
        %v712 = vunpack.c.l.b16 %v642
        %v713 = vunpack.c.l.b16 %v643
        %v714 = vunpack.c.l.b16 %v644
        %v715 = vpack.c.b16 %v712, %v711
        %v716 = vpack.c.b16 %v714, %v713
        %720 = vrot.lane.b32.xlu0 %v550, 120
        %v721 = vpop.permute.xlu0 %720
        %723 = vmatpush.bf16.msra.mxu0 0
        %724 = vmatpush.bf16.msra.mxu0 0
        %725 = vmatpush.bf16.msra.mxu0 0
        %726 = vmatpush.bf16.msra.mxu0 0
        %727 = vmatpush.bf16.msra.mxu0 0
        %728 = vmatpush.bf16.msra.mxu0 0
        %729 = vmatpush.bf16.msra.mxu0 %v716
        %730 = vmatpush.bf16.msra.mxu0 %v715
        %731 = vmatmul.bf16.gmra.mxu0 %v507
        %v732 = vpop.f32.mrf.mxu0
        %v733 = vadd.f32 %v721, %v732
        %v734 = vpop.f32.mrf.mxu0
        %735 = vdwg.mxu0
        %v736 = vpack.c.bf16 %v733, %v733
        %v738 = vsel %vm577, %v676, 0
        %v741 = vsel %vm577, %v706, 0
        %743 = vmatpush.bf16.xpose.msra.mxu0 0
        %744 = vmatpush.bf16.xpose.msra.mxu0 0
        %745 = vmatpush.bf16.xpose.msra.mxu0 0
        %746 = vmatpush.bf16.xpose.msra.mxu0 0
        %747 = vmatpush.bf16.xpose.msra.mxu0 0
        %748 = vmatpush.bf16.xpose.msra.mxu0 0
        %749 = vmatpush.bf16.xpose.msra.mxu0 0
        %750 = vmatpush.bf16.xpose.msra.mxu0 %v741
        %751 = vmatmul.bf16.gmra.mxu0 %v738
        %v752 = vpop.f32.mrf.mxu0
        %v753 = vadd.f32 %v474, %v752
        %v754 = vpop.f32.mrf.mxu0
        %755 = vdwg.mxu0
        %v756 = vsel %vm577, %v753, -inf
        %757 = vmax.xlane.f32.xlu0 %v756
        %v758 = vpop.xlane.xlu0 %757
        %v759 = vsub.f32 %v753, %v758
        %v760 = vmul.f32 %v759, 1.442695
        %v761 = vpow.pop %v760
        %v762 = vsel %vm577, %v761, 0.0
        %763 = vadd.xlane.f32.xlu0 %v762
        %v764 = vpop.xlane.xlu0 %763
        %v765 = vrcp.pop %v764
        %v766 = vmul.f32 %v761, %v765
        %v767 = vpack.c.bf16 %v766, %v766
        %v769 = vsel %vm577, %v767, 0
        %v772 = vsel %vm612, %v736, 0
        %774 = vmatpush.bf16.msra.mxu0 0
        %775 = vmatpush.bf16.msra.mxu0 0
        %776 = vmatpush.bf16.msra.mxu0 0
        %777 = vmatpush.bf16.msra.mxu0 0
        %778 = vmatpush.bf16.msra.mxu0 0
        %779 = vmatpush.bf16.msra.mxu0 0
        %780 = vmatpush.bf16.msra.mxu0 0
        %781 = vmatpush.bf16.msra.mxu0 %v772
        %782 = vmatmul.bf16.gmra.mxu0 %v769
        %v783 = vpop.f32.mrf.mxu0
        %v784 = vadd.f32 0.0, %v783
        %v785 = vpop.f32.mrf.mxu0
        %786 = vdwg.mxu0
        %v787 = vpack.c.bf16 %v784, %v784
        %v789 = vsel %vm577, %v787, 0
        %v792 = vsel %vm612, %v646, 0
        %794 = vmatpush.bf16.msra.mxu0 0
        %795 = vmatpush.bf16.msra.mxu0 0
        %796 = vmatpush.bf16.msra.mxu0 0
        %797 = vmatpush.bf16.msra.mxu0 0
        %798 = vmatpush.bf16.msra.mxu0 0
        %799 = vmatpush.bf16.msra.mxu0 0
        %800 = vmatpush.bf16.msra.mxu0 0
        %801 = vmatpush.bf16.msra.mxu0 %v792
        %802 = vmatmul.bf16.gmra.mxu0 %v789
        %v803 = vpop.f32.mrf.mxu0
        %v804 = vadd.f32 0.0, %v803
        %v805 = vpop.f32.mrf.mxu0
        %806 = vdwg.mxu0
        %v808 = vsel %vm577, %v629, 0
        %v811 = vsel %vm612, %v491, 0
        %813 = vmatpush.bf16.msra.mxu0 0
        %814 = vmatpush.bf16.msra.mxu0 0
        %815 = vmatpush.bf16.msra.mxu0 0
        %816 = vmatpush.bf16.msra.mxu0 0
        %817 = vmatpush.bf16.msra.mxu0 0
        %818 = vmatpush.bf16.msra.mxu0 0
        %819 = vmatpush.bf16.msra.mxu0 0
        %820 = vmatpush.bf16.msra.mxu0 %v811
        %821 = vmatmul.bf16.gmra.mxu0 %v808
        %v822 = vpop.f32.mrf.mxu0
        %v823 = vadd.f32 %v804, %v822
        %v824 = vpop.f32.mrf.mxu0
        %825 = vdwg.mxu0
        %s826 = scalar_lea.vmem %s4, 32
        %v827 = vld [vmem:[%s826] sm:$0xf]
        %v828 = vld [vmem:[%s826 + $0x4] sm:$0xf]
        %v829 = vld [vmem:[%s826 + $0x8] sm:$0xf]
        %v830 = vld [vmem:[%s826 + $0xc] sm:$0xf]
        %s831 = scalar_lea.vmem %s4, 96
        %v832 = vld [vmem:[%s831] sm:$0xf]
        %v833 = vld [vmem:[%s831 + $0x4] sm:$0xf]
        %v834 = vld [vmem:[%s831 + $0x8] sm:$0xf]
        %v835 = vld [vmem:[%s831 + $0xc] sm:$0xf]
        %s836 = scalar_lea.vmem %s4, 160
        %v837 = vld [vmem:[%s836] sm:$0xf]
        %v838 = vld [vmem:[%s836 + $0x4] sm:$0xf]
        %v839 = vld [vmem:[%s836 + $0x8] sm:$0xf]
        %v840 = vld [vmem:[%s836 + $0xc] sm:$0xf]
        %s841 = scalar_lea.vmem %s5, 8
        %v842 = vld [vmem:[%s841] sm:$0xf]
        %v847 = vunpack.c.l.b16 %v827
        %v848 = vunpack.c.l.b16 %v828
        %v849 = vunpack.c.l.b16 %v829
        %v850 = vunpack.c.l.b16 %v830
        %v851 = vpack.c.b16 %v848, %v847
        %v852 = vpack.c.b16 %v850, %v849
        %855 = vrot.lane.b32.xlu0 %v492, 112
        %v856 = vpop.permute.xlu0 %855
        %858 = vmatpush.bf16.msra.mxu0 0
        %859 = vmatpush.bf16.msra.mxu0 0
        %860 = vmatpush.bf16.msra.mxu0 0
        %861 = vmatpush.bf16.msra.mxu0 0
        %862 = vmatpush.bf16.msra.mxu0 0
        %863 = vmatpush.bf16.msra.mxu0 0
        %864 = vmatpush.bf16.msra.mxu0 %v852
        %865 = vmatpush.bf16.msra.mxu0 %v851
        %866 = vmatmul.bf16.gmra.mxu0 %v507
        %v867 = vpop.f32.mrf.mxu0
        %v868 = vadd.f32 %v856, %v867
        %v869 = vpop.f32.mrf.mxu0
        %870 = vdwg.mxu0
        %v871 = vpack.c.bf16 %v868, %v868
        %v876 = vunpack.c.l.b16 %v832
        %v877 = vunpack.c.l.b16 %v833
        %v878 = vunpack.c.l.b16 %v834
        %v879 = vunpack.c.l.b16 %v835
        %v880 = vpack.c.b16 %v877, %v876
        %v881 = vpack.c.b16 %v879, %v878
        %884 = vrot.lane.b32.xlu0 %v523, 112
        %v885 = vpop.permute.xlu0 %884
        %887 = vmatpush.bf16.msra.mxu0 0
        %888 = vmatpush.bf16.msra.mxu0 0
        %889 = vmatpush.bf16.msra.mxu0 0
        %890 = vmatpush.bf16.msra.mxu0 0
        %891 = vmatpush.bf16.msra.mxu0 0
        %892 = vmatpush.bf16.msra.mxu0 0
        %893 = vmatpush.bf16.msra.mxu0 %v881
        %894 = vmatpush.bf16.msra.mxu0 %v880
        %895 = vmatmul.bf16.gmra.mxu0 %v507
        %v896 = vpop.f32.mrf.mxu0
        %v897 = vadd.f32 %v885, %v896
        %v898 = vpop.f32.mrf.mxu0
        %899 = vdwg.mxu0
        %v900 = vpack.c.bf16 %v897, %v897
        %v905 = vunpack.c.l.b16 %v837
        %v906 = vunpack.c.l.b16 %v838
        %v907 = vunpack.c.l.b16 %v839
        %v908 = vunpack.c.l.b16 %v840
        %v909 = vpack.c.b16 %v906, %v905
        %v910 = vpack.c.b16 %v908, %v907
        %913 = vrot.lane.b32.xlu0 %v550, 112
        %v914 = vpop.permute.xlu0 %913
        %916 = vmatpush.bf16.msra.mxu0 0
        %917 = vmatpush.bf16.msra.mxu0 0
        %918 = vmatpush.bf16.msra.mxu0 0
        %919 = vmatpush.bf16.msra.mxu0 0
        %920 = vmatpush.bf16.msra.mxu0 0
        %921 = vmatpush.bf16.msra.mxu0 0
        %922 = vmatpush.bf16.msra.mxu0 %v910
        %923 = vmatpush.bf16.msra.mxu0 %v909
        %924 = vmatmul.bf16.gmra.mxu0 %v507
        %v925 = vpop.f32.mrf.mxu0
        %v926 = vadd.f32 %v914, %v925
        %v927 = vpop.f32.mrf.mxu0
        %928 = vdwg.mxu0
        %v929 = vpack.c.bf16 %v926, %v926
        %v931 = vsel %vm577, %v871, 0
        %v934 = vsel %vm577, %v900, 0
        %936 = vmatpush.bf16.xpose.msra.mxu0 0
        %937 = vmatpush.bf16.xpose.msra.mxu0 0
        %938 = vmatpush.bf16.xpose.msra.mxu0 0
        %939 = vmatpush.bf16.xpose.msra.mxu0 0
        %940 = vmatpush.bf16.xpose.msra.mxu0 0
        %941 = vmatpush.bf16.xpose.msra.mxu0 0
        %942 = vmatpush.bf16.xpose.msra.mxu0 0
        %943 = vmatpush.bf16.xpose.msra.mxu0 %v934
        %944 = vmatmul.bf16.gmra.mxu0 %v931
        %v945 = vpop.f32.mrf.mxu0
        %v946 = vadd.f32 %v474, %v945
        %v947 = vpop.f32.mrf.mxu0
        %948 = vdwg.mxu0
        %v949 = vsel %vm577, %v946, -inf
        %950 = vmax.xlane.f32.xlu0 %v949
        %v951 = vpop.xlane.xlu0 %950
        %v952 = vsub.f32 %v946, %v951
        %v953 = vmul.f32 %v952, 1.442695
        %v954 = vpow.pop %v953
        %v955 = vsel %vm577, %v954, 0.0
        %956 = vadd.xlane.f32.xlu0 %v955
        %v957 = vpop.xlane.xlu0 %956
        %v958 = vrcp.pop %v957
        %v959 = vmul.f32 %v954, %v958
        %v960 = vpack.c.bf16 %v959, %v959
        %v962 = vsel %vm577, %v960, 0
        %v965 = vsel %vm612, %v929, 0
        %967 = vmatpush.bf16.msra.mxu0 0
        %968 = vmatpush.bf16.msra.mxu0 0
        %969 = vmatpush.bf16.msra.mxu0 0
        %970 = vmatpush.bf16.msra.mxu0 0
        %971 = vmatpush.bf16.msra.mxu0 0
        %972 = vmatpush.bf16.msra.mxu0 0
        %973 = vmatpush.bf16.msra.mxu0 0
        %974 = vmatpush.bf16.msra.mxu0 %v965
        %975 = vmatmul.bf16.gmra.mxu0 %v962
        %v976 = vpop.f32.mrf.mxu0
        %v977 = vadd.f32 0.0, %v976
        %v978 = vpop.f32.mrf.mxu0
        %979 = vdwg.mxu0
        %v980 = vpack.c.bf16 %v977, %v977
        %v982 = vsel %vm577, %v980, 0
        %v985 = vsel %vm612, %v842, 0
        %987 = vmatpush.bf16.msra.mxu0 0
        %988 = vmatpush.bf16.msra.mxu0 0
        %989 = vmatpush.bf16.msra.mxu0 0
        %990 = vmatpush.bf16.msra.mxu0 0
        %991 = vmatpush.bf16.msra.mxu0 0
        %992 = vmatpush.bf16.msra.mxu0 0
        %993 = vmatpush.bf16.msra.mxu0 0
        %994 = vmatpush.bf16.msra.mxu0 %v985
        %995 = vmatmul.bf16.gmra.mxu0 %v982
        %v996 = vpop.f32.mrf.mxu0
        %v997 = vadd.f32 0.0, %v996
        %v998 = vpop.f32.mrf.mxu0
        %999 = vdwg.mxu0
        %v1000 = vadd.f32 %v823, %v997
        %s1001 = scalar_lea.vmem %s4, 48
        %v1002 = vld [vmem:[%s1001] sm:$0xf]
        %v1003 = vld [vmem:[%s1001 + $0x4] sm:$0xf]
        %v1004 = vld [vmem:[%s1001 + $0x8] sm:$0xf]
        %v1005 = vld [vmem:[%s1001 + $0xc] sm:$0xf]
        %s1006 = scalar_lea.vmem %s4, 112
        %v1007 = vld [vmem:[%s1006] sm:$0xf]
        %v1008 = vld [vmem:[%s1006 + $0x4] sm:$0xf]
        %v1009 = vld [vmem:[%s1006 + $0x8] sm:$0xf]
        %v1010 = vld [vmem:[%s1006 + $0xc] sm:$0xf]
        %s1011 = scalar_lea.vmem %s4, 176
        %v1012 = vld [vmem:[%s1011] sm:$0xf]
        %v1013 = vld [vmem:[%s1011 + $0x4] sm:$0xf]
        %v1014 = vld [vmem:[%s1011 + $0x8] sm:$0xf]
        %v1015 = vld [vmem:[%s1011 + $0xc] sm:$0xf]
        %s1016 = scalar_lea.vmem %s5, 12
        %v1017 = vld [vmem:[%s1016] sm:$0xf]
        %v1022 = vunpack.c.l.b16 %v1002
        %v1023 = vunpack.c.l.b16 %v1003
        %v1024 = vunpack.c.l.b16 %v1004
        %v1025 = vunpack.c.l.b16 %v1005
        %v1026 = vpack.c.b16 %v1023, %v1022
        %v1027 = vpack.c.b16 %v1025, %v1024
        %1030 = vrot.lane.b32.xlu0 %v492, 104
        %v1031 = vpop.permute.xlu0 %1030
        %1033 = vmatpush.bf16.msra.mxu0 0
        %1034 = vmatpush.bf16.msra.mxu0 0
        %1035 = vmatpush.bf16.msra.mxu0 0
        %1036 = vmatpush.bf16.msra.mxu0 0
        %1037 = vmatpush.bf16.msra.mxu0 0
        %1038 = vmatpush.bf16.msra.mxu0 0
        %1039 = vmatpush.bf16.msra.mxu0 %v1027
        %1040 = vmatpush.bf16.msra.mxu0 %v1026
        %1041 = vmatmul.bf16.gmra.mxu0 %v507
        %v1042 = vpop.f32.mrf.mxu0
        %v1043 = vadd.f32 %v1031, %v1042
        %v1044 = vpop.f32.mrf.mxu0
        %1045 = vdwg.mxu0
        %v1046 = vpack.c.bf16 %v1043, %v1043
        %v1051 = vunpack.c.l.b16 %v1007
        %v1052 = vunpack.c.l.b16 %v1008
        %v1053 = vunpack.c.l.b16 %v1009
        %v1054 = vunpack.c.l.b16 %v1010
        %v1055 = vpack.c.b16 %v1052, %v1051
        %v1056 = vpack.c.b16 %v1054, %v1053
        %1059 = vrot.lane.b32.xlu0 %v523, 104
        %v1060 = vpop.permute.xlu0 %1059
        %1062 = vmatpush.bf16.msra.mxu0 0
        %1063 = vmatpush.bf16.msra.mxu0 0
        %1064 = vmatpush.bf16.msra.mxu0 0
        %1065 = vmatpush.bf16.msra.mxu0 0
        %1066 = vmatpush.bf16.msra.mxu0 0
        %1067 = vmatpush.bf16.msra.mxu0 0
        %1068 = vmatpush.bf16.msra.mxu0 %v1056
        %1069 = vmatpush.bf16.msra.mxu0 %v1055
        %1070 = vmatmul.bf16.gmra.mxu0 %v507
        %v1071 = vpop.f32.mrf.mxu0
        %v1072 = vadd.f32 %v1060, %v1071
        %v1073 = vpop.f32.mrf.mxu0
        %1074 = vdwg.mxu0
        %v1075 = vpack.c.bf16 %v1072, %v1072
        %v1080 = vunpack.c.l.b16 %v1012
        %v1081 = vunpack.c.l.b16 %v1013
        %v1082 = vunpack.c.l.b16 %v1014
        %v1083 = vunpack.c.l.b16 %v1015
        %v1084 = vpack.c.b16 %v1081, %v1080
        %v1085 = vpack.c.b16 %v1083, %v1082
        %1088 = vrot.lane.b32.xlu0 %v550, 104
        %v1089 = vpop.permute.xlu0 %1088
        %1091 = vmatpush.bf16.msra.mxu0 0
        %1092 = vmatpush.bf16.msra.mxu0 0
        %1093 = vmatpush.bf16.msra.mxu0 0
        %1094 = vmatpush.bf16.msra.mxu0 0
        %1095 = vmatpush.bf16.msra.mxu0 0
        %1096 = vmatpush.bf16.msra.mxu0 0
        %1097 = vmatpush.bf16.msra.mxu0 %v1085
        %1098 = vmatpush.bf16.msra.mxu0 %v1084
        %1099 = vmatmul.bf16.gmra.mxu0 %v507
        %v1100 = vpop.f32.mrf.mxu0
        %v1101 = vadd.f32 %v1089, %v1100
        %v1102 = vpop.f32.mrf.mxu0
        %1103 = vdwg.mxu0
        %v1104 = vpack.c.bf16 %v1101, %v1101
        %v1106 = vsel %vm577, %v1046, 0
        %v1109 = vsel %vm577, %v1075, 0
        %1111 = vmatpush.bf16.xpose.msra.mxu0 0
        %1112 = vmatpush.bf16.xpose.msra.mxu0 0
        %1113 = vmatpush.bf16.xpose.msra.mxu0 0
        %1114 = vmatpush.bf16.xpose.msra.mxu0 0
        %1115 = vmatpush.bf16.xpose.msra.mxu0 0
        %1116 = vmatpush.bf16.xpose.msra.mxu0 0
        %1117 = vmatpush.bf16.xpose.msra.mxu0 0
        %1118 = vmatpush.bf16.xpose.msra.mxu0 %v1109
        %1119 = vmatmul.bf16.gmra.mxu0 %v1106
        %v1120 = vpop.f32.mrf.mxu0
        %v1121 = vadd.f32 %v474, %v1120
        %v1122 = vpop.f32.mrf.mxu0
        %1123 = vdwg.mxu0
        %v1124 = vsel %vm577, %v1121, -inf
        %1125 = vmax.xlane.f32.xlu0 %v1124
        %v1126 = vpop.xlane.xlu0 %1125
        %v1127 = vsub.f32 %v1121, %v1126
        %v1128 = vmul.f32 %v1127, 1.442695
        %v1129 = vpow.pop %v1128
        %v1130 = vsel %vm577, %v1129, 0.0
        %1131 = vadd.xlane.f32.xlu0 %v1130
        %v1132 = vpop.xlane.xlu0 %1131
        %v1133 = vrcp.pop %v1132
        %v1134 = vmul.f32 %v1129, %v1133
        %v1135 = vpack.c.bf16 %v1134, %v1134
        %v1137 = vsel %vm577, %v1135, 0
        %v1140 = vsel %vm612, %v1104, 0
        %1142 = vmatpush.bf16.msra.mxu0 0
        %1143 = vmatpush.bf16.msra.mxu0 0
        %1144 = vmatpush.bf16.msra.mxu0 0
        %1145 = vmatpush.bf16.msra.mxu0 0
        %1146 = vmatpush.bf16.msra.mxu0 0
        %1147 = vmatpush.bf16.msra.mxu0 0
        %1148 = vmatpush.bf16.msra.mxu0 0
        %1149 = vmatpush.bf16.msra.mxu0 %v1140
        %1150 = vmatmul.bf16.gmra.mxu0 %v1137
        %v1151 = vpop.f32.mrf.mxu0
        %v1152 = vadd.f32 0.0, %v1151
        %v1153 = vpop.f32.mrf.mxu0
        %1154 = vdwg.mxu0
        %v1155 = vpack.c.bf16 %v1152, %v1152
        %v1157 = vsel %vm577, %v1155, 0
        %v1160 = vsel %vm612, %v1017, 0
        %1162 = vmatpush.bf16.msra.mxu0 0
        %1163 = vmatpush.bf16.msra.mxu0 0
        %1164 = vmatpush.bf16.msra.mxu0 0
        %1165 = vmatpush.bf16.msra.mxu0 0
        %1166 = vmatpush.bf16.msra.mxu0 0
        %1167 = vmatpush.bf16.msra.mxu0 0
        %1168 = vmatpush.bf16.msra.mxu0 0
        %1169 = vmatpush.bf16.msra.mxu0 %v1160
        %1170 = vmatmul.bf16.gmra.mxu0 %v1157
        %v1171 = vpop.f32.mrf.mxu0
        %v1172 = vadd.f32 0.0, %v1171
        %v1173 = vpop.f32.mrf.mxu0
        %1174 = vdwg.mxu0
        %v1175 = vadd.f32 %v1000, %v1172
        %v1176 = vperm.slane %v466, 3
        %v1177 = vadd.f32 %v1175, %v1176
        %v1178 = vadd.f32 %v468, %v1177
        %v1179 = vsel %vm505, %v1178, 0.0
        %1180 = vadd.xlane.f32.xlu0 %v1179
        %v1181 = vpop.xlane.xlu0 %1180
        %v1182 = vrcp.pop 32.0
        %v1183 = vmul.f32 32.0, %v1182
        %v1184 = vsub.f32 1.0, %v1183
        %v1185 = vmul.f32 %v1182, %v1184
        %v1186 = vadd.f32 %v1182, %v1185
        %vm1187 = vweird.f32 %v1182
        %v1188 = vsel %vm1187, %v1182, %v1186
        %v1189 = vmul.f32 %v1181, %v1188
        %v1190 = vsub.f32 %v1178, %v1189
        %v1191 = vmul.f32 %v1190, %v1190
        %v1192 = vsel %vm505, %v1191, 0.0
        %1193 = vadd.xlane.f32.xlu0 %v1192
        %v1194 = vpop.xlane.xlu0 %1193
        %v1195 = vmul.f32 %v1194, %v1188
        %v1196 = vadd.f32 %v1195, 1e-05
        %v1197 = vrsqrt.pop %v1196
        %v1198 = vmul.f32 %v1197, %v1196
        %v1199 = vmul.f32 %v1198, %v1197
        %v1200 = vmul.f32 0.5, %v1199
        %v1201 = vsub.f32 1.5, %v1200
        %v1202 = vmul.f32 %v1197, %v1201
        %vm1203 = vweird.f32 %v1196
        %vm1204 = vweird.f32 %v1197
        %vm1205 = vmor %vm1203, %vm1204
        %v1206 = vsel %vm1205, %v1197, %v1202
        %v1207 = vmul.f32 %v1190, %v1206
        %v1208 = vperm.slane %v467, 1
        %v1209 = vmul.f32 %v1207, %v1208
        %v1210 = vperm.slane %v467, 2
        %v1211 = vadd.f32 %v1209, %v1210
        %v1212 = vpack.c.bf16 %v1211, %v1211
        %v1213 = vld [vmem:[%s6] sm:$0xf]
        %v1214 = vld [vmem:[%s6 + $0x4] sm:$0xf]
        %v1215 = vld [vmem:[%s6 + $0x8] sm:$0xf]
        %v1216 = vld [vmem:[%s6 + $0xc] sm:$0xf]
        %s1217 = scalar_lea.vmem %s6, 64
        %v1218 = vld [vmem:[%s1217] sm:$0xf]
        %v1219 = vld [vmem:[%s1217 + $0x4] sm:$0xf]
        %v1220 = vld [vmem:[%s1217 + $0x8] sm:$0xf]
        %v1221 = vld [vmem:[%s1217 + $0xc] sm:$0xf]
        %s1222 = scalar_lea.vmem %s6, 128
        %v1223 = vld [vmem:[%s1222] sm:$0xf]
        %v1224 = vld [vmem:[%s1222 + $0x4] sm:$0xf]
        %v1225 = vld [vmem:[%s1222 + $0x8] sm:$0xf]
        %v1226 = vld [vmem:[%s1222 + $0xc] sm:$0xf]
        %v1227 = vld [vmem:[%s7] sm:$0xf]
        %v1228 = vperm.slane %v466, 4
        %v1233 = vunpack.c.l.b16 %v1213
        %v1234 = vunpack.c.l.b16 %v1214
        %v1235 = vunpack.c.l.b16 %v1215
        %v1236 = vunpack.c.l.b16 %v1216
        %v1237 = vpack.c.b16 %v1234, %v1233
        %v1238 = vpack.c.b16 %v1236, %v1235
        %v1242 = vsel %vm505, %v1212, 0
        %1244 = vmatpush.bf16.msra.mxu0 0
        %1245 = vmatpush.bf16.msra.mxu0 0
        %1246 = vmatpush.bf16.msra.mxu0 0
        %1247 = vmatpush.bf16.msra.mxu0 0
        %1248 = vmatpush.bf16.msra.mxu0 0
        %1249 = vmatpush.bf16.msra.mxu0 0
        %1250 = vmatpush.bf16.msra.mxu0 %v1238
        %1251 = vmatpush.bf16.msra.mxu0 %v1237
        %1252 = vmatmul.bf16.gmra.mxu0 %v1242
        %v1253 = vpop.f32.mrf.mxu0
        %v1254 = vadd.f32 %v1228, %v1253
        %v1255 = vpop.f32.mrf.mxu0
        %1256 = vdwg.mxu0
        %v1257 = vpack.c.bf16 %v1254, %v1254
        %v1258 = vperm.slane %v466, 5
        %v1263 = vunpack.c.l.b16 %v1218
        %v1264 = vunpack.c.l.b16 %v1219
        %v1265 = vunpack.c.l.b16 %v1220
        %v1266 = vunpack.c.l.b16 %v1221
        %v1267 = vpack.c.b16 %v1264, %v1263
        %v1268 = vpack.c.b16 %v1266, %v1265
        %v1272 = vsel %vm505, %v472, 0
        %1274 = vmatpush.bf16.msra.mxu0 0
        %1275 = vmatpush.bf16.msra.mxu0 0
        %1276 = vmatpush.bf16.msra.mxu0 0
        %1277 = vmatpush.bf16.msra.mxu0 0
        %1278 = vmatpush.bf16.msra.mxu0 0
        %1279 = vmatpush.bf16.msra.mxu0 0
        %1280 = vmatpush.bf16.msra.mxu0 %v1268
        %1281 = vmatpush.bf16.msra.mxu0 %v1267
        %1282 = vmatmul.bf16.gmra.mxu0 %v1272
        %v1283 = vpop.f32.mrf.mxu0
        %v1284 = vadd.f32 %v1258, %v1283
        %v1285 = vpop.f32.mrf.mxu0
        %v1286 = vadd.f32 %v1258, %v1285
        %1287 = vdwg.mxu0
        %v1288 = vpack.c.bf16 %v1284, %v1284
        %v1289 = vpack.c.bf16 %v1286, %v1286
        %v1290 = vperm.slane %v466, 6
        %v1295 = vunpack.c.l.b16 %v1223
        %v1296 = vunpack.c.l.b16 %v1224
        %v1297 = vunpack.c.l.b16 %v1225
        %v1298 = vunpack.c.l.b16 %v1226
        %v1299 = vpack.c.b16 %v1296, %v1295
        %v1300 = vpack.c.b16 %v1298, %v1297
        %1303 = vmatpush.bf16.msra.mxu0 0
        %1304 = vmatpush.bf16.msra.mxu0 0
        %1305 = vmatpush.bf16.msra.mxu0 0
        %1306 = vmatpush.bf16.msra.mxu0 0
        %1307 = vmatpush.bf16.msra.mxu0 0
        %1308 = vmatpush.bf16.msra.mxu0 0
        %1309 = vmatpush.bf16.msra.mxu0 %v1300
        %1310 = vmatpush.bf16.msra.mxu0 %v1299
        %1311 = vmatmul.bf16.gmra.mxu0 %v1272
        %v1312 = vpop.f32.mrf.mxu0
        %v1313 = vadd.f32 %v1290, %v1312
        %v1314 = vpop.f32.mrf.mxu0
        %v1315 = vadd.f32 %v1290, %v1314
        %1316 = vdwg.mxu0
        %v1317 = vpack.c.bf16 %v1313, %v1313
        %v1318 = vpack.c.bf16 %v1315, %v1315
        %v1321 = vunpack.c.l.b16 %v1288
        %v1322 = vunpack.c.l.b16 %v1289
        %v1323 = vpack.c.b16 %v1322, %v1321
        %v1325 = vsel %vm577, %v1257, 0
        %v1328 = vsel %vm577, %v1323, 0
        %1330 = vmatpush.bf16.xpose.msra.mxu0 0
        %1331 = vmatpush.bf16.xpose.msra.mxu0 0
        %1332 = vmatpush.bf16.xpose.msra.mxu0 0
        %1333 = vmatpush.bf16.xpose.msra.mxu0 0
        %1334 = vmatpush.bf16.xpose.msra.mxu0 0
        %1335 = vmatpush.bf16.xpose.msra.mxu0 0
        %1336 = vmatpush.bf16.xpose.msra.mxu0 0
        %1337 = vmatpush.bf16.xpose.msra.mxu0 %v1328
        %1338 = vmatmul.bf16.gmra.mxu0 %v1325
        %v1339 = vpop.f32.mrf.mxu0
        %v1340 = vadd.f32 %v476, %v1339
        %v1341 = vpop.f32.mrf.mxu0
        %1342 = vdwg.mxu0
        %vm1343 = vcmask 130048
        %v1344 = vsel %vm1343, %v1340, -inf
        %1345 = vmax.xlane.f32.xlu0 %v1344
        %v1346 = vpop.xlane.xlu0 %1345
        %v1347 = vsub.f32 %v1340, %v1346
        %v1348 = vmul.f32 %v1347, 1.442695
        %v1349 = vpow.pop %v1348
        %v1350 = vsel %vm1343, %v1349, 0.0
        %1351 = vadd.xlane.f32.xlu0 %v1350
        %v1352 = vpop.xlane.xlu0 %1351
        %v1353 = vrcp.pop %v1352
        %v1354 = vmul.f32 %v1349, %v1353
        %v1355 = vpack.c.bf16 %v1354, %v1354
        %v1358 = vunpack.c.l.b16 %v1317
        %v1359 = vunpack.c.l.b16 %v1318
        %v1360 = vpack.c.b16 %v1359, %v1358
        %v1363 = vsel %vm1343, %v1355, 0
        %1365 = vmatpush.bf16.msra.mxu0 0
        %1366 = vmatpush.bf16.msra.mxu0 0
        %1367 = vmatpush.bf16.msra.mxu0 0
        %1368 = vmatpush.bf16.msra.mxu0 0
        %1369 = vmatpush.bf16.msra.mxu0 0
        %1370 = vmatpush.bf16.msra.mxu0 0
        %1371 = vmatpush.bf16.msra.mxu0 0
        %1372 = vmatpush.bf16.msra.mxu0 %v1360
        %1373 = vmatmul.bf16.gmra.mxu0 %v1363
        %v1374 = vpop.f32.mrf.mxu0
        %v1375 = vadd.f32 0.0, %v1374
        %v1376 = vpop.f32.mrf.mxu0
        %1377 = vdwg.mxu0
        %v1378 = vpack.c.bf16 %v1375, %v1375
        %s1379 = scalar_lea.vmem %s6, 16
        %v1380 = vld [vmem:[%s1379] sm:$0xf]
        %v1381 = vld [vmem:[%s1379 + $0x4] sm:$0xf]
        %v1382 = vld [vmem:[%s1379 + $0x8] sm:$0xf]
        %v1383 = vld [vmem:[%s1379 + $0xc] sm:$0xf]
        %s1384 = scalar_lea.vmem %s6, 80
        %v1385 = vld [vmem:[%s1384] sm:$0xf]
        %v1386 = vld [vmem:[%s1384 + $0x4] sm:$0xf]
        %v1387 = vld [vmem:[%s1384 + $0x8] sm:$0xf]
        %v1388 = vld [vmem:[%s1384 + $0xc] sm:$0xf]
        %s1389 = scalar_lea.vmem %s6, 144
        %v1390 = vld [vmem:[%s1389] sm:$0xf]
        %v1391 = vld [vmem:[%s1389 + $0x4] sm:$0xf]
        %v1392 = vld [vmem:[%s1389 + $0x8] sm:$0xf]
        %v1393 = vld [vmem:[%s1389 + $0xc] sm:$0xf]
        %s1394 = scalar_lea.vmem %s7, 4
        %v1395 = vld [vmem:[%s1394] sm:$0xf]
        %v1400 = vunpack.c.l.b16 %v1380
        %v1401 = vunpack.c.l.b16 %v1381
        %v1402 = vunpack.c.l.b16 %v1382
        %v1403 = vunpack.c.l.b16 %v1383
        %v1404 = vpack.c.b16 %v1401, %v1400
        %v1405 = vpack.c.b16 %v1403, %v1402
        %1409 = vrot.lane.b32.xlu0 %v1228, 120
        %v1410 = vpop.permute.xlu0 %1409
        %1412 = vmatpush.bf16.msra.mxu0 0
        %1413 = vmatpush.bf16.msra.mxu0 0
        %1414 = vmatpush.bf16.msra.mxu0 0
        %1415 = vmatpush.bf16.msra.mxu0 0
        %1416 = vmatpush.bf16.msra.mxu0 0
        %1417 = vmatpush.bf16.msra.mxu0 0
        %1418 = vmatpush.bf16.msra.mxu0 %v1405
        %1419 = vmatpush.bf16.msra.mxu0 %v1404
        %1420 = vmatmul.bf16.gmra.mxu0 %v1242
        %v1421 = vpop.f32.mrf.mxu0
        %v1422 = vadd.f32 %v1410, %v1421
        %v1423 = vpop.f32.mrf.mxu0
        %1424 = vdwg.mxu0
        %v1425 = vpack.c.bf16 %v1422, %v1422
        %v1430 = vunpack.c.l.b16 %v1385
        %v1431 = vunpack.c.l.b16 %v1386
        %v1432 = vunpack.c.l.b16 %v1387
        %v1433 = vunpack.c.l.b16 %v1388
        %v1434 = vpack.c.b16 %v1431, %v1430
        %v1435 = vpack.c.b16 %v1433, %v1432
        %1439 = vrot.lane.b32.xlu0 %v1258, 120
        %v1440 = vpop.permute.xlu0 %1439
        %1442 = vmatpush.bf16.msra.mxu0 0
        %1443 = vmatpush.bf16.msra.mxu0 0
        %1444 = vmatpush.bf16.msra.mxu0 0
        %1445 = vmatpush.bf16.msra.mxu0 0
        %1446 = vmatpush.bf16.msra.mxu0 0
        %1447 = vmatpush.bf16.msra.mxu0 0
        %1448 = vmatpush.bf16.msra.mxu0 %v1435
        %1449 = vmatpush.bf16.msra.mxu0 %v1434
        %1450 = vmatmul.bf16.gmra.mxu0 %v1272
        %v1451 = vpop.f32.mrf.mxu0
        %v1452 = vadd.f32 %v1440, %v1451
        %v1453 = vpop.f32.mrf.mxu0
        %v1454 = vadd.f32 %v1440, %v1453
        %1455 = vdwg.mxu0
        %v1456 = vpack.c.bf16 %v1452, %v1452
        %v1457 = vpack.c.bf16 %v1454, %v1454
        %v1462 = vunpack.c.l.b16 %v1390
        %v1463 = vunpack.c.l.b16 %v1391
        %v1464 = vunpack.c.l.b16 %v1392
        %v1465 = vunpack.c.l.b16 %v1393
        %v1466 = vpack.c.b16 %v1463, %v1462
        %v1467 = vpack.c.b16 %v1465, %v1464
        %1471 = vrot.lane.b32.xlu0 %v1290, 120
        %v1472 = vpop.permute.xlu0 %1471
        %1474 = vmatpush.bf16.msra.mxu0 0
        %1475 = vmatpush.bf16.msra.mxu0 0
        %1476 = vmatpush.bf16.msra.mxu0 0
        %1477 = vmatpush.bf16.msra.mxu0 0
        %1478 = vmatpush.bf16.msra.mxu0 0
        %1479 = vmatpush.bf16.msra.mxu0 0
        %1480 = vmatpush.bf16.msra.mxu0 %v1467
        %1481 = vmatpush.bf16.msra.mxu0 %v1466
        %1482 = vmatmul.bf16.gmra.mxu0 %v1272
        %v1483 = vpop.f32.mrf.mxu0
        %v1484 = vadd.f32 %v1472, %v1483
        %v1485 = vpop.f32.mrf.mxu0
        %v1486 = vadd.f32 %v1472, %v1485
        %1487 = vdwg.mxu0
        %v1488 = vpack.c.bf16 %v1484, %v1484
        %v1489 = vpack.c.bf16 %v1486, %v1486
        %v1492 = vunpack.c.l.b16 %v1456
        %v1493 = vunpack.c.l.b16 %v1457
        %v1494 = vpack.c.b16 %v1493, %v1492
        %v1496 = vsel %vm577, %v1425, 0
        %v1499 = vsel %vm577, %v1494, 0
        %1501 = vmatpush.bf16.xpose.msra.mxu0 0
        %1502 = vmatpush.bf16.xpose.msra.mxu0 0
        %1503 = vmatpush.bf16.xpose.msra.mxu0 0
        %1504 = vmatpush.bf16.xpose.msra.mxu0 0
        %1505 = vmatpush.bf16.xpose.msra.mxu0 0
        %1506 = vmatpush.bf16.xpose.msra.mxu0 0
        %1507 = vmatpush.bf16.xpose.msra.mxu0 0
        %1508 = vmatpush.bf16.xpose.msra.mxu0 %v1499
        %1509 = vmatmul.bf16.gmra.mxu0 %v1496
        %v1510 = vpop.f32.mrf.mxu0
        %v1511 = vadd.f32 %v476, %v1510
        %v1512 = vpop.f32.mrf.mxu0
        %1513 = vdwg.mxu0
        %v1514 = vsel %vm1343, %v1511, -inf
        %1515 = vmax.xlane.f32.xlu0 %v1514
        %v1516 = vpop.xlane.xlu0 %1515
        %v1517 = vsub.f32 %v1511, %v1516
        %v1518 = vmul.f32 %v1517, 1.442695
        %v1519 = vpow.pop %v1518
        %v1520 = vsel %vm1343, %v1519, 0.0
        %1521 = vadd.xlane.f32.xlu0 %v1520
        %v1522 = vpop.xlane.xlu0 %1521
        %v1523 = vrcp.pop %v1522
        %v1524 = vmul.f32 %v1519, %v1523
        %v1525 = vpack.c.bf16 %v1524, %v1524
        %v1528 = vunpack.c.l.b16 %v1488
        %v1529 = vunpack.c.l.b16 %v1489
        %v1530 = vpack.c.b16 %v1529, %v1528
        %v1533 = vsel %vm1343, %v1525, 0
        %1535 = vmatpush.bf16.msra.mxu0 0
        %1536 = vmatpush.bf16.msra.mxu0 0
        %1537 = vmatpush.bf16.msra.mxu0 0
        %1538 = vmatpush.bf16.msra.mxu0 0
        %1539 = vmatpush.bf16.msra.mxu0 0
        %1540 = vmatpush.bf16.msra.mxu0 0
        %1541 = vmatpush.bf16.msra.mxu0 0
        %1542 = vmatpush.bf16.msra.mxu0 %v1530
        %1543 = vmatmul.bf16.gmra.mxu0 %v1533
        %v1544 = vpop.f32.mrf.mxu0
        %v1545 = vadd.f32 0.0, %v1544
        %v1546 = vpop.f32.mrf.mxu0
        %1547 = vdwg.mxu0
        %v1548 = vpack.c.bf16 %v1545, %v1545
        %v1550 = vsel %vm577, %v1548, 0
        %v1553 = vsel %vm612, %v1395, 0
        %1555 = vmatpush.bf16.msra.mxu0 0
        %1556 = vmatpush.bf16.msra.mxu0 0
        %1557 = vmatpush.bf16.msra.mxu0 0
        %1558 = vmatpush.bf16.msra.mxu0 0
        %1559 = vmatpush.bf16.msra.mxu0 0
        %1560 = vmatpush.bf16.msra.mxu0 0
        %1561 = vmatpush.bf16.msra.mxu0 0
        %1562 = vmatpush.bf16.msra.mxu0 %v1553
        %1563 = vmatmul.bf16.gmra.mxu0 %v1550
        %v1564 = vpop.f32.mrf.mxu0
        %v1565 = vadd.f32 0.0, %v1564
        %v1566 = vpop.f32.mrf.mxu0
        %1567 = vdwg.mxu0
        %v1569 = vsel %vm577, %v1378, 0
        %v1572 = vsel %vm612, %v1227, 0
        %1574 = vmatpush.bf16.msra.mxu0 0
        %1575 = vmatpush.bf16.msra.mxu0 0
        %1576 = vmatpush.bf16.msra.mxu0 0
        %1577 = vmatpush.bf16.msra.mxu0 0
        %1578 = vmatpush.bf16.msra.mxu0 0
        %1579 = vmatpush.bf16.msra.mxu0 0
        %1580 = vmatpush.bf16.msra.mxu0 0
        %1581 = vmatpush.bf16.msra.mxu0 %v1572
        %1582 = vmatmul.bf16.gmra.mxu0 %v1569
        %v1583 = vpop.f32.mrf.mxu0
        %v1584 = vadd.f32 %v1565, %v1583
        %v1585 = vpop.f32.mrf.mxu0
        %1586 = vdwg.mxu0
        %s1587 = scalar_lea.vmem %s6, 32
        %v1588 = vld [vmem:[%s1587] sm:$0xf]
        %v1589 = vld [vmem:[%s1587 + $0x4] sm:$0xf]
        %v1590 = vld [vmem:[%s1587 + $0x8] sm:$0xf]
        %v1591 = vld [vmem:[%s1587 + $0xc] sm:$0xf]
        %s1592 = scalar_lea.vmem %s6, 96
        %v1593 = vld [vmem:[%s1592] sm:$0xf]
        %v1594 = vld [vmem:[%s1592 + $0x4] sm:$0xf]
        %v1595 = vld [vmem:[%s1592 + $0x8] sm:$0xf]
        %v1596 = vld [vmem:[%s1592 + $0xc] sm:$0xf]
        %s1597 = scalar_lea.vmem %s6, 160
        %v1598 = vld [vmem:[%s1597] sm:$0xf]
        %v1599 = vld [vmem:[%s1597 + $0x4] sm:$0xf]
        %v1600 = vld [vmem:[%s1597 + $0x8] sm:$0xf]
        %v1601 = vld [vmem:[%s1597 + $0xc] sm:$0xf]
        %s1602 = scalar_lea.vmem %s7, 8
        %v1603 = vld [vmem:[%s1602] sm:$0xf]
        %v1608 = vunpack.c.l.b16 %v1588
        %v1609 = vunpack.c.l.b16 %v1589
        %v1610 = vunpack.c.l.b16 %v1590
        %v1611 = vunpack.c.l.b16 %v1591
        %v1612 = vpack.c.b16 %v1609, %v1608
        %v1613 = vpack.c.b16 %v1611, %v1610
        %1616 = vrot.lane.b32.xlu0 %v1228, 112
        %v1617 = vpop.permute.xlu0 %1616
        %1619 = vmatpush.bf16.msra.mxu0 0
        %1620 = vmatpush.bf16.msra.mxu0 0
        %1621 = vmatpush.bf16.msra.mxu0 0
        %1622 = vmatpush.bf16.msra.mxu0 0
        %1623 = vmatpush.bf16.msra.mxu0 0
        %1624 = vmatpush.bf16.msra.mxu0 0
        %1625 = vmatpush.bf16.msra.mxu0 %v1613
        %1626 = vmatpush.bf16.msra.mxu0 %v1612
        %1627 = vmatmul.bf16.gmra.mxu0 %v1242
        %v1628 = vpop.f32.mrf.mxu0
        %v1629 = vadd.f32 %v1617, %v1628
        %v1630 = vpop.f32.mrf.mxu0
        %1631 = vdwg.mxu0
        %v1632 = vpack.c.bf16 %v1629, %v1629
        %v1637 = vunpack.c.l.b16 %v1593
        %v1638 = vunpack.c.l.b16 %v1594
        %v1639 = vunpack.c.l.b16 %v1595
        %v1640 = vunpack.c.l.b16 %v1596
        %v1641 = vpack.c.b16 %v1638, %v1637
        %v1642 = vpack.c.b16 %v1640, %v1639
        %1645 = vrot.lane.b32.xlu0 %v1258, 112
        %v1646 = vpop.permute.xlu0 %1645
        %1648 = vmatpush.bf16.msra.mxu0 0
        %1649 = vmatpush.bf16.msra.mxu0 0
        %1650 = vmatpush.bf16.msra.mxu0 0
        %1651 = vmatpush.bf16.msra.mxu0 0
        %1652 = vmatpush.bf16.msra.mxu0 0
        %1653 = vmatpush.bf16.msra.mxu0 0
        %1654 = vmatpush.bf16.msra.mxu0 %v1642
        %1655 = vmatpush.bf16.msra.mxu0 %v1641
        %1656 = vmatmul.bf16.gmra.mxu0 %v1272
        %v1657 = vpop.f32.mrf.mxu0
        %v1658 = vadd.f32 %v1646, %v1657
        %v1659 = vpop.f32.mrf.mxu0
        %v1660 = vadd.f32 %v1646, %v1659
        %1661 = vdwg.mxu0
        %v1662 = vpack.c.bf16 %v1658, %v1658
        %v1663 = vpack.c.bf16 %v1660, %v1660
        %v1668 = vunpack.c.l.b16 %v1598
        %v1669 = vunpack.c.l.b16 %v1599
        %v1670 = vunpack.c.l.b16 %v1600
        %v1671 = vunpack.c.l.b16 %v1601
        %v1672 = vpack.c.b16 %v1669, %v1668
        %v1673 = vpack.c.b16 %v1671, %v1670
        %1676 = vrot.lane.b32.xlu0 %v1290, 112
        %v1677 = vpop.permute.xlu0 %1676
        %1679 = vmatpush.bf16.msra.mxu0 0
        %1680 = vmatpush.bf16.msra.mxu0 0
        %1681 = vmatpush.bf16.msra.mxu0 0
        %1682 = vmatpush.bf16.msra.mxu0 0
        %1683 = vmatpush.bf16.msra.mxu0 0
        %1684 = vmatpush.bf16.msra.mxu0 0
        %1685 = vmatpush.bf16.msra.mxu0 %v1673
        %1686 = vmatpush.bf16.msra.mxu0 %v1672
        %1687 = vmatmul.bf16.gmra.mxu0 %v1272
        %v1688 = vpop.f32.mrf.mxu0
        %v1689 = vadd.f32 %v1677, %v1688
        %v1690 = vpop.f32.mrf.mxu0
        %v1691 = vadd.f32 %v1677, %v1690
        %1692 = vdwg.mxu0
        %v1693 = vpack.c.bf16 %v1689, %v1689
        %v1694 = vpack.c.bf16 %v1691, %v1691
        %v1697 = vunpack.c.l.b16 %v1662
        %v1698 = vunpack.c.l.b16 %v1663
        %v1699 = vpack.c.b16 %v1698, %v1697
        %v1701 = vsel %vm577, %v1632, 0
        %v1704 = vsel %vm577, %v1699, 0
        %1706 = vmatpush.bf16.xpose.msra.mxu0 0
        %1707 = vmatpush.bf16.xpose.msra.mxu0 0
        %1708 = vmatpush.bf16.xpose.msra.mxu0 0
        %1709 = vmatpush.bf16.xpose.msra.mxu0 0
        %1710 = vmatpush.bf16.xpose.msra.mxu0 0
        %1711 = vmatpush.bf16.xpose.msra.mxu0 0
        %1712 = vmatpush.bf16.xpose.msra.mxu0 0
        %1713 = vmatpush.bf16.xpose.msra.mxu0 %v1704
        %1714 = vmatmul.bf16.gmra.mxu0 %v1701
        %v1715 = vpop.f32.mrf.mxu0
        %v1716 = vadd.f32 %v476, %v1715
        %v1717 = vpop.f32.mrf.mxu0
        %1718 = vdwg.mxu0
        %v1719 = vsel %vm1343, %v1716, -inf
        %1720 = vmax.xlane.f32.xlu0 %v1719
        %v1721 = vpop.xlane.xlu0 %1720
        %v1722 = vsub.f32 %v1716, %v1721
        %v1723 = vmul.f32 %v1722, 1.442695
        %v1724 = vpow.pop %v1723
        %v1725 = vsel %vm1343, %v1724, 0.0
        %1726 = vadd.xlane.f32.xlu0 %v1725
        %v1727 = vpop.xlane.xlu0 %1726
        %v1728 = vrcp.pop %v1727
        %v1729 = vmul.f32 %v1724, %v1728
        %v1730 = vpack.c.bf16 %v1729, %v1729
        %v1733 = vunpack.c.l.b16 %v1693
        %v1734 = vunpack.c.l.b16 %v1694
        %v1735 = vpack.c.b16 %v1734, %v1733
        %v1738 = vsel %vm1343, %v1730, 0
        %1740 = vmatpush.bf16.msra.mxu0 0
        %1741 = vmatpush.bf16.msra.mxu0 0
        %1742 = vmatpush.bf16.msra.mxu0 0
        %1743 = vmatpush.bf16.msra.mxu0 0
        %1744 = vmatpush.bf16.msra.mxu0 0
        %1745 = vmatpush.bf16.msra.mxu0 0
        %1746 = vmatpush.bf16.msra.mxu0 0
        %1747 = vmatpush.bf16.msra.mxu0 %v1735
        %1748 = vmatmul.bf16.gmra.mxu0 %v1738
        %v1749 = vpop.f32.mrf.mxu0
        %v1750 = vadd.f32 0.0, %v1749
        %v1751 = vpop.f32.mrf.mxu0
        %1752 = vdwg.mxu0
        %v1753 = vpack.c.bf16 %v1750, %v1750
        %v1755 = vsel %vm577, %v1753, 0
        %v1758 = vsel %vm612, %v1603, 0
        %1760 = vmatpush.bf16.msra.mxu0 0
        %1761 = vmatpush.bf16.msra.mxu0 0
        %1762 = vmatpush.bf16.msra.mxu0 0
        %1763 = vmatpush.bf16.msra.mxu0 0
        %1764 = vmatpush.bf16.msra.mxu0 0
        %1765 = vmatpush.bf16.msra.mxu0 0
        %1766 = vmatpush.bf16.msra.mxu0 0
        %1767 = vmatpush.bf16.msra.mxu0 %v1758
        %1768 = vmatmul.bf16.gmra.mxu0 %v1755
        %v1769 = vpop.f32.mrf.mxu0
        %v1770 = vadd.f32 0.0, %v1769
        %v1771 = vpop.f32.mrf.mxu0
        %1772 = vdwg.mxu0
        %v1773 = vadd.f32 %v1584, %v1770
        %s1774 = scalar_lea.vmem %s6, 48
        %v1775 = vld [vmem:[%s1774] sm:$0xf]
        %v1776 = vld [vmem:[%s1774 + $0x4] sm:$0xf]
        %v1777 = vld [vmem:[%s1774 + $0x8] sm:$0xf]
        %v1778 = vld [vmem:[%s1774 + $0xc] sm:$0xf]
        %s1779 = scalar_lea.vmem %s6, 112
        %v1780 = vld [vmem:[%s1779] sm:$0xf]
        %v1781 = vld [vmem:[%s1779 + $0x4] sm:$0xf]
        %v1782 = vld [vmem:[%s1779 + $0x8] sm:$0xf]
        %v1783 = vld [vmem:[%s1779 + $0xc] sm:$0xf]
        %s1784 = scalar_lea.vmem %s6, 176
        %v1785 = vld [vmem:[%s1784] sm:$0xf]
        %v1786 = vld [vmem:[%s1784 + $0x4] sm:$0xf]
        %v1787 = vld [vmem:[%s1784 + $0x8] sm:$0xf]
        %v1788 = vld [vmem:[%s1784 + $0xc] sm:$0xf]
        %s1789 = scalar_lea.vmem %s7, 12
        %v1790 = vld [vmem:[%s1789] sm:$0xf]
        %v1795 = vunpack.c.l.b16 %v1775
        %v1796 = vunpack.c.l.b16 %v1776
        %v1797 = vunpack.c.l.b16 %v1777
        %v1798 = vunpack.c.l.b16 %v1778
        %v1799 = vpack.c.b16 %v1796, %v1795
        %v1800 = vpack.c.b16 %v1798, %v1797
        %1803 = vrot.lane.b32.xlu0 %v1228, 104
        %v1804 = vpop.permute.xlu0 %1803
        %1806 = vmatpush.bf16.msra.mxu0 0
        %1807 = vmatpush.bf16.msra.mxu0 0
        %1808 = vmatpush.bf16.msra.mxu0 0
        %1809 = vmatpush.bf16.msra.mxu0 0
        %1810 = vmatpush.bf16.msra.mxu0 0
        %1811 = vmatpush.bf16.msra.mxu0 0
        %1812 = vmatpush.bf16.msra.mxu0 %v1800
        %1813 = vmatpush.bf16.msra.mxu0 %v1799
        %1814 = vmatmul.bf16.gmra.mxu0 %v1242
        %v1815 = vpop.f32.mrf.mxu0
        %v1816 = vadd.f32 %v1804, %v1815
        %v1817 = vpop.f32.mrf.mxu0
        %1818 = vdwg.mxu0
        %v1819 = vpack.c.bf16 %v1816, %v1816
        %v1824 = vunpack.c.l.b16 %v1780
        %v1825 = vunpack.c.l.b16 %v1781
        %v1826 = vunpack.c.l.b16 %v1782
        %v1827 = vunpack.c.l.b16 %v1783
        %v1828 = vpack.c.b16 %v1825, %v1824
        %v1829 = vpack.c.b16 %v1827, %v1826
        %1832 = vrot.lane.b32.xlu0 %v1258, 104
        %v1833 = vpop.permute.xlu0 %1832
        %1835 = vmatpush.bf16.msra.mxu0 0
        %1836 = vmatpush.bf16.msra.mxu0 0
        %1837 = vmatpush.bf16.msra.mxu0 0
        %1838 = vmatpush.bf16.msra.mxu0 0
        %1839 = vmatpush.bf16.msra.mxu0 0
        %1840 = vmatpush.bf16.msra.mxu0 0
        %1841 = vmatpush.bf16.msra.mxu0 %v1829
        %1842 = vmatpush.bf16.msra.mxu0 %v1828
        %1843 = vmatmul.bf16.gmra.mxu0 %v1272
        %v1844 = vpop.f32.mrf.mxu0
        %v1845 = vadd.f32 %v1833, %v1844
        %v1846 = vpop.f32.mrf.mxu0
        %v1847 = vadd.f32 %v1833, %v1846
        %1848 = vdwg.mxu0
        %v1849 = vpack.c.bf16 %v1845, %v1845
        %v1850 = vpack.c.bf16 %v1847, %v1847
        %v1855 = vunpack.c.l.b16 %v1785
        %v1856 = vunpack.c.l.b16 %v1786
        %v1857 = vunpack.c.l.b16 %v1787
        %v1858 = vunpack.c.l.b16 %v1788
        %v1859 = vpack.c.b16 %v1856, %v1855
        %v1860 = vpack.c.b16 %v1858, %v1857
        %1863 = vrot.lane.b32.xlu0 %v1290, 104
        %v1864 = vpop.permute.xlu0 %1863
        %1866 = vmatpush.bf16.msra.mxu0 0
        %1867 = vmatpush.bf16.msra.mxu0 0
        %1868 = vmatpush.bf16.msra.mxu0 0
        %1869 = vmatpush.bf16.msra.mxu0 0
        %1870 = vmatpush.bf16.msra.mxu0 0
        %1871 = vmatpush.bf16.msra.mxu0 0
        %1872 = vmatpush.bf16.msra.mxu0 %v1860
        %1873 = vmatpush.bf16.msra.mxu0 %v1859
        %1874 = vmatmul.bf16.gmra.mxu0 %v1272
        %v1875 = vpop.f32.mrf.mxu0
        %v1876 = vadd.f32 %v1864, %v1875
        %v1877 = vpop.f32.mrf.mxu0
        %v1878 = vadd.f32 %v1864, %v1877
        %1879 = vdwg.mxu0
        %v1880 = vpack.c.bf16 %v1876, %v1876
        %v1881 = vpack.c.bf16 %v1878, %v1878
        %v1884 = vunpack.c.l.b16 %v1849
        %v1885 = vunpack.c.l.b16 %v1850
        %v1886 = vpack.c.b16 %v1885, %v1884
        %v1888 = vsel %vm577, %v1819, 0
        %v1891 = vsel %vm577, %v1886, 0
        %1893 = vmatpush.bf16.xpose.msra.mxu0 0
        %1894 = vmatpush.bf16.xpose.msra.mxu0 0
        %1895 = vmatpush.bf16.xpose.msra.mxu0 0
        %1896 = vmatpush.bf16.xpose.msra.mxu0 0
        %1897 = vmatpush.bf16.xpose.msra.mxu0 0
        %1898 = vmatpush.bf16.xpose.msra.mxu0 0
        %1899 = vmatpush.bf16.xpose.msra.mxu0 0
        %1900 = vmatpush.bf16.xpose.msra.mxu0 %v1891
        %1901 = vmatmul.bf16.gmra.mxu0 %v1888
        %v1902 = vpop.f32.mrf.mxu0
        %v1903 = vadd.f32 %v476, %v1902
        %v1904 = vpop.f32.mrf.mxu0
        %1905 = vdwg.mxu0
        %v1906 = vsel %vm1343, %v1903, -inf
        %1907 = vmax.xlane.f32.xlu0 %v1906
        %v1908 = vpop.xlane.xlu0 %1907
        %v1909 = vsub.f32 %v1903, %v1908
        %v1910 = vmul.f32 %v1909, 1.442695
        %v1911 = vpow.pop %v1910
        %v1912 = vsel %vm1343, %v1911, 0.0
        %1913 = vadd.xlane.f32.xlu0 %v1912
        %v1914 = vpop.xlane.xlu0 %1913
        %v1915 = vrcp.pop %v1914
        %v1916 = vmul.f32 %v1911, %v1915
        %v1917 = vpack.c.bf16 %v1916, %v1916
        %v1920 = vunpack.c.l.b16 %v1880
        %v1921 = vunpack.c.l.b16 %v1881
        %v1922 = vpack.c.b16 %v1921, %v1920
        %v1925 = vsel %vm1343, %v1917, 0
        %1927 = vmatpush.bf16.msra.mxu0 0
        %1928 = vmatpush.bf16.msra.mxu0 0
        %1929 = vmatpush.bf16.msra.mxu0 0
        %1930 = vmatpush.bf16.msra.mxu0 0
        %1931 = vmatpush.bf16.msra.mxu0 0
        %1932 = vmatpush.bf16.msra.mxu0 0
        %1933 = vmatpush.bf16.msra.mxu0 0
        %1934 = vmatpush.bf16.msra.mxu0 %v1922
        %1935 = vmatmul.bf16.gmra.mxu0 %v1925
        %v1936 = vpop.f32.mrf.mxu0
        %v1937 = vadd.f32 0.0, %v1936
        %v1938 = vpop.f32.mrf.mxu0
        %1939 = vdwg.mxu0
        %v1940 = vpack.c.bf16 %v1937, %v1937
        %v1942 = vsel %vm577, %v1940, 0
        %v1945 = vsel %vm612, %v1790, 0
        %1947 = vmatpush.bf16.msra.mxu0 0
        %1948 = vmatpush.bf16.msra.mxu0 0
        %1949 = vmatpush.bf16.msra.mxu0 0
        %1950 = vmatpush.bf16.msra.mxu0 0
        %1951 = vmatpush.bf16.msra.mxu0 0
        %1952 = vmatpush.bf16.msra.mxu0 0
        %1953 = vmatpush.bf16.msra.mxu0 0
        %1954 = vmatpush.bf16.msra.mxu0 %v1945
        %1955 = vmatmul.bf16.gmra.mxu0 %v1942
        %v1956 = vpop.f32.mrf.mxu0
        %v1957 = vadd.f32 0.0, %v1956
        %v1958 = vpop.f32.mrf.mxu0
        %1959 = vdwg.mxu0
        %v1960 = vadd.f32 %v1773, %v1957
        %v1961 = vperm.slane %v466, 7
        %v1962 = vadd.f32 %v1960, %v1961
        %v1963 = vadd.f32 %v1211, %v1962
        %v1964 = vsel %vm505, %v1963, 0.0
        %1965 = vadd.xlane.f32.xlu0 %v1964
        %v1966 = vpop.xlane.xlu0 %1965
        %v1967 = vmul.f32 %v1966, %v1188
        %v1968 = vsub.f32 %v1963, %v1967
        %v1969 = vmul.f32 %v1968, %v1968
        %v1970 = vsel %vm505, %v1969, 0.0
        %1971 = vadd.xlane.f32.xlu0 %v1970
        %v1972 = vpop.xlane.xlu0 %1971
        %v1973 = vmul.f32 %v1972, %v1188
        %v1974 = vadd.f32 %v1973, 1e-05
        %v1975 = vrsqrt.pop %v1974
        %v1976 = vmul.f32 %v1975, %v1974
        %v1977 = vmul.f32 %v1976, %v1975
        %v1978 = vmul.f32 0.5, %v1977
        %v1979 = vsub.f32 1.5, %v1978
        %v1980 = vmul.f32 %v1975, %v1979
        %vm1981 = vweird.f32 %v1974
        %vm1982 = vweird.f32 %v1975
        %vm1983 = vmor %vm1981, %vm1982
        %v1984 = vsel %vm1983, %v1975, %v1980
        %v1985 = vmul.f32 %v1968, %v1984
        %v1986 = vperm.slane %v467, 3
        %v1987 = vmul.f32 %v1985, %v1986
        %v1988 = vperm.slane %v467, 4
        %v1989 = vadd.f32 %v1987, %v1988
        %v1990 = vpack.c.bf16 %v1989, %v1989
        %v1991 = vld [vmem:[%s8] sm:$0xf]
        %v1992 = vld [vmem:[%s8 + $0x4] sm:$0xf]
        %v1993 = vld [vmem:[%s8 + $0x8] sm:$0xf]
        %v1994 = vld [vmem:[%s8 + $0xc] sm:$0xf]
        %v1995 = vld [vmem:[%s10] sm:$0x1]
        %v1997 = vperm.slane %v1995, 0
        %v2003 = vunpack.c.l.b16 %v1991
        %v2004 = vunpack.c.l.b16 %v1992
        %v2005 = vunpack.c.l.b16 %v1993
        %v2006 = vunpack.c.l.b16 %v1994
        %v2007 = vpack.c.b16 %v2004, %v2003
        %v2008 = vpack.c.b16 %v2006, %v2005
        %v2012 = vsel %vm505, %v1990, 0
        %2014 = vmatpush.bf16.msra.mxu0 0
        %2015 = vmatpush.bf16.msra.mxu0 0
        %2016 = vmatpush.bf16.msra.mxu0 0
        %2017 = vmatpush.bf16.msra.mxu0 0
        %2018 = vmatpush.bf16.msra.mxu0 0
        %2019 = vmatpush.bf16.msra.mxu0 0
        %2020 = vmatpush.bf16.msra.mxu0 %v2008
        %2021 = vmatpush.bf16.msra.mxu0 %v2007
        %2022 = vmatmul.bf16.gmra.mxu0 %v2012
        %v2023 = vpop.f32.mrf.mxu0
        %v2024 = vadd.f32 %v1997, %v2023
        %v2025 = vpop.f32.mrf.mxu0
        %2026 = vdwg.mxu0
        %v2027 = vmax.f32 %v2024, 0.0
        %v2028 = vpack.c.bf16 %v2027, %v2027
        %v2029 = vld [vmem:[%s9] sm:$0xf]
        %v2030 = vld [vmem:[%s9 + $0x4] sm:$0xf]
        %v2031 = vld [vmem:[%s9 + $0x8] sm:$0xf]
        %v2032 = vld [vmem:[%s9 + $0xc] sm:$0xf]
        %v2033 = vld [vmem:[%s9 + $0x10] sm:$0xf]
        %v2034 = vld [vmem:[%s9 + $0x14] sm:$0xf]
        %v2035 = vld [vmem:[%s9 + $0x18] sm:$0xf]
        %v2036 = vld [vmem:[%s9 + $0x1c] sm:$0xf]
        %v2037 = vperm.slane %v467, 0
        %v2046 = vunpack.c.l.b16 %v2029
        %v2047 = vunpack.c.l.b16 %v2030
        %v2048 = vunpack.c.l.b16 %v2031
        %v2049 = vunpack.c.l.b16 %v2032
        %v2050 = vunpack.c.l.b16 %v2033
        %v2051 = vunpack.c.l.b16 %v2034
        %v2052 = vunpack.c.l.b16 %v2035
        %v2053 = vunpack.c.l.b16 %v2036
        %v2054 = vpack.c.b16 %v2047, %v2046
        %v2055 = vpack.c.b16 %v2049, %v2048
        %v2056 = vpack.c.b16 %v2051, %v2050
        %v2057 = vpack.c.b16 %v2053, %v2052
        %vm2062 = vcmask 523264
        %v2064 = vsel %vm2062, %v2028, 0
        %2066 = vmatpush.bf16.msra.mxu0 0
        %2067 = vmatpush.bf16.msra.mxu0 0
        %2068 = vmatpush.bf16.msra.mxu0 0
        %2069 = vmatpush.bf16.msra.mxu0 0
        %2070 = vmatpush.bf16.msra.mxu0 %v2057
        %2071 = vmatpush.bf16.msra.mxu0 %v2056
        %2072 = vmatpush.bf16.msra.mxu0 %v2055
        %2073 = vmatpush.bf16.msra.mxu0 %v2054
        %2074 = vmatmul.bf16.gmra.mxu0 %v2064
        %v2075 = vpop.f32.mrf.mxu0
        %v2076 = vadd.f32 %v2037, %v2075
        %v2077 = vpop.f32.mrf.mxu0
        %2078 = vdwg.mxu0
        %v2079 = vadd.f32 %v1989, %v2076
        %v2080 = vsel %vm505, %v2079, 0.0
        %2081 = vadd.xlane.f32.xlu0 %v2080
        %v2082 = vpop.xlane.xlu0 %2081
        %v2083 = vmul.f32 %v2082, %v1188
        %v2084 = vsub.f32 %v2079, %v2083
        %v2085 = vmul.f32 %v2084, %v2084
        %v2086 = vsel %vm505, %v2085, 0.0
        %2087 = vadd.xlane.f32.xlu0 %v2086
        %v2088 = vpop.xlane.xlu0 %2087
        %v2089 = vmul.f32 %v2088, %v1188
        %v2090 = vadd.f32 %v2089, 1e-05
        %v2091 = vrsqrt.pop %v2090
        %v2092 = vmul.f32 %v2091, %v2090
        %v2093 = vmul.f32 %v2092, %v2091
        %v2094 = vmul.f32 0.5, %v2093
        %v2095 = vsub.f32 1.5, %v2094
        %v2096 = vmul.f32 %v2091, %v2095
        %vm2097 = vweird.f32 %v2090
        %vm2098 = vweird.f32 %v2091
        %vm2099 = vmor %vm2097, %vm2098
        %v2100 = vsel %vm2099, %v2091, %v2096
        %v2101 = vmul.f32 %v2084, %v2100
        %v2102 = vperm.slane %v467, 5
        %v2103 = vmul.f32 %v2101, %v2102
        %v2104 = vperm.slane %v467, 6
        %v2105 = vadd.f32 %v2103, %v2104
        %2106 = vst.msk [vmem:[%s446] sm:$0xff] %vm505, %v2105
        %s2107 = sand.u32 %s306, 1
        %s2108 = scalar_lea.sflag [#allocation3], %s2107
        %s2109 = sand.u32 %s306, 1
        %s2110 = smul.addr %s2109, 8
        %s2111 = scalar_lea.vmem [#allocation2], %s2110
        // Predicated region
        $region69: #{tpu_custom_call.1} parent=67 // pred_check
          %p2112 = pneg %p316
        $region70: #{tpu_custom_call.1} parent=67 // pred_check_branch
          %2114 = sbr.rel (%p2112) target = $region72
        $region71: #{tpu_custom_call.1} parent=67 // pred_region
          %2116 = vsyncadd %s2108, 0
          %s2117 = smul.addr %s26, 8
          %s2118 = scalar_lea.hbm %s12, %s2117
          %s2120 = sshll.u32 %s2111, 4
          %s2121 = int_to_ptr.vmem [resolvable:$true] %s2120
          %s2122 = sshll.u32 %s2118, 4
          %s2123 = int_to_ptr.hbm [resolvable:$true] %s2122
          %2125 = dma.vmem_to_hbm [thread:$0]  %s2121, 128, %s2123, %s2108
        $region72: #{tpu_custom_call.1} parent=67 // pred_fallthru
          _
      $region68: #{tpu_custom_call.1} parent=5 // pred_fallthru
        _
      %p2126 = scmp.le.s32.totalorder 2, %s21
      // Predicated region
      $region73: #{tpu_custom_call.1} parent=5 // pred_check
        %p2127 = pneg %p2126
      $region74: #{tpu_custom_call.1} parent=5 // pred_check_branch
        %2129 = sbr.rel (%p2127) target = $region76
      $region75: #{tpu_custom_call.1} parent=5 // pred_region
        %s2130 = ssub.s32 %s21, 2
        // Predicated region
        $region77: #{tpu_custom_call.1} parent=75 // pred_check
          %p2131 = pneg %p322
        $region78: #{tpu_custom_call.1} parent=75 // pred_check_branch
          %2133 = sbr.rel (%p2131) target = $region80
        $region79: #{tpu_custom_call.1} parent=75 // pred_region
          %s2134 = sand.u32 %s307, 1
          %s2135 = scalar_lea.sflag [#allocation3], %s2134
          %s2136 = sand.u32 %s307, 1
          %s2137 = smul.addr %s2136, 8
          %s2138 = scalar_lea.vmem [#allocation2], %s2137
          %2140 = dma.done %s2135, 128
        $region80: #{tpu_custom_call.1} parent=75 // pred_fallthru
          _
      $region76: #{tpu_custom_call.1} parent=5 // pred_fallthru
        _
    $region6: #{tpu_custom_call.1} parent=1 // loop_footer
      %s25 = sadd.s32 1, %s21
    $region7: #{tpu_custom_call.1} parent=1 // loop_footer_branch
      %20 = sbr.rel target = $region3
    $region8: #{tpu_custom_call.1} parent=1 // loop_exit
      _
    %2141 = vsyncpa [#allocation3], 1
    %s2142 = scalar_lea.sflag [#allocation3], 1
    %2143 = vsyncpa %s2142, 1

</llo_original>
